<compile_context>
chip_gen: v7x
topology: tpu7x:2x2x1
jax: 0.10.0
libtpu: 0.0.40
codegen_flags: <defaults>
</compile_context>

<pallas_src>
import functools

import jax
import jax.numpy as jnp
from jax.experimental import pallas as pl
from jax.experimental.pallas import tpu as pltpu

LN_EPS = 1e-6


def transformer_kernel(x_ref, ln_ref, wqkv_ref, wo_ref, bo_ref,
                       w1_ref, bf1_ref, w2_ref, bf2_ref, o_ref, *, n_heads):
    Bb, N, D = x_ref.shape
    H = n_heads
    Dh = D // H
    R = Bb * N
    inv_d = 1.0 / D
    scale = float(Dh) ** -0.5

    # rows = batch*seq (sublanes), features on lanes
    x = x_ref[...].reshape(R, D)

    g1 = ln_ref[0:1, :]
    b1 = ln_ref[1:2, :]
    g2 = ln_ref[2:3, :]
    b2 = ln_ref[3:4, :]

    # ---------------- attn_norm (LayerNorm, eps inside sqrt) ----------------
    mu = jnp.sum(x, axis=-1, keepdims=True) * inv_d
    xc = x - mu
    var = jnp.sum(xc * xc, axis=-1, keepdims=True) * inv_d
    h = xc * jax.lax.rsqrt(var + LN_EPS) * g1 + b1            # rsqrt -> EUP

    # ---------------- fused q/k/v projection (one MXU matmul) ---------------
    qkv = jnp.dot(h, wqkv_ref[...], preferred_element_type=jnp.float32)   # (R, 3D)
    q = qkv[:, 0 * D:1 * D].reshape(Bb, N, D)
    k = qkv[:, 1 * D:2 * D].reshape(Bb, N, D)
    v = qkv[:, 2 * D:3 * D].reshape(Bb, N, D)

    # -------- multi-head attention, out_fc contribution accumulated per head
    wo = wo_ref[...]
    attn_out = jnp.zeros((R, D), jnp.float32)
    for hh in range(H):                                       # static unroll (H small)
        lo, hi = hh * Dh, (hh + 1) * Dh
        qh = q[:, :, lo:hi]                                   # (Bb, N, Dh)
        kh = k[:, :, lo:hi]
        vh = v[:, :, lo:hi]
        logits = jnp.einsum('bqd,bkd->bqk', qh, kh,
                            preferred_element_type=jnp.float32) * scale   # (Bb, N, N)
        logits = logits - jnp.max(logits, axis=-1, keepdims=True)
        p = jnp.exp(logits)
        denom = jnp.sum(p, axis=-1, keepdims=True)
        attn = p * pl.reciprocal(denom, approx=True)          # divide -> EUP slot
        oh = jnp.einsum('bqk,bkd->bqd', attn, vh,
                        preferred_element_type=jnp.float32)   # (Bb, N, Dh)
        attn_out = attn_out + jnp.dot(oh.reshape(R, Dh), wo[lo:hi, :],
                                      preferred_element_type=jnp.float32)
    x = x + attn_out + bo_ref[...]                            # out_fc bias + residual 1

    # ---------------- ff_norm + FeedForward + residual 2 --------------------
    mu2 = jnp.sum(x, axis=-1, keepdims=True) * inv_d
    xc2 = x - mu2
    var2 = jnp.sum(xc2 * xc2, axis=-1, keepdims=True) * inv_d
    h2 = xc2 * jax.lax.rsqrt(var2 + LN_EPS) * g2 + b2
    f = jnp.maximum(jnp.dot(h2, w1_ref[...],
                            preferred_element_type=jnp.float32) + bf1_ref[...], 0.0)
    f = jnp.dot(f, w2_ref[...], preferred_element_type=jnp.float32) + bf2_ref[...]

    o_ref[...] = (x + f).reshape(Bb, N, D)


def _pick_block_batch(n_batch, n_seq, dim, ff_hid, vmem_budget_bytes):
    """Largest divisor of n_batch whose f32 working set fits the VMEM budget,
    while keeping >= 2 grid steps when possible (v7x: 2 TensorCores)."""
    per_batch = 4 * n_seq * (10 * dim + 2 * ff_hid + 4 * n_seq)   # rough bytes / batch elem
    cap = max(1, int(vmem_budget_bytes // max(per_batch, 1)))
    if n_batch >= 2:
        cap = min(cap, n_batch // 2)
    bb = 1
    for d in range(1, n_batch + 1):
        if n_batch % d == 0 and d <= cap:
            bb = d
    return bb


def transformer_forward(params, x, *, n_heads, block_batch=None,
                        vmem_limit_bytes=64 * 1024 * 1024):
    n_batch, n_seq, dim = x.shape
    ff_hid = params['w1'].shape[1]
    assert dim % n_heads == 0

    if block_batch is None:
        # size the auto-pipelined (double-buffered) working set well inside the limit
        block_batch = _pick_block_batch(n_batch, n_seq, dim, ff_hid,
                                        vmem_limit_bytes // 4)
    # TODO(synk): pad the batch axis (rows are independent) for non-divisible sizes
    assert n_batch % block_batch == 0
    Bb = block_batch

    # ---- pack parameters: fewer per-step DMA descriptors + fused qkv matmul ----
    ln = jnp.stack([params['g1'], params['beta1'],
                    params['g2'], params['beta2']], axis=0)                     # (4, D)
    wqkv = jnp.concatenate([params['wq'], params['wk'], params['wv']], axis=1)  # (D, 3D)
    bo = params['bo'].reshape(1, dim)
    bf1 = params['bf1'].reshape(1, ff_hid)
    bf2 = params['bf2'].reshape(1, dim)

    fixed = lambda i: (0, 0)
    in_specs = [
        pl.BlockSpec((Bb, n_seq, dim), lambda i: (i, 0, 0)),   # x
        pl.BlockSpec((4, dim), fixed),                         # LN gammas / betas
        pl.BlockSpec((dim, 3 * dim), fixed),                   # [Wq | Wk | Wv]
        pl.BlockSpec((dim, dim), fixed),                       # Wo
        pl.BlockSpec((1, dim), fixed),                         # bo
        pl.BlockSpec((dim, ff_hid), fixed),                    # FF W1
        pl.BlockSpec((1, ff_hid), fixed),                      # FF b1
        pl.BlockSpec((ff_hid, dim), fixed),                    # FF W2
        pl.BlockSpec((1, dim), fixed),                         # FF b2
    ]
    out_specs = pl.BlockSpec((Bb, n_seq, dim), lambda i: (i, 0, 0))

    return pl.pallas_call(
        functools.partial(transformer_kernel, n_heads=n_heads),
        out_shape=jax.ShapeDtypeStruct((n_batch, n_seq, dim), jnp.float32),
        grid_spec=pltpu.PrefetchScalarGridSpec(
            num_scalar_prefetch=0,
            grid=(n_batch // Bb,),
            in_specs=in_specs,
            out_specs=out_specs,
        ),
        compiler_params=pltpu.CompilerParams(
            dimension_semantics=("parallel",),
            vmem_limit_bytes=vmem_limit_bytes),
    )(x, ln, wqkv, params['wo'], bo, params['w1'], bf1, params['w2'], bf2)


def reference_forward(params, x, n_heads):
    """Pure-JAX mirror of the PyTorch Transformer.forward
    (attn_mode='qk', ret_attn=False, dropout = identity)."""
    n_batch, n_seq, dim = x.shape
    dh = dim // n_heads

    def layer_norm(y, g, b):
        mu = y.mean(-1, keepdims=True)
        var = ((y - mu) ** 2).mean(-1, keepdims=True)
        return (y - mu) / jnp.sqrt(var + LN_EPS) * g + b

    residue = x
    h = layer_norm(x, params['g1'], params['beta1'])
    q = (h @ params['wq']).reshape(n_batch, n_seq, n_heads, dh).transpose(0, 2, 1, 3)
    k = (h @ params['wk']).reshape(n_batch, n_seq, n_heads, dh).transpose(0, 2, 1, 3)
    v = (h @ params['wv']).reshape(n_batch, n_seq, n_heads, dh).transpose(0, 2, 1, 3)
    attn = jax.nn.softmax(jnp.einsum('bhqd,bhkd->bhqk', q, k) / jnp.sqrt(float(dh)),
                          axis=-1)
    out = jnp.einsum('bhqk,bhkd->bhqd', attn, v).transpose(0, 2, 1, 3)
    out = out.reshape(n_batch, n_seq, dim) @ params['wo'] + params['bo']
    x = out + residue

    residue = x
    h2 = layer_norm(x, params['g2'], params['beta2'])
    f = jnp.maximum(h2 @ params['w1'] + params['bf1'], 0.0) @ params['w2'] + params['bf2']
    return f + residue


def init_params(key, dim, ff_hid):
    ks = jax.random.split(key, 12)
    w = lambda kk, shape, s=0.1: s * jax.random.normal(kk, shape, jnp.float32)
    return dict(
        g1=1.0 + w(ks[0], (dim,)), beta1=w(ks[1], (dim,)),
        g2=1.0 + w(ks[2], (dim,)), beta2=w(ks[3], (dim,)),
        wq=w(ks[4], (dim, dim)), wk=w(ks[5], (dim, dim)), wv=w(ks[6], (dim, dim)),
        wo=w(ks[7], (dim, dim)), bo=w(ks[8], (dim,)),
        w1=w(ks[9], (dim, ff_hid)), bf1=w(ks[10], (ff_hid,)),
        w2=w(ks[11], (ff_hid, dim)), bf2=jnp.zeros((dim,), jnp.float32),
    )


if __name__ == "__main__":
    # small, lane-friendly demo shapes: dim = 128 keeps every load/store lane-dense
    batch, seq, dim, n_heads, ff_hid = 4, 16, 128, 4, 256

    key = jax.random.PRNGKey(0)
    kparam, kx = jax.random.split(key)
    params = init_params(kparam, dim, ff_hid)
    x = jax.random.normal(kx, (batch, seq, dim), jnp.float32)

    y = transformer_forward(params, x, n_heads=n_heads)
    y = jax.block_until_ready(y)

    y_ref = reference_forward(params, x, n_heads)

    if not bool(jnp.all(jnp.isfinite(y))):
        raise AssertionError("output contains non-finite values")
    err = float(jnp.max(jnp.abs(y - y_ref)))
    # tolerance loosened (2e-2) because the kernel uses the EUP approximate
    # reciprocal for the softmax denominator; semantic bugs produce O(1) errors.
    if err > 2e-2:
        raise AssertionError(f"mismatch vs reference, max abs err = {err}")

    print("KERNEL_OK")
</pallas_src>

<mosaic_0001>
module attributes {stable_mosaic.version = 11 : i64} {
  func.func @transformer_kernel(%arg0: i32, %arg1: memref<2x16x128xf32, #tpu.memory_space<vmem>>, %arg2: memref<4x128xf32, #tpu.memory_space<vmem>>, %arg3: memref<128x384xf32, #tpu.memory_space<vmem>>, %arg4: memref<128x128xf32, #tpu.memory_space<vmem>>, %arg5: memref<1x128xf32, #tpu.memory_space<vmem>>, %arg6: memref<128x256xf32, #tpu.memory_space<vmem>>, %arg7: memref<1x256xf32, #tpu.memory_space<vmem>>, %arg8: memref<256x128xf32, #tpu.memory_space<vmem>>, %arg9: memref<1x128xf32, #tpu.memory_space<vmem>>, %arg10: memref<2x16x128xf32, #tpu.memory_space<vmem>>) attributes {dimension_semantics = [#tpu.dimension_semantics<parallel>], iteration_bounds = array<i64: 2>, scalar_prefetch = 0 : i64, scratch_operands = 0 : i64, tpu.core_type = #tpu.core_type<tc>, window_params = [{transform_indices = @transform_0, window_bounds = array<i64: 2, 16, 128>}, {pipeline_mode = #tpu.pipeline_mode<synchronous>, transform_indices = @transform_1, window_bounds = array<i64: 4, 128>}, {pipeline_mode = #tpu.pipeline_mode<synchronous>, transform_indices = @transform_2, window_bounds = array<i64: 128, 384>}, {pipeline_mode = #tpu.pipeline_mode<synchronous>, transform_indices = @transform_3, window_bounds = array<i64: 128, 128>}, {pipeline_mode = #tpu.pipeline_mode<synchronous>, transform_indices = @transform_4, window_bounds = array<i64: 1, 128>}, {pipeline_mode = #tpu.pipeline_mode<synchronous>, transform_indices = @transform_5, window_bounds = array<i64: 128, 256>}, {pipeline_mode = #tpu.pipeline_mode<synchronous>, transform_indices = @transform_6, window_bounds = array<i64: 1, 256>}, {pipeline_mode = #tpu.pipeline_mode<synchronous>, transform_indices = @transform_7, window_bounds = array<i64: 256, 128>}, {pipeline_mode = #tpu.pipeline_mode<synchronous>, transform_indices = @transform_8, window_bounds = array<i64: 1, 128>}, {transform_indices = @transform_9, window_bounds = array<i64: 2, 16, 128>}]} {
    %c0 = arith.constant 0 : index
    %c0_0 = arith.constant 0 : index
    %c0_1 = arith.constant 0 : index
    %0 = vector.load %arg1[%c0, %c0_0, %c0_1] : memref<2x16x128xf32, #tpu.memory_space<vmem>>, vector<2x16x128xf32>
    %1 = vector.shape_cast %0 : vector<2x16x128xf32> to vector<32x128xf32>
    %c0_2 = arith.constant 0 : index
    %c0_3 = arith.constant 0 : index
    %2 = vector.load %arg2[%c0_2, %c0_3] : memref<4x128xf32, #tpu.memory_space<vmem>>, vector<1x128xf32>
    %c1 = arith.constant 1 : index
    %c0_4 = arith.constant 0 : index
    %3 = vector.load %arg2[%c1, %c0_4] : memref<4x128xf32, #tpu.memory_space<vmem>>, vector<1x128xf32>
    %c2 = arith.constant 2 : index
    %c0_5 = arith.constant 0 : index
    %4 = vector.load %arg2[%c2, %c0_5] : memref<4x128xf32, #tpu.memory_space<vmem>>, vector<1x128xf32>
    %c3 = arith.constant 3 : index
    %c0_6 = arith.constant 0 : index
    %5 = vector.load %arg2[%c3, %c0_6] : memref<4x128xf32, #tpu.memory_space<vmem>>, vector<1x128xf32>
    %cst = arith.constant dense<0.000000e+00> : vector<32xf32>
    %6 = vector.multi_reduction <add>, %1, %cst [1] : vector<32x128xf32> to vector<32xf32>
    %7 = vector.shape_cast %6 : vector<32xf32> to vector<32x1xf32>
    %cst_7 = arith.constant 7.812500e-03 : f32
    %8 = vector.broadcast %cst_7 : f32 to vector<32x1xf32>
    %9 = arith.mulf %7, %8 : vector<32x1xf32>
    %10 = vector.broadcast %9 : vector<32x1xf32> to vector<32x128xf32>
    %11 = arith.subf %1, %10 : vector<32x128xf32>
    %12 = arith.mulf %11, %11 : vector<32x128xf32>
    %cst_8 = arith.constant dense<0.000000e+00> : vector<32xf32>
    %13 = vector.multi_reduction <add>, %12, %cst_8 [1] : vector<32x128xf32> to vector<32xf32>
    %14 = vector.shape_cast %13 : vector<32xf32> to vector<32x1xf32>
    %cst_9 = arith.constant 7.812500e-03 : f32
    %15 = vector.broadcast %cst_9 : f32 to vector<32x1xf32>
    %16 = arith.mulf %14, %15 : vector<32x1xf32>
    %cst_10 = arith.constant 9.99999997E-7 : f32
    %17 = vector.broadcast %cst_10 : f32 to vector<32x1xf32>
    %18 = arith.addf %16, %17 : vector<32x1xf32>
    %19 = math.rsqrt %18 : vector<32x1xf32>
    %20 = vector.broadcast %19 : vector<32x1xf32> to vector<32x128xf32>
    %21 = arith.mulf %11, %20 : vector<32x128xf32>
    %22 = vector.broadcast %2 : vector<1x128xf32> to vector<32x128xf32>
    %23 = arith.mulf %21, %22 : vector<32x128xf32>
    %24 = vector.broadcast %3 : vector<1x128xf32> to vector<32x128xf32>
    %25 = arith.addf %23, %24 : vector<32x128xf32>
    %c0_11 = arith.constant 0 : index
    %c0_12 = arith.constant 0 : index
    %26 = vector.load %arg3[%c0_11, %c0_12] : memref<128x384xf32, #tpu.memory_space<vmem>>, vector<128x384xf32>
    %cst_13 = arith.constant dense<0.000000e+00> : vector<32x384xf32>
    %27 = tpu.matmul %25, %26, %cst_13 {dimension_numbers = #tpu.dot_dimension_numbers<[1], [0], [0], [1], [0, 0, 1, 1], [], []>} : vector<32x128xf32>, vector<128x384xf32>, vector<32x384xf32> -> vector<32x384xf32>
    %28 = vector.extract_strided_slice %27 {offsets = [0, 0], sizes = [32, 128], strides = [1, 1]} : vector<32x384xf32> to vector<32x128xf32>
    %29 = vector.shape_cast %28 : vector<32x128xf32> to vector<2x16x128xf32>
    %30 = vector.extract_strided_slice %27 {offsets = [0, 128], sizes = [32, 128], strides = [1, 1]} : vector<32x384xf32> to vector<32x128xf32>
    %31 = vector.shape_cast %30 : vector<32x128xf32> to vector<2x16x128xf32>
    %32 = vector.extract_strided_slice %27 {offsets = [0, 256], sizes = [32, 128], strides = [1, 1]} : vector<32x384xf32> to vector<32x128xf32>
    %33 = vector.shape_cast %32 : vector<32x128xf32> to vector<2x16x128xf32>
    %c0_14 = arith.constant 0 : index
    %c0_15 = arith.constant 0 : index
    %34 = vector.load %arg4[%c0_14, %c0_15] : memref<128x128xf32, #tpu.memory_space<vmem>>, vector<128x128xf32>
    %cst_16 = arith.constant 0.000000e+00 : f32
    %35 = vector.broadcast %cst_16 : f32 to vector<32x128xf32>
    %36 = vector.extract_strided_slice %29 {offsets = [0, 0, 0], sizes = [2, 16, 32], strides = [1, 1, 1]} : vector<2x16x128xf32> to vector<2x16x32xf32>
    %37 = vector.extract_strided_slice %31 {offsets = [0, 0, 0], sizes = [2, 16, 32], strides = [1, 1, 1]} : vector<2x16x128xf32> to vector<2x16x32xf32>
    %38 = vector.extract_strided_slice %33 {offsets = [0, 0, 0], sizes = [2, 16, 32], strides = [1, 1, 1]} : vector<2x16x128xf32> to vector<2x16x32xf32>
    "tpu.trace_start"() <{level = 10 : i32, message = "bqd,bkd->bqk"}> : () -> ()
    %cst_17 = arith.constant dense<0.000000e+00> : vector<2x16x16xf32>
    %39 = tpu.matmul %36, %37, %cst_17 {dimension_numbers = #tpu.dot_dimension_numbers<[2], [2], [1], [1], [0, 0, 0, 1, 1, 1], [0], [0]>} : vector<2x16x32xf32>, vector<2x16x32xf32>, vector<2x16x16xf32> -> vector<2x16x16xf32>
    "tpu.trace_stop"() : () -> ()
    %cst_18 = arith.constant 0.176776692 : f32
    %40 = vector.broadcast %cst_18 : f32 to vector<2x16x16xf32>
    %41 = arith.mulf %39, %40 : vector<2x16x16xf32>
    %cst_19 = arith.constant dense<0xFF800000> : vector<2x16xf32>
    %42 = vector.multi_reduction <maximumf>, %41, %cst_19 [2] : vector<2x16x16xf32> to vector<2x16xf32>
    %43 = vector.shape_cast %42 : vector<2x16xf32> to vector<2x16x1xf32>
    %44 = vector.broadcast %43 : vector<2x16x1xf32> to vector<2x16x16xf32>
    %45 = arith.subf %41, %44 : vector<2x16x16xf32>
    %46 = math.exp %45 : vector<2x16x16xf32>
    %cst_20 = arith.constant dense<0.000000e+00> : vector<2x16xf32>
    %47 = vector.multi_reduction <add>, %46, %cst_20 [2] : vector<2x16x16xf32> to vector<2x16xf32>
    %48 = vector.shape_cast %47 : vector<2x16xf32> to vector<2x16x1xf32>
    %49 = tpu.reciprocal %48 {approx = true} : vector<2x16x1xf32> -> vector<2x16x1xf32>
    %50 = vector.broadcast %49 : vector<2x16x1xf32> to vector<2x16x16xf32>
    %51 = arith.mulf %46, %50 : vector<2x16x16xf32>
    "tpu.trace_start"() <{level = 10 : i32, message = "bqk,bkd->bqd"}> : () -> ()
    %cst_21 = arith.constant dense<0.000000e+00> : vector<2x16x32xf32>
    %52 = tpu.matmul %51, %38, %cst_21 {dimension_numbers = #tpu.dot_dimension_numbers<[2], [1], [1], [2], [0, 0, 0, 1, 1, 2], [0], [0]>} : vector<2x16x16xf32>, vector<2x16x32xf32>, vector<2x16x32xf32> -> vector<2x16x32xf32>
    "tpu.trace_stop"() : () -> ()
    %53 = vector.shape_cast %52 : vector<2x16x32xf32> to vector<32x32xf32>
    %54 = vector.extract_strided_slice %34 {offsets = [0, 0], sizes = [32, 128], strides = [1, 1]} : vector<128x128xf32> to vector<32x128xf32>
    %cst_22 = arith.constant dense<0.000000e+00> : vector<32x128xf32>
    %55 = tpu.matmul %53, %54, %cst_22 {dimension_numbers = #tpu.dot_dimension_numbers<[1], [0], [0], [1], [0, 0, 1, 1], [], []>} : vector<32x32xf32>, vector<32x128xf32>, vector<32x128xf32> -> vector<32x128xf32>
    %56 = arith.addf %35, %55 : vector<32x128xf32>
    %57 = vector.extract_strided_slice %29 {offsets = [0, 0, 32], sizes = [2, 16, 32], strides = [1, 1, 1]} : vector<2x16x128xf32> to vector<2x16x32xf32>
    %58 = vector.extract_strided_slice %31 {offsets = [0, 0, 32], sizes = [2, 16, 32], strides = [1, 1, 1]} : vector<2x16x128xf32> to vector<2x16x32xf32>
    %59 = vector.extract_strided_slice %33 {offsets = [0, 0, 32], sizes = [2, 16, 32], strides = [1, 1, 1]} : vector<2x16x128xf32> to vector<2x16x32xf32>
    "tpu.trace_start"() <{level = 10 : i32, message = "bqd,bkd->bqk"}> : () -> ()
    %cst_23 = arith.constant dense<0.000000e+00> : vector<2x16x16xf32>
    %60 = tpu.matmul %57, %58, %cst_23 {dimension_numbers = #tpu.dot_dimension_numbers<[2], [2], [1], [1], [0, 0, 0, 1, 1, 1], [0], [0]>} : vector<2x16x32xf32>, vector<2x16x32xf32>, vector<2x16x16xf32> -> vector<2x16x16xf32>
    "tpu.trace_stop"() : () -> ()
    %cst_24 = arith.constant 0.176776692 : f32
    %61 = vector.broadcast %cst_24 : f32 to vector<2x16x16xf32>
    %62 = arith.mulf %60, %61 : vector<2x16x16xf32>
    %cst_25 = arith.constant dense<0xFF800000> : vector<2x16xf32>
    %63 = vector.multi_reduction <maximumf>, %62, %cst_25 [2] : vector<2x16x16xf32> to vector<2x16xf32>
    %64 = vector.shape_cast %63 : vector<2x16xf32> to vector<2x16x1xf32>
    %65 = vector.broadcast %64 : vector<2x16x1xf32> to vector<2x16x16xf32>
    %66 = arith.subf %62, %65 : vector<2x16x16xf32>
    %67 = math.exp %66 : vector<2x16x16xf32>
    %cst_26 = arith.constant dense<0.000000e+00> : vector<2x16xf32>
    %68 = vector.multi_reduction <add>, %67, %cst_26 [2] : vector<2x16x16xf32> to vector<2x16xf32>
    %69 = vector.shape_cast %68 : vector<2x16xf32> to vector<2x16x1xf32>
    %70 = tpu.reciprocal %69 {approx = true} : vector<2x16x1xf32> -> vector<2x16x1xf32>
    %71 = vector.broadcast %70 : vector<2x16x1xf32> to vector<2x16x16xf32>
    %72 = arith.mulf %67, %71 : vector<2x16x16xf32>
    "tpu.trace_start"() <{level = 10 : i32, message = "bqk,bkd->bqd"}> : () -> ()
    %cst_27 = arith.constant dense<0.000000e+00> : vector<2x16x32xf32>
    %73 = tpu.matmul %72, %59, %cst_27 {dimension_numbers = #tpu.dot_dimension_numbers<[2], [1], [1], [2], [0, 0, 0, 1, 1, 2], [0], [0]>} : vector<2x16x16xf32>, vector<2x16x32xf32>, vector<2x16x32xf32> -> vector<2x16x32xf32>
    "tpu.trace_stop"() : () -> ()
    %74 = vector.shape_cast %73 : vector<2x16x32xf32> to vector<32x32xf32>
    %75 = vector.extract_strided_slice %34 {offsets = [32, 0], sizes = [32, 128], strides = [1, 1]} : vector<128x128xf32> to vector<32x128xf32>
    %cst_28 = arith.constant dense<0.000000e+00> : vector<32x128xf32>
    %76 = tpu.matmul %74, %75, %cst_28 {dimension_numbers = #tpu.dot_dimension_numbers<[1], [0], [0], [1], [0, 0, 1, 1], [], []>} : vector<32x32xf32>, vector<32x128xf32>, vector<32x128xf32> -> vector<32x128xf32>
    %77 = arith.addf %56, %76 : vector<32x128xf32>
    %78 = vector.extract_strided_slice %29 {offsets = [0, 0, 64], sizes = [2, 16, 32], strides = [1, 1, 1]} : vector<2x16x128xf32> to vector<2x16x32xf32>
    %79 = vector.extract_strided_slice %31 {offsets = [0, 0, 64], sizes = [2, 16, 32], strides = [1, 1, 1]} : vector<2x16x128xf32> to vector<2x16x32xf32>
    %80 = vector.extract_strided_slice %33 {offsets = [0, 0, 64], sizes = [2, 16, 32], strides = [1, 1, 1]} : vector<2x16x128xf32> to vector<2x16x32xf32>
    "tpu.trace_start"() <{level = 10 : i32, message = "bqd,bkd->bqk"}> : () -> ()
    %cst_29 = arith.constant dense<0.000000e+00> : vector<2x16x16xf32>
    %81 = tpu.matmul %78, %79, %cst_29 {dimension_numbers = #tpu.dot_dimension_numbers<[2], [2], [1], [1], [0, 0, 0, 1, 1, 1], [0], [0]>} : vector<2x16x32xf32>, vector<2x16x32xf32>, vector<2x16x16xf32> -> vector<2x16x16xf32>
    "tpu.trace_stop"() : () -> ()
    %cst_30 = arith.constant 0.176776692 : f32
    %82 = vector.broadcast %cst_30 : f32 to vector<2x16x16xf32>
    %83 = arith.mulf %81, %82 : vector<2x16x16xf32>
    %cst_31 = arith.constant dense<0xFF800000> : vector<2x16xf32>
    %84 = vector.multi_reduction <maximumf>, %83, %cst_31 [2] : vector<2x16x16xf32> to vector<2x16xf32>
    %85 = vector.shape_cast %84 : vector<2x16xf32> to vector<2x16x1xf32>
    %86 = vector.broadcast %85 : vector<2x16x1xf32> to vector<2x16x16xf32>
    %87 = arith.subf %83, %86 : vector<2x16x16xf32>
    %88 = math.exp %87 : vector<2x16x16xf32>
    %cst_32 = arith.constant dense<0.000000e+00> : vector<2x16xf32>
    %89 = vector.multi_reduction <add>, %88, %cst_32 [2] : vector<2x16x16xf32> to vector<2x16xf32>
    %90 = vector.shape_cast %89 : vector<2x16xf32> to vector<2x16x1xf32>
    %91 = tpu.reciprocal %90 {approx = true} : vector<2x16x1xf32> -> vector<2x16x1xf32>
    %92 = vector.broadcast %91 : vector<2x16x1xf32> to vector<2x16x16xf32>
    %93 = arith.mulf %88, %92 : vector<2x16x16xf32>
    "tpu.trace_start"() <{level = 10 : i32, message = "bqk,bkd->bqd"}> : () -> ()
    %cst_33 = arith.constant dense<0.000000e+00> : vector<2x16x32xf32>
    %94 = tpu.matmul %93, %80, %cst_33 {dimension_numbers = #tpu.dot_dimension_numbers<[2], [1], [1], [2], [0, 0, 0, 1, 1, 2], [0], [0]>} : vector<2x16x16xf32>, vector<2x16x32xf32>, vector<2x16x32xf32> -> vector<2x16x32xf32>
    "tpu.trace_stop"() : () -> ()
    %95 = vector.shape_cast %94 : vector<2x16x32xf32> to vector<32x32xf32>
    %96 = vector.extract_strided_slice %34 {offsets = [64, 0], sizes = [32, 128], strides = [1, 1]} : vector<128x128xf32> to vector<32x128xf32>
    %cst_34 = arith.constant dense<0.000000e+00> : vector<32x128xf32>
    %97 = tpu.matmul %95, %96, %cst_34 {dimension_numbers = #tpu.dot_dimension_numbers<[1], [0], [0], [1], [0, 0, 1, 1], [], []>} : vector<32x32xf32>, vector<32x128xf32>, vector<32x128xf32> -> vector<32x128xf32>
    %98 = arith.addf %77, %97 : vector<32x128xf32>
    %99 = vector.extract_strided_slice %29 {offsets = [0, 0, 96], sizes = [2, 16, 32], strides = [1, 1, 1]} : vector<2x16x128xf32> to vector<2x16x32xf32>
    %100 = vector.extract_strided_slice %31 {offsets = [0, 0, 96], sizes = [2, 16, 32], strides = [1, 1, 1]} : vector<2x16x128xf32> to vector<2x16x32xf32>
    %101 = vector.extract_strided_slice %33 {offsets = [0, 0, 96], sizes = [2, 16, 32], strides = [1, 1, 1]} : vector<2x16x128xf32> to vector<2x16x32xf32>
    "tpu.trace_start"() <{level = 10 : i32, message = "bqd,bkd->bqk"}> : () -> ()
    %cst_35 = arith.constant dense<0.000000e+00> : vector<2x16x16xf32>
    %102 = tpu.matmul %99, %100, %cst_35 {dimension_numbers = #tpu.dot_dimension_numbers<[2], [2], [1], [1], [0, 0, 0, 1, 1, 1], [0], [0]>} : vector<2x16x32xf32>, vector<2x16x32xf32>, vector<2x16x16xf32> -> vector<2x16x16xf32>
    "tpu.trace_stop"() : () -> ()
    %cst_36 = arith.constant 0.176776692 : f32
    %103 = vector.broadcast %cst_36 : f32 to vector<2x16x16xf32>
    %104 = arith.mulf %102, %103 : vector<2x16x16xf32>
    %cst_37 = arith.constant dense<0xFF800000> : vector<2x16xf32>
    %105 = vector.multi_reduction <maximumf>, %104, %cst_37 [2] : vector<2x16x16xf32> to vector<2x16xf32>
    %106 = vector.shape_cast %105 : vector<2x16xf32> to vector<2x16x1xf32>
    %107 = vector.broadcast %106 : vector<2x16x1xf32> to vector<2x16x16xf32>
    %108 = arith.subf %104, %107 : vector<2x16x16xf32>
    %109 = math.exp %108 : vector<2x16x16xf32>
    %cst_38 = arith.constant dense<0.000000e+00> : vector<2x16xf32>
    %110 = vector.multi_reduction <add>, %109, %cst_38 [2] : vector<2x16x16xf32> to vector<2x16xf32>
    %111 = vector.shape_cast %110 : vector<2x16xf32> to vector<2x16x1xf32>
    %112 = tpu.reciprocal %111 {approx = true} : vector<2x16x1xf32> -> vector<2x16x1xf32>
    %113 = vector.broadcast %112 : vector<2x16x1xf32> to vector<2x16x16xf32>
    %114 = arith.mulf %109, %113 : vector<2x16x16xf32>
    "tpu.trace_start"() <{level = 10 : i32, message = "bqk,bkd->bqd"}> : () -> ()
    %cst_39 = arith.constant dense<0.000000e+00> : vector<2x16x32xf32>
    %115 = tpu.matmul %114, %101, %cst_39 {dimension_numbers = #tpu.dot_dimension_numbers<[2], [1], [1], [2], [0, 0, 0, 1, 1, 2], [0], [0]>} : vector<2x16x16xf32>, vector<2x16x32xf32>, vector<2x16x32xf32> -> vector<2x16x32xf32>
    "tpu.trace_stop"() : () -> ()
    %116 = vector.shape_cast %115 : vector<2x16x32xf32> to vector<32x32xf32>
    %117 = vector.extract_strided_slice %34 {offsets = [96, 0], sizes = [32, 128], strides = [1, 1]} : vector<128x128xf32> to vector<32x128xf32>
    %cst_40 = arith.constant dense<0.000000e+00> : vector<32x128xf32>
    %118 = tpu.matmul %116, %117, %cst_40 {dimension_numbers = #tpu.dot_dimension_numbers<[1], [0], [0], [1], [0, 0, 1, 1], [], []>} : vector<32x32xf32>, vector<32x128xf32>, vector<32x128xf32> -> vector<32x128xf32>
    %119 = arith.addf %98, %118 : vector<32x128xf32>
    %120 = arith.addf %1, %119 : vector<32x128xf32>
    %c0_41 = arith.constant 0 : index
    %c0_42 = arith.constant 0 : index
    %121 = vector.load %arg5[%c0_41, %c0_42] : memref<1x128xf32, #tpu.memory_space<vmem>>, vector<1x128xf32>
    %122 = vector.broadcast %121 : vector<1x128xf32> to vector<32x128xf32>
    %123 = arith.addf %120, %122 : vector<32x128xf32>
    %cst_43 = arith.constant dense<0.000000e+00> : vector<32xf32>
    %124 = vector.multi_reduction <add>, %123, %cst_43 [1] : vector<32x128xf32> to vector<32xf32>
    %125 = vector.shape_cast %124 : vector<32xf32> to vector<32x1xf32>
    %cst_44 = arith.constant 7.812500e-03 : f32
    %126 = vector.broadcast %cst_44 : f32 to vector<32x1xf32>
    %127 = arith.mulf %125, %126 : vector<32x1xf32>
    %128 = vector.broadcast %127 : vector<32x1xf32> to vector<32x128xf32>
    %129 = arith.subf %123, %128 : vector<32x128xf32>
    %130 = arith.mulf %129, %129 : vector<32x128xf32>
    %cst_45 = arith.constant dense<0.000000e+00> : vector<32xf32>
    %131 = vector.multi_reduction <add>, %130, %cst_45 [1] : vector<32x128xf32> to vector<32xf32>
    %132 = vector.shape_cast %131 : vector<32xf32> to vector<32x1xf32>
    %cst_46 = arith.constant 7.812500e-03 : f32
    %133 = vector.broadcast %cst_46 : f32 to vector<32x1xf32>
    %134 = arith.mulf %132, %133 : vector<32x1xf32>
    %cst_47 = arith.constant 9.99999997E-7 : f32
    %135 = vector.broadcast %cst_47 : f32 to vector<32x1xf32>
    %136 = arith.addf %134, %135 : vector<32x1xf32>
    %137 = math.rsqrt %136 : vector<32x1xf32>
    %138 = vector.broadcast %137 : vector<32x1xf32> to vector<32x128xf32>
    %139 = arith.mulf %129, %138 : vector<32x128xf32>
    %140 = vector.broadcast %4 : vector<1x128xf32> to vector<32x128xf32>
    %141 = arith.mulf %139, %140 : vector<32x128xf32>
    %142 = vector.broadcast %5 : vector<1x128xf32> to vector<32x128xf32>
    %143 = arith.addf %141, %142 : vector<32x128xf32>
    %c0_48 = arith.constant 0 : index
    %c0_49 = arith.constant 0 : index
    %144 = vector.load %arg6[%c0_48, %c0_49] : memref<128x256xf32, #tpu.memory_space<vmem>>, vector<128x256xf32>
    %cst_50 = arith.constant dense<0.000000e+00> : vector<32x256xf32>
    %145 = tpu.matmul %143, %144, %cst_50 {dimension_numbers = #tpu.dot_dimension_numbers<[1], [0], [0], [1], [0, 0, 1, 1], [], []>} : vector<32x128xf32>, vector<128x256xf32>, vector<32x256xf32> -> vector<32x256xf32>
    %c0_51 = arith.constant 0 : index
    %c0_52 = arith.constant 0 : index
    %146 = vector.load %arg7[%c0_51, %c0_52] : memref<1x256xf32, #tpu.memory_space<vmem>>, vector<1x256xf32>
    %147 = vector.broadcast %146 : vector<1x256xf32> to vector<32x256xf32>
    %148 = arith.addf %145, %147 : vector<32x256xf32>
    %cst_53 = arith.constant 0.000000e+00 : f32
    %149 = vector.broadcast %cst_53 : f32 to vector<32x256xf32>
    %150 = arith.maximumf %148, %149 : vector<32x256xf32>
    %c0_54 = arith.constant 0 : index
    %c0_55 = arith.constant 0 : index
    %151 = vector.load %arg8[%c0_54, %c0_55] : memref<256x128xf32, #tpu.memory_space<vmem>>, vector<256x128xf32>
    %cst_56 = arith.constant dense<0.000000e+00> : vector<32x128xf32>
    %152 = tpu.matmul %150, %151, %cst_56 {dimension_numbers = #tpu.dot_dimension_numbers<[1], [0], [0], [1], [0, 0, 1, 1], [], []>} : vector<32x256xf32>, vector<256x128xf32>, vector<32x128xf32> -> vector<32x128xf32>
    %c0_57 = arith.constant 0 : index
    %c0_58 = arith.constant 0 : index
    %153 = vector.load %arg9[%c0_57, %c0_58] : memref<1x128xf32, #tpu.memory_space<vmem>>, vector<1x128xf32>
    %154 = vector.broadcast %153 : vector<1x128xf32> to vector<32x128xf32>
    %155 = arith.addf %152, %154 : vector<32x128xf32>
    %156 = arith.addf %123, %155 : vector<32x128xf32>
    %157 = vector.shape_cast %156 : vector<32x128xf32> to vector<2x16x128xf32>
    %c0_59 = arith.constant 0 : index
    %c0_60 = arith.constant 0 : index
    %c0_61 = arith.constant 0 : index
    %158 = vector.load %arg10[%c0_59, %c0_60, %c0_61] : memref<2x16x128xf32, #tpu.memory_space<vmem>>, vector<2x16x128xf32>
    tpu.vector_store %arg10[%c0_59, %c0_60, %c0_61], %157 {strides = array<i32>} : memref<2x16x128xf32, #tpu.memory_space<vmem>>, vector<2x16x128xf32>,
    return
  }
  func.func @transform_0(%arg0: i32) -> (i32, i32, i32) {
    %c0_i32 = arith.constant 0 : i32
    %c0_i32_0 = arith.constant 0 : i32
    %c0_i32_1 = arith.constant 0 : i32
    return %arg0, %c0_i32, %c0_i32_0 : i32, i32, i32
  }
  func.func @transform_1(%arg0: i32) -> (i32, i32) {
    %c0_i32 = arith.constant 0 : i32
    %c0_i32_0 = arith.constant 0 : i32
    %c0_i32_1 = arith.constant 0 : i32
    return %c0_i32, %c0_i32_0 : i32, i32
  }
  func.func @transform_2(%arg0: i32) -> (i32, i32) {
    %c0_i32 = arith.constant 0 : i32
    %c0_i32_0 = arith.constant 0 : i32
    %c0_i32_1 = arith.constant 0 : i32
    return %c0_i32, %c0_i32_0 : i32, i32
  }
  func.func @transform_3(%arg0: i32) -> (i32, i32) {
    %c0_i32 = arith.constant 0 : i32
    %c0_i32_0 = arith.constant 0 : i32
    %c0_i32_1 = arith.constant 0 : i32
    return %c0_i32, %c0_i32_0 : i32, i32
  }
  func.func @transform_4(%arg0: i32) -> (i32, i32) {
    %c0_i32 = arith.constant 0 : i32
    %c0_i32_0 = arith.constant 0 : i32
    %c0_i32_1 = arith.constant 0 : i32
    return %c0_i32, %c0_i32_0 : i32, i32
  }
  func.func @transform_5(%arg0: i32) -> (i32, i32) {
    %c0_i32 = arith.constant 0 : i32
    %c0_i32_0 = arith.constant 0 : i32
    %c0_i32_1 = arith.constant 0 : i32
    return %c0_i32, %c0_i32_0 : i32, i32
  }
  func.func @transform_6(%arg0: i32) -> (i32, i32) {
    %c0_i32 = arith.constant 0 : i32
    %c0_i32_0 = arith.constant 0 : i32
    %c0_i32_1 = arith.constant 0 : i32
    return %c0_i32, %c0_i32_0 : i32, i32
  }
  func.func @transform_7(%arg0: i32) -> (i32, i32) {
    %c0_i32 = arith.constant 0 : i32
    %c0_i32_0 = arith.constant 0 : i32
    %c0_i32_1 = arith.constant 0 : i32
    return %c0_i32, %c0_i32_0 : i32, i32
  }
  func.func @transform_8(%arg0: i32) -> (i32, i32) {
    %c0_i32 = arith.constant 0 : i32
    %c0_i32_0 = arith.constant 0 : i32
    %c0_i32_1 = arith.constant 0 : i32
    return %c0_i32, %c0_i32_0 : i32, i32
  }
  func.func @transform_9(%arg0: i32) -> (i32, i32, i32) {
    %c0_i32 = arith.constant 0 : i32
    %c0_i32_0 = arith.constant 0 : i32
    %c0_i32_1 = arith.constant 0 : i32
    return %arg0, %c0_i32, %c0_i32_0 : i32, i32, i32
  }
}

</mosaic_0001>

<llo_original>
// kernel: tpu_custom_call.1
$region0: #{tpu_custom_call.1}
  #allocation0 [shape = 'u32[]', space=smem, size = 0x4, offset = 0x4, fixed_abs, tag = 'smem constant byte address 0x4 - core index']
  #allocation1 [shape = 'u32[144,128]{1,0:T(1,128)}', space=vmem, size = 0x12000, scoped, tag = 'internal scratch']
  %s0 = inlined_call_operand.hbm [shape: f32[4,16,128], index: 0, kind: input, shape index: {}]
  %s1 = inlined_call_operand.hbm [shape: f32[4,128], index: 1, kind: input, shape index: {}]
  %s2 = inlined_call_operand.hbm [shape: f32[128,384], index: 2, kind: input, shape index: {}]
  %s3 = inlined_call_operand.hbm [shape: f32[128,128], index: 3, kind: input, shape index: {}]
  %s4 = inlined_call_operand.hbm [shape: f32[1,128], index: 4, kind: input, shape index: {}]
  %s5 = inlined_call_operand.hbm [shape: f32[128,256], index: 5, kind: input, shape index: {}]
  %s6 = inlined_call_operand.hbm [shape: f32[1,256], index: 6, kind: input, shape index: {}]
  %s7 = inlined_call_operand.hbm [shape: f32[256,128], index: 7, kind: input, shape index: {}]
  %s8 = inlined_call_operand.hbm [shape: f32[1,128], index: 8, kind: input, shape index: {}]
  %s9 = inlined_call_operand.hbm [shape: f32[4,16,128], index: 9, kind: output, shape index: {}]
  %s10 = sld [smem:[#allocation0]]
  $region105: #{tpu_custom_call.1} parent=0
    _
  %s12 = ssub.s32 1, %s10
  %s13 = scalar_select 0, %s12, %s10
  $region1: #{tpu_custom_call.1} parent=0
    #allocation2 [shape = 'u8[32768]{0}', space=vmem, size = 0x8000, scoped, tag = 'input window, operand 0']
    #allocation3 [shape = 's32[2]{0}', space=sflag, size = 0x8, scoped, tag = 'scoped memory for tpu_custom_call.1']
    #allocation4 [shape = 's32[2]{0}', space=sflag, size = 0x8, scoped, tag = 'scoped memory for tpu_custom_call.1']
    #allocation5 [shape = 'u8[2048]{0}', space=vmem, size = 0x800, scoped, tag = 'input window, operand 1, single buffered']
    #allocation6 [shape = 's32[1]{0}', space=sflag, size = 0x4, scoped, tag = 'scoped memory for tpu_custom_call.1']
    #allocation7 [shape = 'u8[196608]{0}', space=vmem, size = 0x30000, scoped, tag = 'input window, operand 2, single buffered']
    #allocation8 [shape = 'u8[65536]{0}', space=vmem, size = 0x10000, scoped, tag = 'input window, operand 3, single buffered']
    #allocation9 [shape = 's32[1]{0}', space=sflag, size = 0x4, scoped, tag = 'scoped memory for tpu_custom_call.1']
    #allocation10 [shape = 'u8[512]{0}', space=vmem, size = 0x400, scoped, tag = 'input window, operand 4, single buffered']
    #allocation11 [shape = 'u8[131072]{0}', space=vmem, size = 0x20000, scoped, tag = 'input window, operand 5, single buffered']
    #allocation12 [shape = 's32[1]{0}', space=sflag, size = 0x4, scoped, tag = 'scoped memory for tpu_custom_call.1']
    #allocation13 [shape = 'u8[1024]{0}', space=vmem, size = 0x400, scoped, tag = 'input window, operand 6, single buffered']
    #allocation14 [shape = 'u8[131072]{0}', space=vmem, size = 0x20000, scoped, tag = 'input window, operand 7, single buffered']
    #allocation15 [shape = 's32[1]{0}', space=sflag, size = 0x4, scoped, tag = 'scoped memory for tpu_custom_call.1']
    #allocation16 [shape = 'u8[512]{0}', space=vmem, size = 0x400, scoped, tag = 'input window, operand 8, single buffered']
    #allocation17 [shape = 'u8[32768]{0}', space=vmem, size = 0x8000, scoped, tag = 'output window, operand 0']
    %14 = vsyncpa [#allocation3], 0
    %s15 = scalar_lea.sflag [#allocation3], 1
    %16 = vsyncpa %s15, 0
    %17 = vsyncpa [#allocation6], 0
    %18 = vsyncpa [#allocation9], 0
    %19 = vsyncpa [#allocation12], 0
    %20 = vsyncpa [#allocation15], 0
    %21 = vsyncpa [#allocation4], 0
    %s22 = scalar_lea.sflag [#allocation4], 1
    %23 = vsyncpa %s22, 0
    loop: start=0, step=1, limit=4
    $region2: #{tpu_custom_call.1} parent=1 // loop_pre_header
      _
    $region3: #{tpu_custom_call.1} parent=1 // loop_header
      %s25 = sphi 0, %s29
      %p26 = scmp.ge.s32.totalorder %s25, 4
      %s35 = sphi 0, %s37
      %s38 = sphi 0, %s35
      %s39 = sphi 0, %s38
      %s55 = sphi 0, %s39
      %s59 = sphi 0, %s59
      %s61 = sphi 0, %s59
      %s62 = sphi 0, %s61
      %s76 = sphi 0, %s62
      %s80 = sphi 0, %s80
      %s82 = sphi 0, %s80
      %s83 = sphi 0, %s82
      %s97 = sphi 0, %s83
      %s101 = sphi 0, %s101
      %s103 = sphi 0, %s101
      %s104 = sphi 0, %s103
      %s118 = sphi 0, %s104
      %s122 = sphi 0, %s122
      %s124 = sphi 0, %s122
      %s125 = sphi 0, %s124
      %s139 = sphi 0, %s125
      %s143 = sphi 0, %s143
      %s145 = sphi 0, %s143
      %s146 = sphi 0, %s145
      %s160 = sphi 0, %s146
      %s164 = sphi 0, %s164
      %s166 = sphi 0, %s164
      %s167 = sphi 0, %s166
      %s181 = sphi 0, %s167
      %s185 = sphi 0, %s185
      %s187 = sphi 0, %s185
      %s188 = sphi 0, %s187
      %s202 = sphi 0, %s188
      %s206 = sphi 0, %s206
      %s208 = sphi 0, %s206
      %s209 = sphi 0, %s208
      %s223 = sphi 0, %s209
      %s229 = sphi 0, %s231
      %s232 = sphi 0, %s229
      %s233 = sphi 0, %s232
      %s249 = sphi 0, %s233
    $region4: #{tpu_custom_call.1} parent=1 // loop_header_branch
      %28 = sbr.rel (%p26) target = $region8
    $region5: #{tpu_custom_call.1} parent=1 // loop_body
      %s30 = ssub.s32 %s25, 1
      %s31 = ssub.s32 %s25, 2
      %s32 = sadd.s32 %s25, 1
      %s33 = ssub.s32 %s25, %s32
      %p34 = scmp.eq.s32.totalorder %s33, 0
      %s36 = sadd.s32 %s35, 1
      %s37 = scalar_select %p34, %s35, %s36
      %p40 = pneg %p34
      %p41 = scmp.eq.s32.totalorder %s25, 1
      %p42 = por %p40, %p41
      %p43 = scmp.ne.s32.totalorder %s35, %s38
      %p44 = scmp.eq.s32.totalorder %s25, 0
      %p45 = por %p43, %p44
      %p46 = scmp.ne.s32.totalorder %s35, %s38
      %p47 = scmp.eq.s32.totalorder %s30, 1
      %p48 = por %p46, %p47
      %p49 = scmp.ne.s32.totalorder %s38, %s39
      %p50 = scmp.eq.s32.totalorder %s30, 0
      %p51 = por %p49, %p50
      %p52 = scmp.ne.s32.totalorder %s38, %s39
      %p53 = scmp.eq.s32.totalorder %s31, 1
      %p54 = por %p52, %p53
      %p56 = scmp.ne.s32.totalorder %s39, %s55
      %p57 = scmp.eq.s32.totalorder %s31, 0
      %p58 = por %p56, %p57
      %s60 = sadd.s32 %s59, 1
      %p63 = scmp.eq.s32.totalorder %s25, 1
      %p64 = scmp.ne.s32.totalorder %s59, %s61
      %p65 = scmp.eq.s32.totalorder %s25, 0
      %p66 = por %p64, %p65
      %p67 = scmp.ne.s32.totalorder %s59, %s61
      %p68 = scmp.eq.s32.totalorder %s30, 1
      %p69 = por %p67, %p68
      %p70 = scmp.ne.s32.totalorder %s61, %s62
      %p71 = scmp.eq.s32.totalorder %s30, 0
      %p72 = por %p70, %p71
      %p73 = scmp.ne.s32.totalorder %s61, %s62
      %p74 = scmp.eq.s32.totalorder %s31, 1
      %p75 = por %p73, %p74
      %p77 = scmp.ne.s32.totalorder %s62, %s76
      %p78 = scmp.eq.s32.totalorder %s31, 0
      %p79 = por %p77, %p78
      %s81 = sadd.s32 %s80, 1
      %p84 = scmp.eq.s32.totalorder %s25, 1
      %p85 = scmp.ne.s32.totalorder %s80, %s82
      %p86 = scmp.eq.s32.totalorder %s25, 0
      %p87 = por %p85, %p86
      %p88 = scmp.ne.s32.totalorder %s80, %s82
      %p89 = scmp.eq.s32.totalorder %s30, 1
      %p90 = por %p88, %p89
      %p91 = scmp.ne.s32.totalorder %s82, %s83
      %p92 = scmp.eq.s32.totalorder %s30, 0
      %p93 = por %p91, %p92
      %p94 = scmp.ne.s32.totalorder %s82, %s83
      %p95 = scmp.eq.s32.totalorder %s31, 1
      %p96 = por %p94, %p95
      %p98 = scmp.ne.s32.totalorder %s83, %s97
      %p99 = scmp.eq.s32.totalorder %s31, 0
      %p100 = por %p98, %p99
      %s102 = sadd.s32 %s101, 1
      %p105 = scmp.eq.s32.totalorder %s25, 1
      %p106 = scmp.ne.s32.totalorder %s101, %s103
      %p107 = scmp.eq.s32.totalorder %s25, 0
      %p108 = por %p106, %p107
      %p109 = scmp.ne.s32.totalorder %s101, %s103
      %p110 = scmp.eq.s32.totalorder %s30, 1
      %p111 = por %p109, %p110
      %p112 = scmp.ne.s32.totalorder %s103, %s104
      %p113 = scmp.eq.s32.totalorder %s30, 0
      %p114 = por %p112, %p113
      %p115 = scmp.ne.s32.totalorder %s103, %s104
      %p116 = scmp.eq.s32.totalorder %s31, 1
      %p117 = por %p115, %p116
      %p119 = scmp.ne.s32.totalorder %s104, %s118
      %p120 = scmp.eq.s32.totalorder %s31, 0
      %p121 = por %p119, %p120
      %s123 = sadd.s32 %s122, 1
      %p126 = scmp.eq.s32.totalorder %s25, 1
      %p127 = scmp.ne.s32.totalorder %s122, %s124
      %p128 = scmp.eq.s32.totalorder %s25, 0
      %p129 = por %p127, %p128
      %p130 = scmp.ne.s32.totalorder %s122, %s124
      %p131 = scmp.eq.s32.totalorder %s30, 1
      %p132 = por %p130, %p131
      %p133 = scmp.ne.s32.totalorder %s124, %s125
      %p134 = scmp.eq.s32.totalorder %s30, 0
      %p135 = por %p133, %p134
      %p136 = scmp.ne.s32.totalorder %s124, %s125
      %p137 = scmp.eq.s32.totalorder %s31, 1
      %p138 = por %p136, %p137
      %p140 = scmp.ne.s32.totalorder %s125, %s139
      %p141 = scmp.eq.s32.totalorder %s31, 0
      %p142 = por %p140, %p141
      %s144 = sadd.s32 %s143, 1
      %p147 = scmp.eq.s32.totalorder %s25, 1
      %p148 = scmp.ne.s32.totalorder %s143, %s145
      %p149 = scmp.eq.s32.totalorder %s25, 0
      %p150 = por %p148, %p149
      %p151 = scmp.ne.s32.totalorder %s143, %s145
      %p152 = scmp.eq.s32.totalorder %s30, 1
      %p153 = por %p151, %p152
      %p154 = scmp.ne.s32.totalorder %s145, %s146
      %p155 = scmp.eq.s32.totalorder %s30, 0
      %p156 = por %p154, %p155
      %p157 = scmp.ne.s32.totalorder %s145, %s146
      %p158 = scmp.eq.s32.totalorder %s31, 1
      %p159 = por %p157, %p158
      %p161 = scmp.ne.s32.totalorder %s146, %s160
      %p162 = scmp.eq.s32.totalorder %s31, 0
      %p163 = por %p161, %p162
      %s165 = sadd.s32 %s164, 1
      %p168 = scmp.eq.s32.totalorder %s25, 1
      %p169 = scmp.ne.s32.totalorder %s164, %s166
      %p170 = scmp.eq.s32.totalorder %s25, 0
      %p171 = por %p169, %p170
      %p172 = scmp.ne.s32.totalorder %s164, %s166
      %p173 = scmp.eq.s32.totalorder %s30, 1
      %p174 = por %p172, %p173
      %p175 = scmp.ne.s32.totalorder %s166, %s167
      %p176 = scmp.eq.s32.totalorder %s30, 0
      %p177 = por %p175, %p176
      %p178 = scmp.ne.s32.totalorder %s166, %s167
      %p179 = scmp.eq.s32.totalorder %s31, 1
      %p180 = por %p178, %p179
      %p182 = scmp.ne.s32.totalorder %s167, %s181
      %p183 = scmp.eq.s32.totalorder %s31, 0
      %p184 = por %p182, %p183
      %s186 = sadd.s32 %s185, 1
      %p189 = scmp.eq.s32.totalorder %s25, 1
      %p190 = scmp.ne.s32.totalorder %s185, %s187
      %p191 = scmp.eq.s32.totalorder %s25, 0
      %p192 = por %p190, %p191
      %p193 = scmp.ne.s32.totalorder %s185, %s187
      %p194 = scmp.eq.s32.totalorder %s30, 1
      %p195 = por %p193, %p194
      %p196 = scmp.ne.s32.totalorder %s187, %s188
      %p197 = scmp.eq.s32.totalorder %s30, 0
      %p198 = por %p196, %p197
      %p199 = scmp.ne.s32.totalorder %s187, %s188
      %p200 = scmp.eq.s32.totalorder %s31, 1
      %p201 = por %p199, %p200
      %p203 = scmp.ne.s32.totalorder %s188, %s202
      %p204 = scmp.eq.s32.totalorder %s31, 0
      %p205 = por %p203, %p204
      %s207 = sadd.s32 %s206, 1
      %p210 = scmp.eq.s32.totalorder %s25, 1
      %p211 = scmp.ne.s32.totalorder %s206, %s208
      %p212 = scmp.eq.s32.totalorder %s25, 0
      %p213 = por %p211, %p212
      %p214 = scmp.ne.s32.totalorder %s206, %s208
      %p215 = scmp.eq.s32.totalorder %s30, 1
      %p216 = por %p214, %p215
      %p217 = scmp.ne.s32.totalorder %s208, %s209
      %p218 = scmp.eq.s32.totalorder %s30, 0
      %p219 = por %p217, %p218
      %p220 = scmp.ne.s32.totalorder %s208, %s209
      %p221 = scmp.eq.s32.totalorder %s31, 1
      %p222 = por %p220, %p221
      %p224 = scmp.ne.s32.totalorder %s209, %s223
      %p225 = scmp.eq.s32.totalorder %s31, 0
      %p226 = por %p224, %p225
      %s227 = ssub.s32 %s25, %s32
      %p228 = scmp.eq.s32.totalorder %s227, 0
      %s230 = sadd.s32 %s229, 1
      %s231 = scalar_select %p228, %s229, %s230
      %p234 = pneg %p228
      %p235 = scmp.eq.s32.totalorder %s25, 1
      %p236 = por %p234, %p235
      %p237 = scmp.ne.s32.totalorder %s229, %s232
      %p238 = scmp.eq.s32.totalorder %s25, 0
      %p239 = por %p237, %p238
      %p240 = scmp.ne.s32.totalorder %s229, %s232
      %p241 = scmp.eq.s32.totalorder %s30, 1
      %p242 = por %p240, %p241
      %p243 = scmp.ne.s32.totalorder %s232, %s233
      %p244 = scmp.eq.s32.totalorder %s30, 0
      %p245 = por %p243, %p244
      %p246 = scmp.ne.s32.totalorder %s232, %s233
      %p247 = scmp.eq.s32.totalorder %s31, 1
      %p248 = por %p246, %p247
      %p250 = scmp.ne.s32.totalorder %s233, %s249
      %p251 = scmp.eq.s32.totalorder %s31, 0
      %p252 = por %p250, %p251
      %p253 = scmp.le.s32.totalorder 1, %s25
      %p254 = scmp.lt.s32.totalorder %s25, 3
      %p255 = pnand %p253, %p254
      %p256 = pneg %p255
      // Predicated region
      $region9: #{tpu_custom_call.1} parent=5 // pred_check
        _
      $region10: #{tpu_custom_call.1} parent=5 // pred_check_branch
        %258 = sbr.rel (%p255) target = $region12
      $region11: #{tpu_custom_call.1} parent=5 // pred_region
        %s259 = ssub.s32 %s25, 1
        // Predicated region
        $region13: #{tpu_custom_call.1} parent=11 // pred_check
          %p260 = pneg %p72
        $region14: #{tpu_custom_call.1} parent=11 // pred_check_branch
          %262 = sbr.rel (%p260) target = $region16
        $region15: #{tpu_custom_call.1} parent=11 // pred_region
          %s264 = ssub.s32 64, 64
          %265 = vsyncadd [#allocation6], %s264
          %s267 = sshll.u32 [#allocation5], 4
          %s268 = int_to_ptr.vmem [resolvable:$true] %s267
          %270 = dma.hbm_to_vmem [thread:$0]  %s1, 64, %s268, [#allocation6]
        $region16: #{tpu_custom_call.1} parent=11 // pred_fallthru
          _
        // Predicated region
        $region17: #{tpu_custom_call.1} parent=11 // pred_check
          %p271 = pneg %p93
        $region18: #{tpu_custom_call.1} parent=11 // pred_check_branch
          %273 = sbr.rel (%p271) target = $region20
        $region19: #{tpu_custom_call.1} parent=11 // pred_region
          %s275 = ssub.s32 6144, 6144
          %276 = vsyncadd [#allocation6], %s275
          %s277 = sshll.u32 [#allocation7], 4
          %s278 = int_to_ptr.vmem [resolvable:$true] %s277
          %283 = dma.hbm_to_vmem [thread:$0]  %s2, 6144, %s278, [#allocation6], 384, 384, 24
        $region20: #{tpu_custom_call.1} parent=11 // pred_fallthru
          _
        // Predicated region
        $region21: #{tpu_custom_call.1} parent=11 // pred_check
          %p284 = pneg %p114
        $region22: #{tpu_custom_call.1} parent=11 // pred_check_branch
          %286 = sbr.rel (%p284) target = $region24
        $region23: #{tpu_custom_call.1} parent=11 // pred_region
          %s288 = ssub.s32 2048, 2048
          %289 = vsyncadd [#allocation9], %s288
          %s290 = sshll.u32 [#allocation8], 4
          %s291 = int_to_ptr.vmem [resolvable:$true] %s290
          %296 = dma.hbm_to_vmem [thread:$0]  %s3, 2048, %s291, [#allocation9], 128, 128, 8
        $region24: #{tpu_custom_call.1} parent=11 // pred_fallthru
          _
        // Predicated region
        $region25: #{tpu_custom_call.1} parent=11 // pred_check
          %p297 = pneg %p135
        $region26: #{tpu_custom_call.1} parent=11 // pred_check_branch
          %299 = sbr.rel (%p297) target = $region28
        $region27: #{tpu_custom_call.1} parent=11 // pred_region
          %s301 = ssub.s32 16, 16
          %302 = vsyncadd [#allocation9], %s301
          %s304 = sshll.u32 [#allocation10], 4
          %s305 = int_to_ptr.vmem [resolvable:$true] %s304
          %307 = dma.hbm_to_vmem [thread:$0]  %s4, 16, %s305, [#allocation9]
        $region28: #{tpu_custom_call.1} parent=11 // pred_fallthru
          _
        // Predicated region
        $region29: #{tpu_custom_call.1} parent=11 // pred_check
          %p308 = pneg %p156
        $region30: #{tpu_custom_call.1} parent=11 // pred_check_branch
          %310 = sbr.rel (%p308) target = $region32
        $region31: #{tpu_custom_call.1} parent=11 // pred_region
          %s312 = ssub.s32 4096, 4096
          %313 = vsyncadd [#allocation12], %s312
          %s314 = sshll.u32 [#allocation11], 4
          %s315 = int_to_ptr.vmem [resolvable:$true] %s314
          %320 = dma.hbm_to_vmem [thread:$0]  %s5, 4096, %s315, [#allocation12], 256, 256, 16
        $region32: #{tpu_custom_call.1} parent=11 // pred_fallthru
          _
        // Predicated region
        $region33: #{tpu_custom_call.1} parent=11 // pred_check
          %p321 = pneg %p177
        $region34: #{tpu_custom_call.1} parent=11 // pred_check_branch
          %323 = sbr.rel (%p321) target = $region36
        $region35: #{tpu_custom_call.1} parent=11 // pred_region
          %s325 = ssub.s32 32, 32
          %326 = vsyncadd [#allocation12], %s325
          %s328 = sshll.u32 [#allocation13], 4
          %s329 = int_to_ptr.vmem [resolvable:$true] %s328
          %331 = dma.hbm_to_vmem [thread:$0]  %s6, 32, %s329, [#allocation12]
        $region36: #{tpu_custom_call.1} parent=11 // pred_fallthru
          _
        // Predicated region
        $region37: #{tpu_custom_call.1} parent=11 // pred_check
          %p332 = pneg %p198
        $region38: #{tpu_custom_call.1} parent=11 // pred_check_branch
          %334 = sbr.rel (%p332) target = $region40
        $region39: #{tpu_custom_call.1} parent=11 // pred_region
          %s336 = ssub.s32 4096, 4096
          %337 = vsyncadd [#allocation15], %s336
          %s338 = sshll.u32 [#allocation14], 4
          %s339 = int_to_ptr.vmem [resolvable:$true] %s338
          %344 = dma.hbm_to_vmem [thread:$0]  %s7, 4096, %s339, [#allocation15], 128, 128, 8
        $region40: #{tpu_custom_call.1} parent=11 // pred_fallthru
          _
        // Predicated region
        $region41: #{tpu_custom_call.1} parent=11 // pred_check
          %p345 = pneg %p219
        $region42: #{tpu_custom_call.1} parent=11 // pred_check_branch
          %347 = sbr.rel (%p345) target = $region44
        $region43: #{tpu_custom_call.1} parent=11 // pred_region
          %s349 = ssub.s32 16, 16
          %350 = vsyncadd [#allocation15], %s349
          %s352 = sshll.u32 [#allocation16], 4
          %s353 = int_to_ptr.vmem [resolvable:$true] %s352
          %355 = dma.hbm_to_vmem [thread:$0]  %s8, 16, %s353, [#allocation15]
        $region44: #{tpu_custom_call.1} parent=11 // pred_fallthru
          _
      $region12: #{tpu_custom_call.1} parent=5 // pred_fallthru
        _
      %p356 = scmp.lt.s32.totalorder %s25, 2
      // Predicated region
      $region45: #{tpu_custom_call.1} parent=5 // pred_check
        %p357 = pneg %p356
      $region46: #{tpu_custom_call.1} parent=5 // pred_check_branch
        %359 = sbr.rel (%p357) target = $region48
      $region47: #{tpu_custom_call.1} parent=5 // pred_region
        // Predicated region
        $region49: #{tpu_custom_call.1} parent=47 // pred_check
          %p360 = pneg %p45
        $region50: #{tpu_custom_call.1} parent=47 // pred_check_branch
          %362 = sbr.rel (%p360) target = $region52
        $region51: #{tpu_custom_call.1} parent=47 // pred_region
          %s363 = sand.u32 %s35, 1
          %s364 = scalar_lea.sflag [#allocation3], %s363
          %s365 = sand.u32 %s35, 1
          %s366 = smul.addr %s365, 32
          %s367 = scalar_lea.vmem [#allocation2], %s366
          %s368 = smul.u32 2, %s25
          %s370 = ssub.s32 512, 512
          %371 = vsyncadd %s364, %s370
          %s372 = smul.addr %s368, 2
          %s373 = smul.addr %s372, 128
          %s374 = scalar_lea.hbm %s0, %s373
          %s375 = sshll.u32 %s367, 4
          %s376 = int_to_ptr.vmem [resolvable:$true] %s375
          %381 = dma.hbm_to_vmem [thread:$0]  %s374, 512, %s376, %s364, 128, 128, 8
        $region52: #{tpu_custom_call.1} parent=47 // pred_fallthru
          _
      $region48: #{tpu_custom_call.1} parent=5 // pred_fallthru
        _
      %p382 = scmp.le.s32.totalorder 1, %s25
      %p383 = scmp.lt.s32.totalorder %s25, 3
      %p384 = pnand %p382, %p383
      %p385 = pneg %p384
      // Predicated region
      $region53: #{tpu_custom_call.1} parent=5 // pred_check
        _
      $region54: #{tpu_custom_call.1} parent=5 // pred_check_branch
        %387 = sbr.rel (%p384) target = $region56
      $region55: #{tpu_custom_call.1} parent=5 // pred_region
        %s388 = ssub.s32 %s25, 1
        %s389 = sand.u32 %s38, 1
        %s390 = scalar_lea.sflag [#allocation3], %s389
        %s391 = sand.u32 %s38, 1
        %s392 = smul.addr %s391, 32
        %s393 = scalar_lea.vmem [#allocation2], %s392
        // Predicated region
        $region57: #{tpu_custom_call.1} parent=55 // pred_check
          %p394 = pneg %p51
        $region58: #{tpu_custom_call.1} parent=55 // pred_check_branch
          %396 = sbr.rel (%p394) target = $region60
        $region59: #{tpu_custom_call.1} parent=55 // pred_region
          %397 = dma.done %s390, 512
        $region60: #{tpu_custom_call.1} parent=55 // pred_fallthru
          _
        // Predicated region
        $region61: #{tpu_custom_call.1} parent=55 // pred_check
          %p398 = pneg %p72
        $region62: #{tpu_custom_call.1} parent=55 // pred_check_branch
          %400 = sbr.rel (%p398) target = $region64
        $region63: #{tpu_custom_call.1} parent=55 // pred_region
          %401 = dma.done [#allocation6], 64
        $region64: #{tpu_custom_call.1} parent=55 // pred_fallthru
          _
        // Predicated region
        $region65: #{tpu_custom_call.1} parent=55 // pred_check
          %p402 = pneg %p93
        $region66: #{tpu_custom_call.1} parent=55 // pred_check_branch
          %404 = sbr.rel (%p402) target = $region68
        $region67: #{tpu_custom_call.1} parent=55 // pred_region
          %405 = dma.done [#allocation6], 6144
        $region68: #{tpu_custom_call.1} parent=55 // pred_fallthru
          _
        // Predicated region
        $region69: #{tpu_custom_call.1} parent=55 // pred_check
          %p406 = pneg %p114
        $region70: #{tpu_custom_call.1} parent=55 // pred_check_branch
          %408 = sbr.rel (%p406) target = $region72
        $region71: #{tpu_custom_call.1} parent=55 // pred_region
          %409 = dma.done [#allocation9], 2048
        $region72: #{tpu_custom_call.1} parent=55 // pred_fallthru
          _
        // Predicated region
        $region73: #{tpu_custom_call.1} parent=55 // pred_check
          %p410 = pneg %p135
        $region74: #{tpu_custom_call.1} parent=55 // pred_check_branch
          %412 = sbr.rel (%p410) target = $region76
        $region75: #{tpu_custom_call.1} parent=55 // pred_region
          %413 = dma.done [#allocation9], 16
        $region76: #{tpu_custom_call.1} parent=55 // pred_fallthru
          _
        // Predicated region
        $region77: #{tpu_custom_call.1} parent=55 // pred_check
          %p414 = pneg %p156
        $region78: #{tpu_custom_call.1} parent=55 // pred_check_branch
          %416 = sbr.rel (%p414) target = $region80
        $region79: #{tpu_custom_call.1} parent=55 // pred_region
          %417 = dma.done [#allocation12], 4096
        $region80: #{tpu_custom_call.1} parent=55 // pred_fallthru
          _
        // Predicated region
        $region81: #{tpu_custom_call.1} parent=55 // pred_check
          %p418 = pneg %p177
        $region82: #{tpu_custom_call.1} parent=55 // pred_check_branch
          %420 = sbr.rel (%p418) target = $region84
        $region83: #{tpu_custom_call.1} parent=55 // pred_region
          %421 = dma.done [#allocation12], 32
        $region84: #{tpu_custom_call.1} parent=55 // pred_fallthru
          _
        // Predicated region
        $region85: #{tpu_custom_call.1} parent=55 // pred_check
          %p422 = pneg %p198
        $region86: #{tpu_custom_call.1} parent=55 // pred_check_branch
          %424 = sbr.rel (%p422) target = $region88
        $region87: #{tpu_custom_call.1} parent=55 // pred_region
          %425 = dma.done [#allocation15], 4096
        $region88: #{tpu_custom_call.1} parent=55 // pred_fallthru
          _
        // Predicated region
        $region89: #{tpu_custom_call.1} parent=55 // pred_check
          %p426 = pneg %p219
        $region90: #{tpu_custom_call.1} parent=55 // pred_check_branch
          %428 = sbr.rel (%p426) target = $region92
        $region91: #{tpu_custom_call.1} parent=55 // pred_region
          %429 = dma.done [#allocation15], 16
        $region92: #{tpu_custom_call.1} parent=55 // pred_fallthru
          _
        %s430 = sand.u32 %s38, 1
        %s431 = scalar_lea.sflag [#allocation3], %s430
        %s432 = sand.u32 %s38, 1
        %s433 = smul.addr %s432, 32
        %s434 = scalar_lea.vmem [#allocation2], %s433
        %p435 = pneg %p51
        %p436 = pneg %p48
        %p437 = pneg %p72
        %p438 = pneg %p69
        %p439 = pneg %p93
        %p440 = pneg %p90
        %p441 = pneg %p114
        %p442 = pneg %p111
        %p443 = pneg %p135
        %p444 = pneg %p132
        %p445 = pneg %p156
        %p446 = pneg %p153
        %p447 = pneg %p177
        %p448 = pneg %p174
        %p449 = pneg %p198
        %p450 = pneg %p195
        %p451 = pneg %p219
        %p452 = pneg %p216
        %p453 = pneg %p245
        %p454 = pneg %p242
        %s455 = sand.u32 %s232, 1
        %s456 = scalar_lea.sflag [#allocation4], %s455
        %s457 = sand.u32 %s232, 1
        %s458 = smul.addr %s457, 32
        %s459 = scalar_lea.vmem [#allocation17], %s458
        %s460 = smul.u32 2, %s30
        %s461 = smul.u32 2, %s30
        %v462 = vld [vmem:[%s393] sm:$0xff]
        %v463 = vld [vmem:[%s393 + $0x8] sm:$0xff]
        %v464 = vld [vmem:[%s393 + $0x10] sm:$0xff]
        %v465 = vld [vmem:[%s393 + $0x18] sm:$0xff]
        %v466 = vld [vmem:[#allocation5] sm:$0x1]
        %v467 = vld [vmem:[#allocation5 + $0x1] sm:$0x1]
        %v468 = vld [vmem:[#allocation5 + $0x2] sm:$0x1]
        %v469 = vld [vmem:[#allocation5 + $0x3] sm:$0x1]
        %470 = vadd.xlane.f32.xlu0 %v462
        %v471 = vpop.xlane.xlu0 %470
        %472 = vadd.xlane.f32.xlu0 %v463
        %v473 = vpop.xlane.xlu0 %472
        %474 = vadd.xlane.f32.xlu0 %v464
        %v475 = vpop.xlane.xlu0 %474
        %476 = vadd.xlane.f32.xlu0 %v465
        %v477 = vpop.xlane.xlu0 %476
        %v478 = vmul.f32 %v471, 0.0078125
        %v479 = vmul.f32 %v473, 0.0078125
        %v480 = vmul.f32 %v475, 0.0078125
        %v481 = vmul.f32 %v477, 0.0078125
        %v482 = vsub.f32 %v462, %v478
        %v483 = vsub.f32 %v463, %v479
        %v484 = vsub.f32 %v464, %v480
        %v485 = vsub.f32 %v465, %v481
        %v486 = vmul.f32 %v482, %v482
        %v487 = vmul.f32 %v483, %v483
        %v488 = vmul.f32 %v484, %v484
        %v489 = vmul.f32 %v485, %v485
        %490 = vadd.xlane.f32.xlu0 %v486
        %v491 = vpop.xlane.xlu0 %490
        %492 = vadd.xlane.f32.xlu0 %v487
        %v493 = vpop.xlane.xlu0 %492
        %494 = vadd.xlane.f32.xlu0 %v488
        %v495 = vpop.xlane.xlu0 %494
        %496 = vadd.xlane.f32.xlu0 %v489
        %v497 = vpop.xlane.xlu0 %496
        %v498 = vmul.f32 %v491, 0.0078125
        %v499 = vmul.f32 %v493, 0.0078125
        %v500 = vmul.f32 %v495, 0.0078125
        %v501 = vmul.f32 %v497, 0.0078125
        %v502 = vadd.f32 %v498, 1e-06
        %v503 = vadd.f32 %v499, 1e-06
        %v504 = vadd.f32 %v500, 1e-06
        %v505 = vadd.f32 %v501, 1e-06
        %v506 = vrsqrt.pop %v502
        %v507 = vrsqrt.pop %v503
        %v508 = vrsqrt.pop %v504
        %v509 = vrsqrt.pop %v505
        %v510 = vmul.f32 %v482, %v506
        %v511 = vmul.f32 %v483, %v507
        %v512 = vmul.f32 %v484, %v508
        %v513 = vmul.f32 %v485, %v509
        %v514 = vlaneseq
        %v515 = vshrl.u32 %v514, 7
        %v516 = vsub.s32 0, %v515
        %v517 = vrot.slane %v466, %v516
        %v518 = vmul.f32 %v510, %v517
        %v519 = vmul.f32 %v511, %v517
        %v520 = vmul.f32 %v512, %v517
        %v521 = vmul.f32 %v513, %v517
        %v522 = vlaneseq
        %v523 = vshrl.u32 %v522, 7
        %v524 = vsub.s32 0, %v523
        %v525 = vrot.slane %v467, %v524
        %v526 = vadd.f32 %v518, %v525
        %v527 = vadd.f32 %v519, %v525
        %v528 = vadd.f32 %v520, %v525
        %v529 = vadd.f32 %v521, %v525
        %v530 = vld [vmem:[#allocation7] sm:$0xff]
        %v531 = vld [vmem:[#allocation7 + $0x8] sm:$0xff]
        %v532 = vld [vmem:[#allocation7 + $0x10] sm:$0xff]
        %v533 = vld [vmem:[#allocation7 + $0x18] sm:$0xff]
        %v534 = vld [vmem:[#allocation7 + $0x20] sm:$0xff]
        %v535 = vld [vmem:[#allocation7 + $0x28] sm:$0xff]
        %v536 = vld [vmem:[#allocation7 + $0x30] sm:$0xff]
        %v537 = vld [vmem:[#allocation7 + $0x38] sm:$0xff]
        %v538 = vld [vmem:[#allocation7 + $0x40] sm:$0xff]
        %v539 = vld [vmem:[#allocation7 + $0x48] sm:$0xff]
        %v540 = vld [vmem:[#allocation7 + $0x50] sm:$0xff]
        %v541 = vld [vmem:[#allocation7 + $0x58] sm:$0xff]
        %v542 = vld [vmem:[#allocation7 + $0x60] sm:$0xff]
        %v543 = vld [vmem:[#allocation7 + $0x68] sm:$0xff]
        %v544 = vld [vmem:[#allocation7 + $0x70] sm:$0xff]
        %v545 = vld [vmem:[#allocation7 + $0x78] sm:$0xff]
        %v546 = vld [vmem:[#allocation7 + $0x80] sm:$0xff]
        %v547 = vld [vmem:[#allocation7 + $0x88] sm:$0xff]
        %v548 = vld [vmem:[#allocation7 + $0x90] sm:$0xff]
        %v549 = vld [vmem:[#allocation7 + $0x98] sm:$0xff]
        %v550 = vld [vmem:[#allocation7 + $0xa0] sm:$0xff]
        %v551 = vld [vmem:[#allocation7 + $0xa8] sm:$0xff]
        %v552 = vld [vmem:[#allocation7 + $0xb0] sm:$0xff]
        %v553 = vld [vmem:[#allocation7 + $0xb8] sm:$0xff]
        %v554 = vld [vmem:[#allocation7 + $0xc0] sm:$0xff]
        %v555 = vld [vmem:[#allocation7 + $0xc8] sm:$0xff]
        %v556 = vld [vmem:[#allocation7 + $0xd0] sm:$0xff]
        %v557 = vld [vmem:[#allocation7 + $0xd8] sm:$0xff]
        %v558 = vld [vmem:[#allocation7 + $0xe0] sm:$0xff]
        %v559 = vld [vmem:[#allocation7 + $0xe8] sm:$0xff]
        %v560 = vld [vmem:[#allocation7 + $0xf0] sm:$0xff]
        %v561 = vld [vmem:[#allocation7 + $0xf8] sm:$0xff]
        %v562 = vld [vmem:[#allocation7 + $0x100] sm:$0xff]
        %v563 = vld [vmem:[#allocation7 + $0x108] sm:$0xff]
        %v564 = vld [vmem:[#allocation7 + $0x110] sm:$0xff]
        %v565 = vld [vmem:[#allocation7 + $0x118] sm:$0xff]
        %v566 = vld [vmem:[#allocation7 + $0x120] sm:$0xff]
        %v567 = vld [vmem:[#allocation7 + $0x128] sm:$0xff]
        %v568 = vld [vmem:[#allocation7 + $0x130] sm:$0xff]
        %v569 = vld [vmem:[#allocation7 + $0x138] sm:$0xff]
        %v570 = vld [vmem:[#allocation7 + $0x140] sm:$0xff]
        %v571 = vld [vmem:[#allocation7 + $0x148] sm:$0xff]
        %v572 = vld [vmem:[#allocation7 + $0x150] sm:$0xff]
        %v573 = vld [vmem:[#allocation7 + $0x158] sm:$0xff]
        %v574 = vld [vmem:[#allocation7 + $0x160] sm:$0xff]
        %v575 = vld [vmem:[#allocation7 + $0x168] sm:$0xff]
        %v576 = vld [vmem:[#allocation7 + $0x170] sm:$0xff]
        %v577 = vld [vmem:[#allocation7 + $0x178] sm:$0xff]
        %578 = vmatprep.subr.mxu0 %v531
        %579 = vmatpush1.msra.mxu0 %v530
        %580 = vmatprep.subr.mxu0 %v534
        %581 = vmatpush1.msra.mxu0 %v533
        %582 = vmatprep.subr.mxu0 %v537
        %583 = vmatpush1.msra.mxu0 %v536
        %584 = vmatprep.subr.mxu0 %v540
        %585 = vmatpush1.msra.mxu0 %v539
        %586 = vmatprep.subr.mxu0 %v543
        %587 = vmatpush1.msra.mxu0 %v542
        %588 = vmatprep.subr.mxu0 %v546
        %589 = vmatpush1.msra.mxu0 %v545
        %590 = vmatprep.subr.mxu0 %v549
        %591 = vmatpush1.msra.mxu0 %v548
        %592 = vmatprep.subr.mxu0 %v552
        %593 = vmatpush1.msra.mxu0 %v551
        %594 = vmatprep.subr.mxu0 %v555
        %595 = vmatpush1.msra.mxu0 %v554
        %596 = vmatprep.subr.mxu0 %v558
        %597 = vmatpush1.msra.mxu0 %v557
        %598 = vmatprep.subr.mxu0 %v561
        %599 = vmatpush1.msra.mxu0 %v560
        %600 = vmatprep.subr.mxu0 %v564
        %601 = vmatpush1.msra.mxu0 %v563
        %602 = vmatprep.subr.mxu0 %v567
        %603 = vmatpush1.msra.mxu0 %v566
        %604 = vmatprep.subr.mxu0 %v570
        %605 = vmatpush1.msra.mxu0 %v569
        %606 = vmatprep.subr.mxu0 %v573
        %607 = vmatpush1.msra.mxu0 %v572
        %608 = vmatprep.subr.mxu0 %v576
        %609 = vmatpush1.msra.mxu0 %v575
        %610 = vmatprep.subr.mxu0 0.0
        %611 = vmatpush1.msra.mxu0 0.0
        %612 = vmatprep.subr.mxu0 0.0
        %613 = vmatpush1.msra.mxu0 0.0
        %614 = vmatprep.subr.mxu0 0.0
        %615 = vmatpush1.msra.mxu0 0.0
        %616 = vmatprep.subr.mxu0 0.0
        %617 = vmatpush1.msra.mxu0 0.0
        %618 = vmatprep.subr.mxu0 0.0
        %619 = vmatpush1.msra.mxu0 0.0
        %620 = vmatprep.subr.mxu0 0.0
        %621 = vmatpush1.msra.mxu0 0.0
        %622 = vmatprep.subr.mxu0 0.0
        %623 = vmatpush1.msra.mxu0 0.0
        %624 = vmatprep.subr.mxu0 0.0
        %625 = vmatpush1.msra.mxu0 0.0
        %626 = vmatprep.subr.mxu0 0.0
        %627 = vmatpush1.msra.mxu0 0.0
        %628 = vmatprep.subr.mxu0 0.0
        %629 = vmatpush1.msra.mxu0 0.0
        %630 = vmatprep.subr.mxu0 0.0
        %631 = vmatpush1.msra.mxu0 0.0
        %632 = vmatprep.subr.mxu0 0.0
        %633 = vmatpush1.msra.mxu0 0.0
        %634 = vmatprep.subr.mxu0 0.0
        %635 = vmatpush1.msra.mxu0 0.0
        %636 = vmatprep.subr.mxu0 0.0
        %637 = vmatpush1.msra.mxu0 0.0
        %638 = vmatprep.subr.mxu0 0.0
        %639 = vmatpush1.msra.mxu0 0.0
        %640 = vmatprep.subr.mxu0 0.0
        %641 = vmatpush1.msra.mxu0 0.0
        %642 = vmatprep.mubr.f32.mxu0 0.0
        %643 = vmatmul.mubr.f32.gmra.mrb[0].mxu0 %v526
        %v644 = vpop.f32.mrb[0].mxu0
        %v645 = vadd.f32 0.0, %v644
        %v646 = vpop.f32.mrb[0].mxu0
        %v647 = vadd.f32 0.0, %v646
        %648 = vmatprep.mubr.f32.mxu0 0.0
        %649 = vmatmul.mubr.f32.gmra.mrb[0].mxu0 %v527
        %v650 = vpop.f32.mrb[0].mxu0
        %v651 = vadd.f32 0.0, %v650
        %v652 = vpop.f32.mrb[0].mxu0
        %v653 = vadd.f32 0.0, %v652
        %654 = vmatprep.mubr.f32.mxu0 0.0
        %655 = vmatmul.mubr.f32.gmra.mrb[0].mxu0 %v528
        %v656 = vpop.f32.mrb[0].mxu0
        %v657 = vadd.f32 0.0, %v656
        %v658 = vpop.f32.mrb[0].mxu0
        %v659 = vadd.f32 0.0, %v658
        %660 = vmatprep.mubr.f32.mxu0 0.0
        %661 = vmatmul.mubr.f32.gmra.mrb[0].mxu0 %v529
        %v662 = vpop.f32.mrb[0].mxu0
        %v663 = vadd.f32 0.0, %v662
        %v664 = vpop.f32.mrb[0].mxu0
        %v665 = vadd.f32 0.0, %v664
        %666 = vdwg.mxu0
        %667 = vmatprep.subr.mxu0 0.0
        %668 = vmatpush1.msra.mxu0 %v532
        %669 = vmatprep.subr.mxu0 0.0
        %670 = vmatpush1.msra.mxu0 %v535
        %671 = vmatprep.subr.mxu0 0.0
        %672 = vmatpush1.msra.mxu0 %v538
        %673 = vmatprep.subr.mxu0 0.0
        %674 = vmatpush1.msra.mxu0 %v541
        %675 = vmatprep.subr.mxu0 0.0
        %676 = vmatpush1.msra.mxu0 %v544
        %677 = vmatprep.subr.mxu0 0.0
        %678 = vmatpush1.msra.mxu0 %v547
        %679 = vmatprep.subr.mxu0 0.0
        %680 = vmatpush1.msra.mxu0 %v550
        %681 = vmatprep.subr.mxu0 0.0
        %682 = vmatpush1.msra.mxu0 %v553
        %683 = vmatprep.subr.mxu0 0.0
        %684 = vmatpush1.msra.mxu0 %v556
        %685 = vmatprep.subr.mxu0 0.0
        %686 = vmatpush1.msra.mxu0 %v559
        %687 = vmatprep.subr.mxu0 0.0
        %688 = vmatpush1.msra.mxu0 %v562
        %689 = vmatprep.subr.mxu0 0.0
        %690 = vmatpush1.msra.mxu0 %v565
        %691 = vmatprep.subr.mxu0 0.0
        %692 = vmatpush1.msra.mxu0 %v568
        %693 = vmatprep.subr.mxu0 0.0
        %694 = vmatpush1.msra.mxu0 %v571
        %695 = vmatprep.subr.mxu0 0.0
        %696 = vmatpush1.msra.mxu0 %v574
        %697 = vmatprep.subr.mxu0 0.0
        %698 = vmatpush1.msra.mxu0 %v577
        %699 = vmatprep.subr.mxu0 0.0
        %700 = vmatpush1.msra.mxu0 0.0
        %701 = vmatprep.subr.mxu0 0.0
        %702 = vmatpush1.msra.mxu0 0.0
        %703 = vmatprep.subr.mxu0 0.0
        %704 = vmatpush1.msra.mxu0 0.0
        %705 = vmatprep.subr.mxu0 0.0
        %706 = vmatpush1.msra.mxu0 0.0
        %707 = vmatprep.subr.mxu0 0.0
        %708 = vmatpush1.msra.mxu0 0.0
        %709 = vmatprep.subr.mxu0 0.0
        %710 = vmatpush1.msra.mxu0 0.0
        %711 = vmatprep.subr.mxu0 0.0
        %712 = vmatpush1.msra.mxu0 0.0
        %713 = vmatprep.subr.mxu0 0.0
        %714 = vmatpush1.msra.mxu0 0.0
        %715 = vmatprep.subr.mxu0 0.0
        %716 = vmatpush1.msra.mxu0 0.0
        %717 = vmatprep.subr.mxu0 0.0
        %718 = vmatpush1.msra.mxu0 0.0
        %719 = vmatprep.subr.mxu0 0.0
        %720 = vmatpush1.msra.mxu0 0.0
        %721 = vmatprep.subr.mxu0 0.0
        %722 = vmatpush1.msra.mxu0 0.0
        %723 = vmatprep.subr.mxu0 0.0
        %724 = vmatpush1.msra.mxu0 0.0
        %725 = vmatprep.subr.mxu0 0.0
        %726 = vmatpush1.msra.mxu0 0.0
        %727 = vmatprep.subr.mxu0 0.0
        %728 = vmatpush1.msra.mxu0 0.0
        %729 = vmatprep.subr.mxu0 0.0
        %730 = vmatpush1.msra.mxu0 0.0
        %731 = vmatprep.mubr.f32.mxu0 0.0
        %732 = vmatmul.mubr.f32.gmra.mrb[0].mxu0 %v526
        %v733 = vpop.f32.mrb[0].mxu0
        %v734 = vadd.f32 0.0, %v733
        %v735 = vpop.f32.mrb[0].mxu0
        %736 = vmatprep.mubr.f32.mxu0 0.0
        %737 = vmatmul.mubr.f32.gmra.mrb[0].mxu0 %v527
        %v738 = vpop.f32.mrb[0].mxu0
        %v739 = vadd.f32 0.0, %v738
        %v740 = vpop.f32.mrb[0].mxu0
        %741 = vmatprep.mubr.f32.mxu0 0.0
        %742 = vmatmul.mubr.f32.gmra.mrb[0].mxu0 %v528
        %v743 = vpop.f32.mrb[0].mxu0
        %v744 = vadd.f32 0.0, %v743
        %v745 = vpop.f32.mrb[0].mxu0
        %746 = vmatprep.mubr.f32.mxu0 0.0
        %747 = vmatmul.mubr.f32.gmra.mrb[0].mxu0 %v529
        %v748 = vpop.f32.mrb[0].mxu0
        %v749 = vadd.f32 0.0, %v748
        %v750 = vpop.f32.mrb[0].mxu0
        %751 = vdwg.mxu0
        %v752 = vld [vmem:[#allocation8] sm:$0xff]
        %v753 = vld [vmem:[#allocation8 + $0x8] sm:$0xff]
        %v754 = vld [vmem:[#allocation8 + $0x10] sm:$0xff]
        %v755 = vld [vmem:[#allocation8 + $0x18] sm:$0xff]
        %v756 = vld [vmem:[#allocation8 + $0x20] sm:$0xff]
        %v757 = vld [vmem:[#allocation8 + $0x28] sm:$0xff]
        %v758 = vld [vmem:[#allocation8 + $0x30] sm:$0xff]
        %v759 = vld [vmem:[#allocation8 + $0x38] sm:$0xff]
        %v760 = vld [vmem:[#allocation8 + $0x40] sm:$0xff]
        %v761 = vld [vmem:[#allocation8 + $0x48] sm:$0xff]
        %v762 = vld [vmem:[#allocation8 + $0x50] sm:$0xff]
        %v763 = vld [vmem:[#allocation8 + $0x58] sm:$0xff]
        %v764 = vld [vmem:[#allocation8 + $0x60] sm:$0xff]
        %v765 = vld [vmem:[#allocation8 + $0x68] sm:$0xff]
        %v766 = vld [vmem:[#allocation8 + $0x70] sm:$0xff]
        %v767 = vld [vmem:[#allocation8 + $0x78] sm:$0xff]
        %vm768 = vcmask 261120
        %v770 = vsel %vm768, %v645, 0
        %v773 = vsel %vm768, %v651, 0
        %v776 = vsel %vm768, %v647, 0
        %v779 = vsel %vm768, %v653, 0
        %781 = vmatprep.subr.mxu0 0.0
        %782 = vmatpush1.xpose.msra.mxu0 %v776
        %783 = vmatprep.subr.mxu0 0.0
        %784 = vmatpush1.xpose.msra.mxu0 %v779
        %785 = vmatprep.subr.mxu0 0.0
        %786 = vmatpush1.xpose.msra.mxu0 0.0
        %787 = vmatprep.subr.mxu0 0.0
        %788 = vmatpush1.xpose.msra.mxu0 0.0
        %789 = vmatprep.subr.mxu0 0.0
        %790 = vmatpush1.xpose.msra.mxu0 0.0
        %791 = vmatprep.subr.mxu0 0.0
        %792 = vmatpush1.xpose.msra.mxu0 0.0
        %793 = vmatprep.subr.mxu0 0.0
        %794 = vmatpush1.xpose.msra.mxu0 0.0
        %795 = vmatprep.subr.mxu0 0.0
        %796 = vmatpush1.xpose.msra.mxu0 0.0
        %797 = vmatprep.subr.mxu0 0.0
        %798 = vmatpush1.xpose.msra.mxu0 0.0
        %799 = vmatprep.subr.mxu0 0.0
        %800 = vmatpush1.xpose.msra.mxu0 0.0
        %801 = vmatprep.subr.mxu0 0.0
        %802 = vmatpush1.xpose.msra.mxu0 0.0
        %803 = vmatprep.subr.mxu0 0.0
        %804 = vmatpush1.xpose.msra.mxu0 0.0
        %805 = vmatprep.subr.mxu0 0.0
        %806 = vmatpush1.xpose.msra.mxu0 0.0
        %807 = vmatprep.subr.mxu0 0.0
        %808 = vmatpush1.xpose.msra.mxu0 0.0
        %809 = vmatprep.subr.mxu0 0.0
        %810 = vmatpush1.xpose.msra.mxu0 0.0
        %811 = vmatprep.subr.mxu0 0.0
        %812 = vmatpush1.xpose.msra.mxu0 0.0
        %813 = vmatprep.subr.mxu0 0.0
        %814 = vmatpush1.xpose.msra.mxu0 0.0
        %815 = vmatprep.subr.mxu0 0.0
        %816 = vmatpush1.xpose.msra.mxu0 0.0
        %817 = vmatprep.subr.mxu0 0.0
        %818 = vmatpush1.xpose.msra.mxu0 0.0
        %819 = vmatprep.subr.mxu0 0.0
        %820 = vmatpush1.xpose.msra.mxu0 0.0
        %821 = vmatprep.subr.mxu0 0.0
        %822 = vmatpush1.xpose.msra.mxu0 0.0
        %823 = vmatprep.subr.mxu0 0.0
        %824 = vmatpush1.xpose.msra.mxu0 0.0
        %825 = vmatprep.subr.mxu0 0.0
        %826 = vmatpush1.xpose.msra.mxu0 0.0
        %827 = vmatprep.subr.mxu0 0.0
        %828 = vmatpush1.xpose.msra.mxu0 0.0
        %829 = vmatprep.subr.mxu0 0.0
        %830 = vmatpush1.xpose.msra.mxu0 0.0
        %831 = vmatprep.subr.mxu0 0.0
        %832 = vmatpush1.xpose.msra.mxu0 0.0
        %833 = vmatprep.subr.mxu0 0.0
        %834 = vmatpush1.xpose.msra.mxu0 0.0
        %835 = vmatprep.subr.mxu0 0.0
        %836 = vmatpush1.xpose.msra.mxu0 0.0
        %837 = vmatprep.subr.mxu0 0.0
        %838 = vmatpush1.xpose.msra.mxu0 0.0
        %839 = vmatprep.subr.mxu0 0.0
        %840 = vmatpush1.xpose.msra.mxu0 0.0
        %841 = vmatprep.subr.mxu0 0.0
        %842 = vmatpush1.xpose.msra.mxu0 0.0
        %843 = vmatprep.subr.mxu0 0.0
        %844 = vmatpush1.xpose.msra.mxu0 0.0
        %845 = vmatprep.mubr.f32.mxu0 0.0
        %846 = vmatmul.mubr.f32.gmra.mrb[0].mxu0 %v770
        %v847 = vpop.f32.mrb[0].mxu0
        %v848 = vadd.f32 0.0, %v847
        %v849 = vpop.f32.mrb[0].mxu0
        %850 = vmatprep.mubr.f32.mxu0 0.0
        %851 = vmatmul.mubr.f32.gmra.mrb[0].mxu0 %v773
        %v852 = vpop.f32.mrb[0].mxu0
        %v853 = vadd.f32 0.0, %v852
        %v854 = vpop.f32.mrb[0].mxu0
        %855 = vdwg.mxu0
        %v857 = vsel %vm768, %v657, 0
        %v860 = vsel %vm768, %v663, 0
        %v863 = vsel %vm768, %v659, 0
        %v866 = vsel %vm768, %v665, 0
        %868 = vmatprep.subr.mxu0 0.0
        %869 = vmatpush1.xpose.msra.mxu0 %v863
        %870 = vmatprep.subr.mxu0 0.0
        %871 = vmatpush1.xpose.msra.mxu0 %v866
        %872 = vmatprep.subr.mxu0 0.0
        %873 = vmatpush1.xpose.msra.mxu0 0.0
        %874 = vmatprep.subr.mxu0 0.0
        %875 = vmatpush1.xpose.msra.mxu0 0.0
        %876 = vmatprep.subr.mxu0 0.0
        %877 = vmatpush1.xpose.msra.mxu0 0.0
        %878 = vmatprep.subr.mxu0 0.0
        %879 = vmatpush1.xpose.msra.mxu0 0.0
        %880 = vmatprep.subr.mxu0 0.0
        %881 = vmatpush1.xpose.msra.mxu0 0.0
        %882 = vmatprep.subr.mxu0 0.0
        %883 = vmatpush1.xpose.msra.mxu0 0.0
        %884 = vmatprep.subr.mxu0 0.0
        %885 = vmatpush1.xpose.msra.mxu0 0.0
        %886 = vmatprep.subr.mxu0 0.0
        %887 = vmatpush1.xpose.msra.mxu0 0.0
        %888 = vmatprep.subr.mxu0 0.0
        %889 = vmatpush1.xpose.msra.mxu0 0.0
        %890 = vmatprep.subr.mxu0 0.0
        %891 = vmatpush1.xpose.msra.mxu0 0.0
        %892 = vmatprep.subr.mxu0 0.0
        %893 = vmatpush1.xpose.msra.mxu0 0.0
        %894 = vmatprep.subr.mxu0 0.0
        %895 = vmatpush1.xpose.msra.mxu0 0.0
        %896 = vmatprep.subr.mxu0 0.0
        %897 = vmatpush1.xpose.msra.mxu0 0.0
        %898 = vmatprep.subr.mxu0 0.0
        %899 = vmatpush1.xpose.msra.mxu0 0.0
        %900 = vmatprep.subr.mxu0 0.0
        %901 = vmatpush1.xpose.msra.mxu0 0.0
        %902 = vmatprep.subr.mxu0 0.0
        %903 = vmatpush1.xpose.msra.mxu0 0.0
        %904 = vmatprep.subr.mxu0 0.0
        %905 = vmatpush1.xpose.msra.mxu0 0.0
        %906 = vmatprep.subr.mxu0 0.0
        %907 = vmatpush1.xpose.msra.mxu0 0.0
        %908 = vmatprep.subr.mxu0 0.0
        %909 = vmatpush1.xpose.msra.mxu0 0.0
        %910 = vmatprep.subr.mxu0 0.0
        %911 = vmatpush1.xpose.msra.mxu0 0.0
        %912 = vmatprep.subr.mxu0 0.0
        %913 = vmatpush1.xpose.msra.mxu0 0.0
        %914 = vmatprep.subr.mxu0 0.0
        %915 = vmatpush1.xpose.msra.mxu0 0.0
        %916 = vmatprep.subr.mxu0 0.0
        %917 = vmatpush1.xpose.msra.mxu0 0.0
        %918 = vmatprep.subr.mxu0 0.0
        %919 = vmatpush1.xpose.msra.mxu0 0.0
        %920 = vmatprep.subr.mxu0 0.0
        %921 = vmatpush1.xpose.msra.mxu0 0.0
        %922 = vmatprep.subr.mxu0 0.0
        %923 = vmatpush1.xpose.msra.mxu0 0.0
        %924 = vmatprep.subr.mxu0 0.0
        %925 = vmatpush1.xpose.msra.mxu0 0.0
        %926 = vmatprep.subr.mxu0 0.0
        %927 = vmatpush1.xpose.msra.mxu0 0.0
        %928 = vmatprep.subr.mxu0 0.0
        %929 = vmatpush1.xpose.msra.mxu0 0.0
        %930 = vmatprep.subr.mxu0 0.0
        %931 = vmatpush1.xpose.msra.mxu0 0.0
        %932 = vmatprep.mubr.f32.mxu0 0.0
        %933 = vmatmul.mubr.f32.gmra.mrb[0].mxu0 %v857
        %v934 = vpop.f32.mrb[0].mxu0
        %v935 = vadd.f32 0.0, %v934
        %v936 = vpop.f32.mrb[0].mxu0
        %937 = vmatprep.mubr.f32.mxu0 0.0
        %938 = vmatmul.mubr.f32.gmra.mrb[0].mxu0 %v860
        %v939 = vpop.f32.mrb[0].mxu0
        %v940 = vadd.f32 0.0, %v939
        %v941 = vpop.f32.mrb[0].mxu0
        %942 = vdwg.mxu0
        %v943 = vmul.f32 %v848, 0.17677669
        %v944 = vmul.f32 %v853, 0.17677669
        %v945 = vmul.f32 %v935, 0.17677669
        %v946 = vmul.f32 %v940, 0.17677669
        %vm947 = vcmask 130048
        %v948 = vsel %vm947, %v943, -inf
        %949 = vmax.xlane.f32.xlu0 %v948
        %v950 = vpop.xlane.xlu0 %949
        %v951 = vsel %vm947, %v944, -inf
        %952 = vmax.xlane.f32.xlu0 %v951
        %v953 = vpop.xlane.xlu0 %952
        %v954 = vsel %vm947, %v945, -inf
        %955 = vmax.xlane.f32.xlu0 %v954
        %v956 = vpop.xlane.xlu0 %955
        %v957 = vsel %vm947, %v946, -inf
        %958 = vmax.xlane.f32.xlu0 %v957
        %v959 = vpop.xlane.xlu0 %958
        %v960 = vsub.f32 %v943, %v950
        %v961 = vsub.f32 %v944, %v953
        %v962 = vsub.f32 %v945, %v956
        %v963 = vsub.f32 %v946, %v959
        %v964 = vmul.f32 %v960, 1.442695
        %v965 = vpow.pop %v964
        %v966 = vmul.f32 %v961, 1.442695
        %v967 = vpow.pop %v966
        %v968 = vmul.f32 %v962, 1.442695
        %v969 = vpow.pop %v968
        %v970 = vmul.f32 %v963, 1.442695
        %v971 = vpow.pop %v970
        %v972 = vsel %vm947, %v965, 0.0
        %973 = vadd.xlane.f32.xlu0 %v972
        %v974 = vpop.xlane.xlu0 %973
        %v975 = vsel %vm947, %v967, 0.0
        %976 = vadd.xlane.f32.xlu0 %v975
        %v977 = vpop.xlane.xlu0 %976
        %v978 = vsel %vm947, %v969, 0.0
        %979 = vadd.xlane.f32.xlu0 %v978
        %v980 = vpop.xlane.xlu0 %979
        %v981 = vsel %vm947, %v971, 0.0
        %982 = vadd.xlane.f32.xlu0 %v981
        %v983 = vpop.xlane.xlu0 %982
        %v984 = vrcp.pop %v974
        %v985 = vrcp.pop %v977
        %v986 = vrcp.pop %v980
        %v987 = vrcp.pop %v983
        %v988 = vmul.f32 %v965, %v984
        %v989 = vmul.f32 %v967, %v985
        %v990 = vmul.f32 %v969, %v986
        %v991 = vmul.f32 %v971, %v987
        %v993 = vsel %vm947, %v988, 0
        %v996 = vsel %vm947, %v989, 0
        %998 = vmatprep.subr.mxu0 0.0
        %999 = vmatpush1.msra.mxu0 %v734
        %1000 = vmatprep.subr.mxu0 0.0
        %1001 = vmatpush1.msra.mxu0 %v739
        %1002 = vmatprep.subr.mxu0 0.0
        %1003 = vmatpush1.msra.mxu0 0.0
        %1004 = vmatprep.subr.mxu0 0.0
        %1005 = vmatpush1.msra.mxu0 0.0
        %1006 = vmatprep.subr.mxu0 0.0
        %1007 = vmatpush1.msra.mxu0 0.0
        %1008 = vmatprep.subr.mxu0 0.0
        %1009 = vmatpush1.msra.mxu0 0.0
        %1010 = vmatprep.subr.mxu0 0.0
        %1011 = vmatpush1.msra.mxu0 0.0
        %1012 = vmatprep.subr.mxu0 0.0
        %1013 = vmatpush1.msra.mxu0 0.0
        %1014 = vmatprep.subr.mxu0 0.0
        %1015 = vmatpush1.msra.mxu0 0.0
        %1016 = vmatprep.subr.mxu0 0.0
        %1017 = vmatpush1.msra.mxu0 0.0
        %1018 = vmatprep.subr.mxu0 0.0
        %1019 = vmatpush1.msra.mxu0 0.0
        %1020 = vmatprep.subr.mxu0 0.0
        %1021 = vmatpush1.msra.mxu0 0.0
        %1022 = vmatprep.subr.mxu0 0.0
        %1023 = vmatpush1.msra.mxu0 0.0
        %1024 = vmatprep.subr.mxu0 0.0
        %1025 = vmatpush1.msra.mxu0 0.0
        %1026 = vmatprep.subr.mxu0 0.0
        %1027 = vmatpush1.msra.mxu0 0.0
        %1028 = vmatprep.subr.mxu0 0.0
        %1029 = vmatpush1.msra.mxu0 0.0
        %1030 = vmatprep.subr.mxu0 0.0
        %1031 = vmatpush1.msra.mxu0 0.0
        %1032 = vmatprep.subr.mxu0 0.0
        %1033 = vmatpush1.msra.mxu0 0.0
        %1034 = vmatprep.subr.mxu0 0.0
        %1035 = vmatpush1.msra.mxu0 0.0
        %1036 = vmatprep.subr.mxu0 0.0
        %1037 = vmatpush1.msra.mxu0 0.0
        %1038 = vmatprep.subr.mxu0 0.0
        %1039 = vmatpush1.msra.mxu0 0.0
        %1040 = vmatprep.subr.mxu0 0.0
        %1041 = vmatpush1.msra.mxu0 0.0
        %1042 = vmatprep.subr.mxu0 0.0
        %1043 = vmatpush1.msra.mxu0 0.0
        %1044 = vmatprep.subr.mxu0 0.0
        %1045 = vmatpush1.msra.mxu0 0.0
        %1046 = vmatprep.subr.mxu0 0.0
        %1047 = vmatpush1.msra.mxu0 0.0
        %1048 = vmatprep.subr.mxu0 0.0
        %1049 = vmatpush1.msra.mxu0 0.0
        %1050 = vmatprep.subr.mxu0 0.0
        %1051 = vmatpush1.msra.mxu0 0.0
        %1052 = vmatprep.subr.mxu0 0.0
        %1053 = vmatpush1.msra.mxu0 0.0
        %1054 = vmatprep.subr.mxu0 0.0
        %1055 = vmatpush1.msra.mxu0 0.0
        %1056 = vmatprep.subr.mxu0 0.0
        %1057 = vmatpush1.msra.mxu0 0.0
        %1058 = vmatprep.subr.mxu0 0.0
        %1059 = vmatpush1.msra.mxu0 0.0
        %1060 = vmatprep.subr.mxu0 0.0
        %1061 = vmatpush1.msra.mxu0 0.0
        %1062 = vmatprep.mubr.f32.mxu0 0.0
        %1063 = vmatmul.mubr.f32.gmra.mrb[0].mxu0 %v993
        %v1064 = vpop.f32.mrb[0].mxu0
        %v1065 = vadd.f32 0.0, %v1064
        %v1066 = vpop.f32.mrb[0].mxu0
        %1067 = vmatprep.mubr.f32.mxu0 0.0
        %1068 = vmatmul.mubr.f32.gmra.mrb[0].mxu0 %v996
        %v1069 = vpop.f32.mrb[0].mxu0
        %v1070 = vadd.f32 0.0, %v1069
        %v1071 = vpop.f32.mrb[0].mxu0
        %1072 = vdwg.mxu0
        %v1074 = vsel %vm947, %v990, 0
        %v1077 = vsel %vm947, %v991, 0
        %1079 = vmatprep.subr.mxu0 0.0
        %1080 = vmatpush1.msra.mxu0 %v744
        %1081 = vmatprep.subr.mxu0 0.0
        %1082 = vmatpush1.msra.mxu0 %v749
        %1083 = vmatprep.subr.mxu0 0.0
        %1084 = vmatpush1.msra.mxu0 0.0
        %1085 = vmatprep.subr.mxu0 0.0
        %1086 = vmatpush1.msra.mxu0 0.0
        %1087 = vmatprep.subr.mxu0 0.0
        %1088 = vmatpush1.msra.mxu0 0.0
        %1089 = vmatprep.subr.mxu0 0.0
        %1090 = vmatpush1.msra.mxu0 0.0
        %1091 = vmatprep.subr.mxu0 0.0
        %1092 = vmatpush1.msra.mxu0 0.0
        %1093 = vmatprep.subr.mxu0 0.0
        %1094 = vmatpush1.msra.mxu0 0.0
        %1095 = vmatprep.subr.mxu0 0.0
        %1096 = vmatpush1.msra.mxu0 0.0
        %1097 = vmatprep.subr.mxu0 0.0
        %1098 = vmatpush1.msra.mxu0 0.0
        %1099 = vmatprep.subr.mxu0 0.0
        %1100 = vmatpush1.msra.mxu0 0.0
        %1101 = vmatprep.subr.mxu0 0.0
        %1102 = vmatpush1.msra.mxu0 0.0
        %1103 = vmatprep.subr.mxu0 0.0
        %1104 = vmatpush1.msra.mxu0 0.0
        %1105 = vmatprep.subr.mxu0 0.0
        %1106 = vmatpush1.msra.mxu0 0.0
        %1107 = vmatprep.subr.mxu0 0.0
        %1108 = vmatpush1.msra.mxu0 0.0
        %1109 = vmatprep.subr.mxu0 0.0
        %1110 = vmatpush1.msra.mxu0 0.0
        %1111 = vmatprep.subr.mxu0 0.0
        %1112 = vmatpush1.msra.mxu0 0.0
        %1113 = vmatprep.subr.mxu0 0.0
        %1114 = vmatpush1.msra.mxu0 0.0
        %1115 = vmatprep.subr.mxu0 0.0
        %1116 = vmatpush1.msra.mxu0 0.0
        %1117 = vmatprep.subr.mxu0 0.0
        %1118 = vmatpush1.msra.mxu0 0.0
        %1119 = vmatprep.subr.mxu0 0.0
        %1120 = vmatpush1.msra.mxu0 0.0
        %1121 = vmatprep.subr.mxu0 0.0
        %1122 = vmatpush1.msra.mxu0 0.0
        %1123 = vmatprep.subr.mxu0 0.0
        %1124 = vmatpush1.msra.mxu0 0.0
        %1125 = vmatprep.subr.mxu0 0.0
        %1126 = vmatpush1.msra.mxu0 0.0
        %1127 = vmatprep.subr.mxu0 0.0
        %1128 = vmatpush1.msra.mxu0 0.0
        %1129 = vmatprep.subr.mxu0 0.0
        %1130 = vmatpush1.msra.mxu0 0.0
        %1131 = vmatprep.subr.mxu0 0.0
        %1132 = vmatpush1.msra.mxu0 0.0
        %1133 = vmatprep.subr.mxu0 0.0
        %1134 = vmatpush1.msra.mxu0 0.0
        %1135 = vmatprep.subr.mxu0 0.0
        %1136 = vmatpush1.msra.mxu0 0.0
        %1137 = vmatprep.subr.mxu0 0.0
        %1138 = vmatpush1.msra.mxu0 0.0
        %1139 = vmatprep.subr.mxu0 0.0
        %1140 = vmatpush1.msra.mxu0 0.0
        %1141 = vmatprep.subr.mxu0 0.0
        %1142 = vmatpush1.msra.mxu0 0.0
        %1143 = vmatprep.mubr.f32.mxu0 0.0
        %1144 = vmatmul.mubr.f32.gmra.mrb[0].mxu0 %v1074
        %v1145 = vpop.f32.mrb[0].mxu0
        %v1146 = vadd.f32 0.0, %v1145
        %v1147 = vpop.f32.mrb[0].mxu0
        %1148 = vmatprep.mubr.f32.mxu0 0.0
        %1149 = vmatmul.mubr.f32.gmra.mrb[0].mxu0 %v1077
        %v1150 = vpop.f32.mrb[0].mxu0
        %v1151 = vadd.f32 0.0, %v1150
        %v1152 = vpop.f32.mrb[0].mxu0
        %1153 = vdwg.mxu0
        %1154 = vrot.lane.b32.xlu0 %v645, 96
        %v1155 = vpop.permute.xlu0 %1154
        %1156 = vrot.lane.b32.xlu0 %v651, 96
        %v1157 = vpop.permute.xlu0 %1156
        %1158 = vrot.lane.b32.xlu0 %v647, 96
        %v1159 = vpop.permute.xlu0 %1158
        %1160 = vrot.lane.b32.xlu0 %v653, 96
        %v1161 = vpop.permute.xlu0 %1160
        %v1162 = vsel %vm768, %v1155, 0
        %v1164 = vsel %vm768, %v1157, 0
        %v1166 = vsel %vm768, %v1159, 0
        %v1168 = vsel %vm768, %v1161, 0
        %1170 = vmatprep.subr.mxu0 0.0
        %1171 = vmatpush1.xpose.msra.mxu0 %v1166
        %1172 = vmatprep.subr.mxu0 0.0
        %1173 = vmatpush1.xpose.msra.mxu0 %v1168
        %1174 = vmatprep.subr.mxu0 0.0
        %1175 = vmatpush1.xpose.msra.mxu0 0.0
        %1176 = vmatprep.subr.mxu0 0.0
        %1177 = vmatpush1.xpose.msra.mxu0 0.0
        %1178 = vmatprep.subr.mxu0 0.0
        %1179 = vmatpush1.xpose.msra.mxu0 0.0
        %1180 = vmatprep.subr.mxu0 0.0
        %1181 = vmatpush1.xpose.msra.mxu0 0.0
        %1182 = vmatprep.subr.mxu0 0.0
        %1183 = vmatpush1.xpose.msra.mxu0 0.0
        %1184 = vmatprep.subr.mxu0 0.0
        %1185 = vmatpush1.xpose.msra.mxu0 0.0
        %1186 = vmatprep.subr.mxu0 0.0
        %1187 = vmatpush1.xpose.msra.mxu0 0.0
        %1188 = vmatprep.subr.mxu0 0.0
        %1189 = vmatpush1.xpose.msra.mxu0 0.0
        %1190 = vmatprep.subr.mxu0 0.0
        %1191 = vmatpush1.xpose.msra.mxu0 0.0
        %1192 = vmatprep.subr.mxu0 0.0
        %1193 = vmatpush1.xpose.msra.mxu0 0.0
        %1194 = vmatprep.subr.mxu0 0.0
        %1195 = vmatpush1.xpose.msra.mxu0 0.0
        %1196 = vmatprep.subr.mxu0 0.0
        %1197 = vmatpush1.xpose.msra.mxu0 0.0
        %1198 = vmatprep.subr.mxu0 0.0
        %1199 = vmatpush1.xpose.msra.mxu0 0.0
        %1200 = vmatprep.subr.mxu0 0.0
        %1201 = vmatpush1.xpose.msra.mxu0 0.0
        %1202 = vmatprep.subr.mxu0 0.0
        %1203 = vmatpush1.xpose.msra.mxu0 0.0
        %1204 = vmatprep.subr.mxu0 0.0
        %1205 = vmatpush1.xpose.msra.mxu0 0.0
        %1206 = vmatprep.subr.mxu0 0.0
        %1207 = vmatpush1.xpose.msra.mxu0 0.0
        %1208 = vmatprep.subr.mxu0 0.0
        %1209 = vmatpush1.xpose.msra.mxu0 0.0
        %1210 = vmatprep.subr.mxu0 0.0
        %1211 = vmatpush1.xpose.msra.mxu0 0.0
        %1212 = vmatprep.subr.mxu0 0.0
        %1213 = vmatpush1.xpose.msra.mxu0 0.0
        %1214 = vmatprep.subr.mxu0 0.0
        %1215 = vmatpush1.xpose.msra.mxu0 0.0
        %1216 = vmatprep.subr.mxu0 0.0
        %1217 = vmatpush1.xpose.msra.mxu0 0.0
        %1218 = vmatprep.subr.mxu0 0.0
        %1219 = vmatpush1.xpose.msra.mxu0 0.0
        %1220 = vmatprep.subr.mxu0 0.0
        %1221 = vmatpush1.xpose.msra.mxu0 0.0
        %1222 = vmatprep.subr.mxu0 0.0
        %1223 = vmatpush1.xpose.msra.mxu0 0.0
        %1224 = vmatprep.subr.mxu0 0.0
        %1225 = vmatpush1.xpose.msra.mxu0 0.0
        %1226 = vmatprep.subr.mxu0 0.0
        %1227 = vmatpush1.xpose.msra.mxu0 0.0
        %1228 = vmatprep.subr.mxu0 0.0
        %1229 = vmatpush1.xpose.msra.mxu0 0.0
        %1230 = vmatprep.subr.mxu0 0.0
        %1231 = vmatpush1.xpose.msra.mxu0 0.0
        %1232 = vmatprep.subr.mxu0 0.0
        %1233 = vmatpush1.xpose.msra.mxu0 0.0
        %1234 = vmatprep.mubr.f32.mxu0 0.0
        %1235 = vmatmul.mubr.f32.gmra.mrb[0].mxu0 %v1162
        %v1236 = vpop.f32.mrb[0].mxu0
        %v1237 = vadd.f32 0.0, %v1236
        %v1238 = vpop.f32.mrb[0].mxu0
        %1239 = vmatprep.mubr.f32.mxu0 0.0
        %1240 = vmatmul.mubr.f32.gmra.mrb[0].mxu0 %v1164
        %v1241 = vpop.f32.mrb[0].mxu0
        %v1242 = vadd.f32 0.0, %v1241
        %v1243 = vpop.f32.mrb[0].mxu0
        %1244 = vdwg.mxu0
        %1245 = vrot.lane.b32.xlu0 %v657, 96
        %v1246 = vpop.permute.xlu0 %1245
        %1247 = vrot.lane.b32.xlu0 %v663, 96
        %v1248 = vpop.permute.xlu0 %1247
        %1249 = vrot.lane.b32.xlu0 %v659, 96
        %v1250 = vpop.permute.xlu0 %1249
        %1251 = vrot.lane.b32.xlu0 %v665, 96
        %v1252 = vpop.permute.xlu0 %1251
        %v1253 = vsel %vm768, %v1246, 0
        %v1255 = vsel %vm768, %v1248, 0
        %v1257 = vsel %vm768, %v1250, 0
        %v1259 = vsel %vm768, %v1252, 0
        %1261 = vmatprep.subr.mxu0 0.0
        %1262 = vmatpush1.xpose.msra.mxu0 %v1257
        %1263 = vmatprep.subr.mxu0 0.0
        %1264 = vmatpush1.xpose.msra.mxu0 %v1259
        %1265 = vmatprep.subr.mxu0 0.0
        %1266 = vmatpush1.xpose.msra.mxu0 0.0
        %1267 = vmatprep.subr.mxu0 0.0
        %1268 = vmatpush1.xpose.msra.mxu0 0.0
        %1269 = vmatprep.subr.mxu0 0.0
        %1270 = vmatpush1.xpose.msra.mxu0 0.0
        %1271 = vmatprep.subr.mxu0 0.0
        %1272 = vmatpush1.xpose.msra.mxu0 0.0
        %1273 = vmatprep.subr.mxu0 0.0
        %1274 = vmatpush1.xpose.msra.mxu0 0.0
        %1275 = vmatprep.subr.mxu0 0.0
        %1276 = vmatpush1.xpose.msra.mxu0 0.0
        %1277 = vmatprep.subr.mxu0 0.0
        %1278 = vmatpush1.xpose.msra.mxu0 0.0
        %1279 = vmatprep.subr.mxu0 0.0
        %1280 = vmatpush1.xpose.msra.mxu0 0.0
        %1281 = vmatprep.subr.mxu0 0.0
        %1282 = vmatpush1.xpose.msra.mxu0 0.0
        %1283 = vmatprep.subr.mxu0 0.0
        %1284 = vmatpush1.xpose.msra.mxu0 0.0
        %1285 = vmatprep.subr.mxu0 0.0
        %1286 = vmatpush1.xpose.msra.mxu0 0.0
        %1287 = vmatprep.subr.mxu0 0.0
        %1288 = vmatpush1.xpose.msra.mxu0 0.0
        %1289 = vmatprep.subr.mxu0 0.0
        %1290 = vmatpush1.xpose.msra.mxu0 0.0
        %1291 = vmatprep.subr.mxu0 0.0
        %1292 = vmatpush1.xpose.msra.mxu0 0.0
        %1293 = vmatprep.subr.mxu0 0.0
        %1294 = vmatpush1.xpose.msra.mxu0 0.0
        %1295 = vmatprep.subr.mxu0 0.0
        %1296 = vmatpush1.xpose.msra.mxu0 0.0
        %1297 = vmatprep.subr.mxu0 0.0
        %1298 = vmatpush1.xpose.msra.mxu0 0.0
        %1299 = vmatprep.subr.mxu0 0.0
        %1300 = vmatpush1.xpose.msra.mxu0 0.0
        %1301 = vmatprep.subr.mxu0 0.0
        %1302 = vmatpush1.xpose.msra.mxu0 0.0
        %1303 = vmatprep.subr.mxu0 0.0
        %1304 = vmatpush1.xpose.msra.mxu0 0.0
        %1305 = vmatprep.subr.mxu0 0.0
        %1306 = vmatpush1.xpose.msra.mxu0 0.0
        %1307 = vmatprep.subr.mxu0 0.0
        %1308 = vmatpush1.xpose.msra.mxu0 0.0
        %1309 = vmatprep.subr.mxu0 0.0
        %1310 = vmatpush1.xpose.msra.mxu0 0.0
        %1311 = vmatprep.subr.mxu0 0.0
        %1312 = vmatpush1.xpose.msra.mxu0 0.0
        %1313 = vmatprep.subr.mxu0 0.0
        %1314 = vmatpush1.xpose.msra.mxu0 0.0
        %1315 = vmatprep.subr.mxu0 0.0
        %1316 = vmatpush1.xpose.msra.mxu0 0.0
        %1317 = vmatprep.subr.mxu0 0.0
        %1318 = vmatpush1.xpose.msra.mxu0 0.0
        %1319 = vmatprep.subr.mxu0 0.0
        %1320 = vmatpush1.xpose.msra.mxu0 0.0
        %1321 = vmatprep.subr.mxu0 0.0
        %1322 = vmatpush1.xpose.msra.mxu0 0.0
        %1323 = vmatprep.subr.mxu0 0.0
        %1324 = vmatpush1.xpose.msra.mxu0 0.0
        %1325 = vmatprep.mubr.f32.mxu0 0.0
        %1326 = vmatmul.mubr.f32.gmra.mrb[0].mxu0 %v1253
        %v1327 = vpop.f32.mrb[0].mxu0
        %v1328 = vadd.f32 0.0, %v1327
        %v1329 = vpop.f32.mrb[0].mxu0
        %1330 = vmatprep.mubr.f32.mxu0 0.0
        %1331 = vmatmul.mubr.f32.gmra.mrb[0].mxu0 %v1255
        %v1332 = vpop.f32.mrb[0].mxu0
        %v1333 = vadd.f32 0.0, %v1332
        %v1334 = vpop.f32.mrb[0].mxu0
        %1335 = vdwg.mxu0
        %v1336 = vmul.f32 %v1237, 0.17677669
        %v1337 = vmul.f32 %v1242, 0.17677669
        %v1338 = vmul.f32 %v1328, 0.17677669
        %v1339 = vmul.f32 %v1333, 0.17677669
        %v1340 = vsel %vm947, %v1336, -inf
        %1341 = vmax.xlane.f32.xlu0 %v1340
        %v1342 = vpop.xlane.xlu0 %1341
        %v1343 = vsel %vm947, %v1337, -inf
        %1344 = vmax.xlane.f32.xlu0 %v1343
        %v1345 = vpop.xlane.xlu0 %1344
        %v1346 = vsel %vm947, %v1338, -inf
        %1347 = vmax.xlane.f32.xlu0 %v1346
        %v1348 = vpop.xlane.xlu0 %1347
        %v1349 = vsel %vm947, %v1339, -inf
        %1350 = vmax.xlane.f32.xlu0 %v1349
        %v1351 = vpop.xlane.xlu0 %1350
        %v1352 = vsub.f32 %v1336, %v1342
        %v1353 = vsub.f32 %v1337, %v1345
        %v1354 = vsub.f32 %v1338, %v1348
        %v1355 = vsub.f32 %v1339, %v1351
        %v1356 = vmul.f32 %v1352, 1.442695
        %v1357 = vpow.pop %v1356
        %v1358 = vmul.f32 %v1353, 1.442695
        %v1359 = vpow.pop %v1358
        %v1360 = vmul.f32 %v1354, 1.442695
        %v1361 = vpow.pop %v1360
        %v1362 = vmul.f32 %v1355, 1.442695
        %v1363 = vpow.pop %v1362
        %v1364 = vsel %vm947, %v1357, 0.0
        %1365 = vadd.xlane.f32.xlu0 %v1364
        %v1366 = vpop.xlane.xlu0 %1365
        %v1367 = vsel %vm947, %v1359, 0.0
        %1368 = vadd.xlane.f32.xlu0 %v1367
        %v1369 = vpop.xlane.xlu0 %1368
        %v1370 = vsel %vm947, %v1361, 0.0
        %1371 = vadd.xlane.f32.xlu0 %v1370
        %v1372 = vpop.xlane.xlu0 %1371
        %v1373 = vsel %vm947, %v1363, 0.0
        %1374 = vadd.xlane.f32.xlu0 %v1373
        %v1375 = vpop.xlane.xlu0 %1374
        %v1376 = vrcp.pop %v1366
        %v1377 = vrcp.pop %v1369
        %v1378 = vrcp.pop %v1372
        %v1379 = vrcp.pop %v1375
        %v1380 = vmul.f32 %v1357, %v1376
        %v1381 = vmul.f32 %v1359, %v1377
        %v1382 = vmul.f32 %v1361, %v1378
        %v1383 = vmul.f32 %v1363, %v1379
        %1386 = vrot.lane.b32.xlu0 %v734, 96
        %v1387 = vpop.permute.xlu0 %1386
        %1388 = vrot.lane.b32.xlu0 %v739, 96
        %v1389 = vpop.permute.xlu0 %1388
        %v1393 = vsel %vm947, %v1380, 0
        %v1396 = vsel %vm947, %v1381, 0
        %1398 = vmatprep.subr.mxu0 0.0
        %1399 = vmatpush1.msra.mxu0 %v1387
        %1400 = vmatprep.subr.mxu0 0.0
        %1401 = vmatpush1.msra.mxu0 %v1389
        %1402 = vmatprep.subr.mxu0 0.0
        %1403 = vmatpush1.msra.mxu0 0.0
        %1404 = vmatprep.subr.mxu0 0.0
        %1405 = vmatpush1.msra.mxu0 0.0
        %1406 = vmatprep.subr.mxu0 0.0
        %1407 = vmatpush1.msra.mxu0 0.0
        %1408 = vmatprep.subr.mxu0 0.0
        %1409 = vmatpush1.msra.mxu0 0.0
        %1410 = vmatprep.subr.mxu0 0.0
        %1411 = vmatpush1.msra.mxu0 0.0
        %1412 = vmatprep.subr.mxu0 0.0
        %1413 = vmatpush1.msra.mxu0 0.0
        %1414 = vmatprep.subr.mxu0 0.0
        %1415 = vmatpush1.msra.mxu0 0.0
        %1416 = vmatprep.subr.mxu0 0.0
        %1417 = vmatpush1.msra.mxu0 0.0
        %1418 = vmatprep.subr.mxu0 0.0
        %1419 = vmatpush1.msra.mxu0 0.0
        %1420 = vmatprep.subr.mxu0 0.0
        %1421 = vmatpush1.msra.mxu0 0.0
        %1422 = vmatprep.subr.mxu0 0.0
        %1423 = vmatpush1.msra.mxu0 0.0
        %1424 = vmatprep.subr.mxu0 0.0
        %1425 = vmatpush1.msra.mxu0 0.0
        %1426 = vmatprep.subr.mxu0 0.0
        %1427 = vmatpush1.msra.mxu0 0.0
        %1428 = vmatprep.subr.mxu0 0.0
        %1429 = vmatpush1.msra.mxu0 0.0
        %1430 = vmatprep.subr.mxu0 0.0
        %1431 = vmatpush1.msra.mxu0 0.0
        %1432 = vmatprep.subr.mxu0 0.0
        %1433 = vmatpush1.msra.mxu0 0.0
        %1434 = vmatprep.subr.mxu0 0.0
        %1435 = vmatpush1.msra.mxu0 0.0
        %1436 = vmatprep.subr.mxu0 0.0
        %1437 = vmatpush1.msra.mxu0 0.0
        %1438 = vmatprep.subr.mxu0 0.0
        %1439 = vmatpush1.msra.mxu0 0.0
        %1440 = vmatprep.subr.mxu0 0.0
        %1441 = vmatpush1.msra.mxu0 0.0
        %1442 = vmatprep.subr.mxu0 0.0
        %1443 = vmatpush1.msra.mxu0 0.0
        %1444 = vmatprep.subr.mxu0 0.0
        %1445 = vmatpush1.msra.mxu0 0.0
        %1446 = vmatprep.subr.mxu0 0.0
        %1447 = vmatpush1.msra.mxu0 0.0
        %1448 = vmatprep.subr.mxu0 0.0
        %1449 = vmatpush1.msra.mxu0 0.0
        %1450 = vmatprep.subr.mxu0 0.0
        %1451 = vmatpush1.msra.mxu0 0.0
        %1452 = vmatprep.subr.mxu0 0.0
        %1453 = vmatpush1.msra.mxu0 0.0
        %1454 = vmatprep.subr.mxu0 0.0
        %1455 = vmatpush1.msra.mxu0 0.0
        %1456 = vmatprep.subr.mxu0 0.0
        %1457 = vmatpush1.msra.mxu0 0.0
        %1458 = vmatprep.subr.mxu0 0.0
        %1459 = vmatpush1.msra.mxu0 0.0
        %1460 = vmatprep.subr.mxu0 0.0
        %1461 = vmatpush1.msra.mxu0 0.0
        %1462 = vmatprep.mubr.f32.mxu0 0.0
        %1463 = vmatmul.mubr.f32.gmra.mrb[0].mxu0 %v1393
        %v1464 = vpop.f32.mrb[0].mxu0
        %v1465 = vadd.f32 0.0, %v1464
        %v1466 = vpop.f32.mrb[0].mxu0
        %1467 = vmatprep.mubr.f32.mxu0 0.0
        %1468 = vmatmul.mubr.f32.gmra.mrb[0].mxu0 %v1396
        %v1469 = vpop.f32.mrb[0].mxu0
        %v1470 = vadd.f32 0.0, %v1469
        %v1471 = vpop.f32.mrb[0].mxu0
        %1472 = vdwg.mxu0
        %1475 = vrot.lane.b32.xlu0 %v744, 96
        %v1476 = vpop.permute.xlu0 %1475
        %1477 = vrot.lane.b32.xlu0 %v749, 96
        %v1478 = vpop.permute.xlu0 %1477
        %v1482 = vsel %vm947, %v1382, 0
        %v1485 = vsel %vm947, %v1383, 0
        %1487 = vmatprep.subr.mxu0 0.0
        %1488 = vmatpush1.msra.mxu0 %v1476
        %1489 = vmatprep.subr.mxu0 0.0
        %1490 = vmatpush1.msra.mxu0 %v1478
        %1491 = vmatprep.subr.mxu0 0.0
        %1492 = vmatpush1.msra.mxu0 0.0
        %1493 = vmatprep.subr.mxu0 0.0
        %1494 = vmatpush1.msra.mxu0 0.0
        %1495 = vmatprep.subr.mxu0 0.0
        %1496 = vmatpush1.msra.mxu0 0.0
        %1497 = vmatprep.subr.mxu0 0.0
        %1498 = vmatpush1.msra.mxu0 0.0
        %1499 = vmatprep.subr.mxu0 0.0
        %1500 = vmatpush1.msra.mxu0 0.0
        %1501 = vmatprep.subr.mxu0 0.0
        %1502 = vmatpush1.msra.mxu0 0.0
        %1503 = vmatprep.subr.mxu0 0.0
        %1504 = vmatpush1.msra.mxu0 0.0
        %1505 = vmatprep.subr.mxu0 0.0
        %1506 = vmatpush1.msra.mxu0 0.0
        %1507 = vmatprep.subr.mxu0 0.0
        %1508 = vmatpush1.msra.mxu0 0.0
        %1509 = vmatprep.subr.mxu0 0.0
        %1510 = vmatpush1.msra.mxu0 0.0
        %1511 = vmatprep.subr.mxu0 0.0
        %1512 = vmatpush1.msra.mxu0 0.0
        %1513 = vmatprep.subr.mxu0 0.0
        %1514 = vmatpush1.msra.mxu0 0.0
        %1515 = vmatprep.subr.mxu0 0.0
        %1516 = vmatpush1.msra.mxu0 0.0
        %1517 = vmatprep.subr.mxu0 0.0
        %1518 = vmatpush1.msra.mxu0 0.0
        %1519 = vmatprep.subr.mxu0 0.0
        %1520 = vmatpush1.msra.mxu0 0.0
        %1521 = vmatprep.subr.mxu0 0.0
        %1522 = vmatpush1.msra.mxu0 0.0
        %1523 = vmatprep.subr.mxu0 0.0
        %1524 = vmatpush1.msra.mxu0 0.0
        %1525 = vmatprep.subr.mxu0 0.0
        %1526 = vmatpush1.msra.mxu0 0.0
        %1527 = vmatprep.subr.mxu0 0.0
        %1528 = vmatpush1.msra.mxu0 0.0
        %1529 = vmatprep.subr.mxu0 0.0
        %1530 = vmatpush1.msra.mxu0 0.0
        %1531 = vmatprep.subr.mxu0 0.0
        %1532 = vmatpush1.msra.mxu0 0.0
        %1533 = vmatprep.subr.mxu0 0.0
        %1534 = vmatpush1.msra.mxu0 0.0
        %1535 = vmatprep.subr.mxu0 0.0
        %1536 = vmatpush1.msra.mxu0 0.0
        %1537 = vmatprep.subr.mxu0 0.0
        %1538 = vmatpush1.msra.mxu0 0.0
        %1539 = vmatprep.subr.mxu0 0.0
        %1540 = vmatpush1.msra.mxu0 0.0
        %1541 = vmatprep.subr.mxu0 0.0
        %1542 = vmatpush1.msra.mxu0 0.0
        %1543 = vmatprep.subr.mxu0 0.0
        %1544 = vmatpush1.msra.mxu0 0.0
        %1545 = vmatprep.subr.mxu0 0.0
        %1546 = vmatpush1.msra.mxu0 0.0
        %1547 = vmatprep.subr.mxu0 0.0
        %1548 = vmatpush1.msra.mxu0 0.0
        %1549 = vmatprep.subr.mxu0 0.0
        %1550 = vmatpush1.msra.mxu0 0.0
        %1551 = vmatprep.mubr.f32.mxu0 0.0
        %1552 = vmatmul.mubr.f32.gmra.mrb[0].mxu0 %v1482
        %v1553 = vpop.f32.mrb[0].mxu0
        %v1554 = vadd.f32 0.0, %v1553
        %v1555 = vpop.f32.mrb[0].mxu0
        %1556 = vmatprep.mubr.f32.mxu0 0.0
        %1557 = vmatmul.mubr.f32.gmra.mrb[0].mxu0 %v1485
        %v1558 = vpop.f32.mrb[0].mxu0
        %v1559 = vadd.f32 0.0, %v1558
        %v1560 = vpop.f32.mrb[0].mxu0
        %1561 = vdwg.mxu0
        %v1563 = vsel %vm768, %v1465, 0
        %v1566 = vsel %vm768, %v1470, 0
        %v1569 = vsel %vm768, %v1554, 0
        %v1572 = vsel %vm768, %v1559, 0
        %1574 = vmatprep.subr.mxu0 0.0
        %1575 = vmatpush1.msra.mxu0 %v756
        %1576 = vmatprep.subr.mxu0 0.0
        %1577 = vmatpush1.msra.mxu0 %v757
        %1578 = vmatprep.subr.mxu0 0.0
        %1579 = vmatpush1.msra.mxu0 %v758
        %1580 = vmatprep.subr.mxu0 0.0
        %1581 = vmatpush1.msra.mxu0 %v759
        %1582 = vmatprep.subr.mxu0 0.0
        %1583 = vmatpush1.msra.mxu0 0.0
        %1584 = vmatprep.subr.mxu0 0.0
        %1585 = vmatpush1.msra.mxu0 0.0
        %1586 = vmatprep.subr.mxu0 0.0
        %1587 = vmatpush1.msra.mxu0 0.0
        %1588 = vmatprep.subr.mxu0 0.0
        %1589 = vmatpush1.msra.mxu0 0.0
        %1590 = vmatprep.subr.mxu0 0.0
        %1591 = vmatpush1.msra.mxu0 0.0
        %1592 = vmatprep.subr.mxu0 0.0
        %1593 = vmatpush1.msra.mxu0 0.0
        %1594 = vmatprep.subr.mxu0 0.0
        %1595 = vmatpush1.msra.mxu0 0.0
        %1596 = vmatprep.subr.mxu0 0.0
        %1597 = vmatpush1.msra.mxu0 0.0
        %1598 = vmatprep.subr.mxu0 0.0
        %1599 = vmatpush1.msra.mxu0 0.0
        %1600 = vmatprep.subr.mxu0 0.0
        %1601 = vmatpush1.msra.mxu0 0.0
        %1602 = vmatprep.subr.mxu0 0.0
        %1603 = vmatpush1.msra.mxu0 0.0
        %1604 = vmatprep.subr.mxu0 0.0
        %1605 = vmatpush1.msra.mxu0 0.0
        %1606 = vmatprep.subr.mxu0 0.0
        %1607 = vmatpush1.msra.mxu0 0.0
        %1608 = vmatprep.subr.mxu0 0.0
        %1609 = vmatpush1.msra.mxu0 0.0
        %1610 = vmatprep.subr.mxu0 0.0
        %1611 = vmatpush1.msra.mxu0 0.0
        %1612 = vmatprep.subr.mxu0 0.0
        %1613 = vmatpush1.msra.mxu0 0.0
        %1614 = vmatprep.subr.mxu0 0.0
        %1615 = vmatpush1.msra.mxu0 0.0
        %1616 = vmatprep.subr.mxu0 0.0
        %1617 = vmatpush1.msra.mxu0 0.0
        %1618 = vmatprep.subr.mxu0 0.0
        %1619 = vmatpush1.msra.mxu0 0.0
        %1620 = vmatprep.subr.mxu0 0.0
        %1621 = vmatpush1.msra.mxu0 0.0
        %1622 = vmatprep.subr.mxu0 0.0
        %1623 = vmatpush1.msra.mxu0 0.0
        %1624 = vmatprep.subr.mxu0 0.0
        %1625 = vmatpush1.msra.mxu0 0.0
        %1626 = vmatprep.subr.mxu0 0.0
        %1627 = vmatpush1.msra.mxu0 0.0
        %1628 = vmatprep.subr.mxu0 0.0
        %1629 = vmatpush1.msra.mxu0 0.0
        %1630 = vmatprep.subr.mxu0 0.0
        %1631 = vmatpush1.msra.mxu0 0.0
        %1632 = vmatprep.subr.mxu0 0.0
        %1633 = vmatpush1.msra.mxu0 0.0
        %1634 = vmatprep.subr.mxu0 0.0
        %1635 = vmatpush1.msra.mxu0 0.0
        %1636 = vmatprep.subr.mxu0 0.0
        %1637 = vmatpush1.msra.mxu0 0.0
        %1638 = vmatprep.mubr.f32.mxu0 0.0
        %1639 = vmatmul.mubr.f32.gmra.mrb[0].mxu0 %v1563
        %v1640 = vpop.f32.mrb[0].mxu0
        %v1641 = vadd.f32 0.0, %v1640
        %v1642 = vpop.f32.mrb[0].mxu0
        %1643 = vmatprep.mubr.f32.mxu0 0.0
        %1644 = vmatmul.mubr.f32.gmra.mrb[0].mxu0 %v1566
        %v1645 = vpop.f32.mrb[0].mxu0
        %v1646 = vadd.f32 0.0, %v1645
        %v1647 = vpop.f32.mrb[0].mxu0
        %1648 = vmatprep.mubr.f32.mxu0 0.0
        %1649 = vmatmul.mubr.f32.gmra.mrb[0].mxu0 %v1569
        %v1650 = vpop.f32.mrb[0].mxu0
        %v1651 = vadd.f32 0.0, %v1650
        %v1652 = vpop.f32.mrb[0].mxu0
        %1653 = vmatprep.mubr.f32.mxu0 0.0
        %1654 = vmatmul.mubr.f32.gmra.mrb[0].mxu0 %v1572
        %v1655 = vpop.f32.mrb[0].mxu0
        %v1656 = vadd.f32 0.0, %v1655
        %v1657 = vpop.f32.mrb[0].mxu0
        %1658 = vdwg.mxu0
        %v1660 = vsel %vm768, %v1065, 0
        %v1663 = vsel %vm768, %v1070, 0
        %v1666 = vsel %vm768, %v1146, 0
        %v1669 = vsel %vm768, %v1151, 0
        %1671 = vmatprep.subr.mxu0 0.0
        %1672 = vmatpush1.msra.mxu0 %v752
        %1673 = vmatprep.subr.mxu0 0.0
        %1674 = vmatpush1.msra.mxu0 %v753
        %1675 = vmatprep.subr.mxu0 0.0
        %1676 = vmatpush1.msra.mxu0 %v754
        %1677 = vmatprep.subr.mxu0 0.0
        %1678 = vmatpush1.msra.mxu0 %v755
        %1679 = vmatprep.subr.mxu0 0.0
        %1680 = vmatpush1.msra.mxu0 0.0
        %1681 = vmatprep.subr.mxu0 0.0
        %1682 = vmatpush1.msra.mxu0 0.0
        %1683 = vmatprep.subr.mxu0 0.0
        %1684 = vmatpush1.msra.mxu0 0.0
        %1685 = vmatprep.subr.mxu0 0.0
        %1686 = vmatpush1.msra.mxu0 0.0
        %1687 = vmatprep.subr.mxu0 0.0
        %1688 = vmatpush1.msra.mxu0 0.0
        %1689 = vmatprep.subr.mxu0 0.0
        %1690 = vmatpush1.msra.mxu0 0.0
        %1691 = vmatprep.subr.mxu0 0.0
        %1692 = vmatpush1.msra.mxu0 0.0
        %1693 = vmatprep.subr.mxu0 0.0
        %1694 = vmatpush1.msra.mxu0 0.0
        %1695 = vmatprep.subr.mxu0 0.0
        %1696 = vmatpush1.msra.mxu0 0.0
        %1697 = vmatprep.subr.mxu0 0.0
        %1698 = vmatpush1.msra.mxu0 0.0
        %1699 = vmatprep.subr.mxu0 0.0
        %1700 = vmatpush1.msra.mxu0 0.0
        %1701 = vmatprep.subr.mxu0 0.0
        %1702 = vmatpush1.msra.mxu0 0.0
        %1703 = vmatprep.subr.mxu0 0.0
        %1704 = vmatpush1.msra.mxu0 0.0
        %1705 = vmatprep.subr.mxu0 0.0
        %1706 = vmatpush1.msra.mxu0 0.0
        %1707 = vmatprep.subr.mxu0 0.0
        %1708 = vmatpush1.msra.mxu0 0.0
        %1709 = vmatprep.subr.mxu0 0.0
        %1710 = vmatpush1.msra.mxu0 0.0
        %1711 = vmatprep.subr.mxu0 0.0
        %1712 = vmatpush1.msra.mxu0 0.0
        %1713 = vmatprep.subr.mxu0 0.0
        %1714 = vmatpush1.msra.mxu0 0.0
        %1715 = vmatprep.subr.mxu0 0.0
        %1716 = vmatpush1.msra.mxu0 0.0
        %1717 = vmatprep.subr.mxu0 0.0
        %1718 = vmatpush1.msra.mxu0 0.0
        %1719 = vmatprep.subr.mxu0 0.0
        %1720 = vmatpush1.msra.mxu0 0.0
        %1721 = vmatprep.subr.mxu0 0.0
        %1722 = vmatpush1.msra.mxu0 0.0
        %1723 = vmatprep.subr.mxu0 0.0
        %1724 = vmatpush1.msra.mxu0 0.0
        %1725 = vmatprep.subr.mxu0 0.0
        %1726 = vmatpush1.msra.mxu0 0.0
        %1727 = vmatprep.subr.mxu0 0.0
        %1728 = vmatpush1.msra.mxu0 0.0
        %1729 = vmatprep.subr.mxu0 0.0
        %1730 = vmatpush1.msra.mxu0 0.0
        %1731 = vmatprep.subr.mxu0 0.0
        %1732 = vmatpush1.msra.mxu0 0.0
        %1733 = vmatprep.subr.mxu0 0.0
        %1734 = vmatpush1.msra.mxu0 0.0
        %1735 = vmatprep.mubr.f32.mxu0 0.0
        %1736 = vmatmul.mubr.f32.gmra.mrb[0].mxu0 %v1660
        %v1737 = vpop.f32.mrb[0].mxu0
        %v1738 = vadd.f32 %v1641, %v1737
        %v1739 = vpop.f32.mrb[0].mxu0
        %1740 = vmatprep.mubr.f32.mxu0 0.0
        %1741 = vmatmul.mubr.f32.gmra.mrb[0].mxu0 %v1663
        %v1742 = vpop.f32.mrb[0].mxu0
        %v1743 = vadd.f32 %v1646, %v1742
        %v1744 = vpop.f32.mrb[0].mxu0
        %1745 = vmatprep.mubr.f32.mxu0 0.0
        %1746 = vmatmul.mubr.f32.gmra.mrb[0].mxu0 %v1666
        %v1747 = vpop.f32.mrb[0].mxu0
        %v1748 = vadd.f32 %v1651, %v1747
        %v1749 = vpop.f32.mrb[0].mxu0
        %1750 = vmatprep.mubr.f32.mxu0 0.0
        %1751 = vmatmul.mubr.f32.gmra.mrb[0].mxu0 %v1669
        %v1752 = vpop.f32.mrb[0].mxu0
        %v1753 = vadd.f32 %v1656, %v1752
        %v1754 = vpop.f32.mrb[0].mxu0
        %1755 = vdwg.mxu0
        %1756 = vrot.lane.b32.xlu0 %v645, 64
        %v1757 = vpop.permute.xlu0 %1756
        %1758 = vrot.lane.b32.xlu0 %v651, 64
        %v1759 = vpop.permute.xlu0 %1758
        %1760 = vrot.lane.b32.xlu0 %v647, 64
        %v1761 = vpop.permute.xlu0 %1760
        %1762 = vrot.lane.b32.xlu0 %v653, 64
        %v1763 = vpop.permute.xlu0 %1762
        %v1764 = vsel %vm768, %v1757, 0
        %v1766 = vsel %vm768, %v1759, 0
        %v1768 = vsel %vm768, %v1761, 0
        %v1770 = vsel %vm768, %v1763, 0
        %1772 = vmatprep.subr.mxu0 0.0
        %1773 = vmatpush1.xpose.msra.mxu0 %v1768
        %1774 = vmatprep.subr.mxu0 0.0
        %1775 = vmatpush1.xpose.msra.mxu0 %v1770
        %1776 = vmatprep.subr.mxu0 0.0
        %1777 = vmatpush1.xpose.msra.mxu0 0.0
        %1778 = vmatprep.subr.mxu0 0.0
        %1779 = vmatpush1.xpose.msra.mxu0 0.0
        %1780 = vmatprep.subr.mxu0 0.0
        %1781 = vmatpush1.xpose.msra.mxu0 0.0
        %1782 = vmatprep.subr.mxu0 0.0
        %1783 = vmatpush1.xpose.msra.mxu0 0.0
        %1784 = vmatprep.subr.mxu0 0.0
        %1785 = vmatpush1.xpose.msra.mxu0 0.0
        %1786 = vmatprep.subr.mxu0 0.0
        %1787 = vmatpush1.xpose.msra.mxu0 0.0
        %1788 = vmatprep.subr.mxu0 0.0
        %1789 = vmatpush1.xpose.msra.mxu0 0.0
        %1790 = vmatprep.subr.mxu0 0.0
        %1791 = vmatpush1.xpose.msra.mxu0 0.0
        %1792 = vmatprep.subr.mxu0 0.0
        %1793 = vmatpush1.xpose.msra.mxu0 0.0
        %1794 = vmatprep.subr.mxu0 0.0
        %1795 = vmatpush1.xpose.msra.mxu0 0.0
        %1796 = vmatprep.subr.mxu0 0.0
        %1797 = vmatpush1.xpose.msra.mxu0 0.0
        %1798 = vmatprep.subr.mxu0 0.0
        %1799 = vmatpush1.xpose.msra.mxu0 0.0
        %1800 = vmatprep.subr.mxu0 0.0
        %1801 = vmatpush1.xpose.msra.mxu0 0.0
        %1802 = vmatprep.subr.mxu0 0.0
        %1803 = vmatpush1.xpose.msra.mxu0 0.0
        %1804 = vmatprep.subr.mxu0 0.0
        %1805 = vmatpush1.xpose.msra.mxu0 0.0
        %1806 = vmatprep.subr.mxu0 0.0
        %1807 = vmatpush1.xpose.msra.mxu0 0.0
        %1808 = vmatprep.subr.mxu0 0.0
        %1809 = vmatpush1.xpose.msra.mxu0 0.0
        %1810 = vmatprep.subr.mxu0 0.0
        %1811 = vmatpush1.xpose.msra.mxu0 0.0
        %1812 = vmatprep.subr.mxu0 0.0
        %1813 = vmatpush1.xpose.msra.mxu0 0.0
        %1814 = vmatprep.subr.mxu0 0.0
        %1815 = vmatpush1.xpose.msra.mxu0 0.0
        %1816 = vmatprep.subr.mxu0 0.0
        %1817 = vmatpush1.xpose.msra.mxu0 0.0
        %1818 = vmatprep.subr.mxu0 0.0
        %1819 = vmatpush1.xpose.msra.mxu0 0.0
        %1820 = vmatprep.subr.mxu0 0.0
        %1821 = vmatpush1.xpose.msra.mxu0 0.0
        %1822 = vmatprep.subr.mxu0 0.0
        %1823 = vmatpush1.xpose.msra.mxu0 0.0
        %1824 = vmatprep.subr.mxu0 0.0
        %1825 = vmatpush1.xpose.msra.mxu0 0.0
        %1826 = vmatprep.subr.mxu0 0.0
        %1827 = vmatpush1.xpose.msra.mxu0 0.0
        %1828 = vmatprep.subr.mxu0 0.0
        %1829 = vmatpush1.xpose.msra.mxu0 0.0
        %1830 = vmatprep.subr.mxu0 0.0
        %1831 = vmatpush1.xpose.msra.mxu0 0.0
        %1832 = vmatprep.subr.mxu0 0.0
        %1833 = vmatpush1.xpose.msra.mxu0 0.0
        %1834 = vmatprep.subr.mxu0 0.0
        %1835 = vmatpush1.xpose.msra.mxu0 0.0
        %1836 = vmatprep.mubr.f32.mxu0 0.0
        %1837 = vmatmul.mubr.f32.gmra.mrb[0].mxu0 %v1764
        %v1838 = vpop.f32.mrb[0].mxu0
        %v1839 = vadd.f32 0.0, %v1838
        %v1840 = vpop.f32.mrb[0].mxu0
        %1841 = vmatprep.mubr.f32.mxu0 0.0
        %1842 = vmatmul.mubr.f32.gmra.mrb[0].mxu0 %v1766
        %v1843 = vpop.f32.mrb[0].mxu0
        %v1844 = vadd.f32 0.0, %v1843
        %v1845 = vpop.f32.mrb[0].mxu0
        %1846 = vdwg.mxu0
        %1847 = vrot.lane.b32.xlu0 %v657, 64
        %v1848 = vpop.permute.xlu0 %1847
        %1849 = vrot.lane.b32.xlu0 %v663, 64
        %v1850 = vpop.permute.xlu0 %1849
        %1851 = vrot.lane.b32.xlu0 %v659, 64
        %v1852 = vpop.permute.xlu0 %1851
        %1853 = vrot.lane.b32.xlu0 %v665, 64
        %v1854 = vpop.permute.xlu0 %1853
        %v1855 = vsel %vm768, %v1848, 0
        %v1857 = vsel %vm768, %v1850, 0
        %v1859 = vsel %vm768, %v1852, 0
        %v1861 = vsel %vm768, %v1854, 0
        %1863 = vmatprep.subr.mxu0 0.0
        %1864 = vmatpush1.xpose.msra.mxu0 %v1859
        %1865 = vmatprep.subr.mxu0 0.0
        %1866 = vmatpush1.xpose.msra.mxu0 %v1861
        %1867 = vmatprep.subr.mxu0 0.0
        %1868 = vmatpush1.xpose.msra.mxu0 0.0
        %1869 = vmatprep.subr.mxu0 0.0
        %1870 = vmatpush1.xpose.msra.mxu0 0.0
        %1871 = vmatprep.subr.mxu0 0.0
        %1872 = vmatpush1.xpose.msra.mxu0 0.0
        %1873 = vmatprep.subr.mxu0 0.0
        %1874 = vmatpush1.xpose.msra.mxu0 0.0
        %1875 = vmatprep.subr.mxu0 0.0
        %1876 = vmatpush1.xpose.msra.mxu0 0.0
        %1877 = vmatprep.subr.mxu0 0.0
        %1878 = vmatpush1.xpose.msra.mxu0 0.0
        %1879 = vmatprep.subr.mxu0 0.0
        %1880 = vmatpush1.xpose.msra.mxu0 0.0
        %1881 = vmatprep.subr.mxu0 0.0
        %1882 = vmatpush1.xpose.msra.mxu0 0.0
        %1883 = vmatprep.subr.mxu0 0.0
        %1884 = vmatpush1.xpose.msra.mxu0 0.0
        %1885 = vmatprep.subr.mxu0 0.0
        %1886 = vmatpush1.xpose.msra.mxu0 0.0
        %1887 = vmatprep.subr.mxu0 0.0
        %1888 = vmatpush1.xpose.msra.mxu0 0.0
        %1889 = vmatprep.subr.mxu0 0.0
        %1890 = vmatpush1.xpose.msra.mxu0 0.0
        %1891 = vmatprep.subr.mxu0 0.0
        %1892 = vmatpush1.xpose.msra.mxu0 0.0
        %1893 = vmatprep.subr.mxu0 0.0
        %1894 = vmatpush1.xpose.msra.mxu0 0.0
        %1895 = vmatprep.subr.mxu0 0.0
        %1896 = vmatpush1.xpose.msra.mxu0 0.0
        %1897 = vmatprep.subr.mxu0 0.0
        %1898 = vmatpush1.xpose.msra.mxu0 0.0
        %1899 = vmatprep.subr.mxu0 0.0
        %1900 = vmatpush1.xpose.msra.mxu0 0.0
        %1901 = vmatprep.subr.mxu0 0.0
        %1902 = vmatpush1.xpose.msra.mxu0 0.0
        %1903 = vmatprep.subr.mxu0 0.0
        %1904 = vmatpush1.xpose.msra.mxu0 0.0
        %1905 = vmatprep.subr.mxu0 0.0
        %1906 = vmatpush1.xpose.msra.mxu0 0.0
        %1907 = vmatprep.subr.mxu0 0.0
        %1908 = vmatpush1.xpose.msra.mxu0 0.0
        %1909 = vmatprep.subr.mxu0 0.0
        %1910 = vmatpush1.xpose.msra.mxu0 0.0
        %1911 = vmatprep.subr.mxu0 0.0
        %1912 = vmatpush1.xpose.msra.mxu0 0.0
        %1913 = vmatprep.subr.mxu0 0.0
        %1914 = vmatpush1.xpose.msra.mxu0 0.0
        %1915 = vmatprep.subr.mxu0 0.0
        %1916 = vmatpush1.xpose.msra.mxu0 0.0
        %1917 = vmatprep.subr.mxu0 0.0
        %1918 = vmatpush1.xpose.msra.mxu0 0.0
        %1919 = vmatprep.subr.mxu0 0.0
        %1920 = vmatpush1.xpose.msra.mxu0 0.0
        %1921 = vmatprep.subr.mxu0 0.0
        %1922 = vmatpush1.xpose.msra.mxu0 0.0
        %1923 = vmatprep.subr.mxu0 0.0
        %1924 = vmatpush1.xpose.msra.mxu0 0.0
        %1925 = vmatprep.subr.mxu0 0.0
        %1926 = vmatpush1.xpose.msra.mxu0 0.0
        %1927 = vmatprep.mubr.f32.mxu0 0.0
        %1928 = vmatmul.mubr.f32.gmra.mrb[0].mxu0 %v1855
        %v1929 = vpop.f32.mrb[0].mxu0
        %v1930 = vadd.f32 0.0, %v1929
        %v1931 = vpop.f32.mrb[0].mxu0
        %1932 = vmatprep.mubr.f32.mxu0 0.0
        %1933 = vmatmul.mubr.f32.gmra.mrb[0].mxu0 %v1857
        %v1934 = vpop.f32.mrb[0].mxu0
        %v1935 = vadd.f32 0.0, %v1934
        %v1936 = vpop.f32.mrb[0].mxu0
        %1937 = vdwg.mxu0
        %v1938 = vmul.f32 %v1839, 0.17677669
        %v1939 = vmul.f32 %v1844, 0.17677669
        %v1940 = vmul.f32 %v1930, 0.17677669
        %v1941 = vmul.f32 %v1935, 0.17677669
        %v1942 = vsel %vm947, %v1938, -inf
        %1943 = vmax.xlane.f32.xlu0 %v1942
        %v1944 = vpop.xlane.xlu0 %1943
        %v1945 = vsel %vm947, %v1939, -inf
        %1946 = vmax.xlane.f32.xlu0 %v1945
        %v1947 = vpop.xlane.xlu0 %1946
        %v1948 = vsel %vm947, %v1940, -inf
        %1949 = vmax.xlane.f32.xlu0 %v1948
        %v1950 = vpop.xlane.xlu0 %1949
        %v1951 = vsel %vm947, %v1941, -inf
        %1952 = vmax.xlane.f32.xlu0 %v1951
        %v1953 = vpop.xlane.xlu0 %1952
        %v1954 = vsub.f32 %v1938, %v1944
        %v1955 = vsub.f32 %v1939, %v1947
        %v1956 = vsub.f32 %v1940, %v1950
        %v1957 = vsub.f32 %v1941, %v1953
        %v1958 = vmul.f32 %v1954, 1.442695
        %v1959 = vpow.pop %v1958
        %v1960 = vmul.f32 %v1955, 1.442695
        %v1961 = vpow.pop %v1960
        %v1962 = vmul.f32 %v1956, 1.442695
        %v1963 = vpow.pop %v1962
        %v1964 = vmul.f32 %v1957, 1.442695
        %v1965 = vpow.pop %v1964
        %v1966 = vsel %vm947, %v1959, 0.0
        %1967 = vadd.xlane.f32.xlu0 %v1966
        %v1968 = vpop.xlane.xlu0 %1967
        %v1969 = vsel %vm947, %v1961, 0.0
        %1970 = vadd.xlane.f32.xlu0 %v1969
        %v1971 = vpop.xlane.xlu0 %1970
        %v1972 = vsel %vm947, %v1963, 0.0
        %1973 = vadd.xlane.f32.xlu0 %v1972
        %v1974 = vpop.xlane.xlu0 %1973
        %v1975 = vsel %vm947, %v1965, 0.0
        %1976 = vadd.xlane.f32.xlu0 %v1975
        %v1977 = vpop.xlane.xlu0 %1976
        %v1978 = vrcp.pop %v1968
        %v1979 = vrcp.pop %v1971
        %v1980 = vrcp.pop %v1974
        %v1981 = vrcp.pop %v1977
        %v1982 = vmul.f32 %v1959, %v1978
        %v1983 = vmul.f32 %v1961, %v1979
        %v1984 = vmul.f32 %v1963, %v1980
        %v1985 = vmul.f32 %v1965, %v1981
        %1986 = vrot.lane.b32.xlu0 %v734, 64
        %v1987 = vpop.permute.xlu0 %1986
        %1988 = vrot.lane.b32.xlu0 %v739, 64
        %v1989 = vpop.permute.xlu0 %1988
        %v1993 = vsel %vm947, %v1982, 0
        %v1996 = vsel %vm947, %v1983, 0
        %1998 = vmatprep.subr.mxu0 0.0
        %1999 = vmatpush1.msra.mxu0 %v1987
        %2000 = vmatprep.subr.mxu0 0.0
        %2001 = vmatpush1.msra.mxu0 %v1989
        %2002 = vmatprep.subr.mxu0 0.0
        %2003 = vmatpush1.msra.mxu0 0.0
        %2004 = vmatprep.subr.mxu0 0.0
        %2005 = vmatpush1.msra.mxu0 0.0
        %2006 = vmatprep.subr.mxu0 0.0
        %2007 = vmatpush1.msra.mxu0 0.0
        %2008 = vmatprep.subr.mxu0 0.0
        %2009 = vmatpush1.msra.mxu0 0.0
        %2010 = vmatprep.subr.mxu0 0.0
        %2011 = vmatpush1.msra.mxu0 0.0
        %2012 = vmatprep.subr.mxu0 0.0
        %2013 = vmatpush1.msra.mxu0 0.0
        %2014 = vmatprep.subr.mxu0 0.0
        %2015 = vmatpush1.msra.mxu0 0.0
        %2016 = vmatprep.subr.mxu0 0.0
        %2017 = vmatpush1.msra.mxu0 0.0
        %2018 = vmatprep.subr.mxu0 0.0
        %2019 = vmatpush1.msra.mxu0 0.0
        %2020 = vmatprep.subr.mxu0 0.0
        %2021 = vmatpush1.msra.mxu0 0.0
        %2022 = vmatprep.subr.mxu0 0.0
        %2023 = vmatpush1.msra.mxu0 0.0
        %2024 = vmatprep.subr.mxu0 0.0
        %2025 = vmatpush1.msra.mxu0 0.0
        %2026 = vmatprep.subr.mxu0 0.0
        %2027 = vmatpush1.msra.mxu0 0.0
        %2028 = vmatprep.subr.mxu0 0.0
        %2029 = vmatpush1.msra.mxu0 0.0
        %2030 = vmatprep.subr.mxu0 0.0
        %2031 = vmatpush1.msra.mxu0 0.0
        %2032 = vmatprep.subr.mxu0 0.0
        %2033 = vmatpush1.msra.mxu0 0.0
        %2034 = vmatprep.subr.mxu0 0.0
        %2035 = vmatpush1.msra.mxu0 0.0
        %2036 = vmatprep.subr.mxu0 0.0
        %2037 = vmatpush1.msra.mxu0 0.0
        %2038 = vmatprep.subr.mxu0 0.0
        %2039 = vmatpush1.msra.mxu0 0.0
        %2040 = vmatprep.subr.mxu0 0.0
        %2041 = vmatpush1.msra.mxu0 0.0
        %2042 = vmatprep.subr.mxu0 0.0
        %2043 = vmatpush1.msra.mxu0 0.0
        %2044 = vmatprep.subr.mxu0 0.0
        %2045 = vmatpush1.msra.mxu0 0.0
        %2046 = vmatprep.subr.mxu0 0.0
        %2047 = vmatpush1.msra.mxu0 0.0
        %2048 = vmatprep.subr.mxu0 0.0
        %2049 = vmatpush1.msra.mxu0 0.0
        %2050 = vmatprep.subr.mxu0 0.0
        %2051 = vmatpush1.msra.mxu0 0.0
        %2052 = vmatprep.subr.mxu0 0.0
        %2053 = vmatpush1.msra.mxu0 0.0
        %2054 = vmatprep.subr.mxu0 0.0
        %2055 = vmatpush1.msra.mxu0 0.0
        %2056 = vmatprep.subr.mxu0 0.0
        %2057 = vmatpush1.msra.mxu0 0.0
        %2058 = vmatprep.subr.mxu0 0.0
        %2059 = vmatpush1.msra.mxu0 0.0
        %2060 = vmatprep.subr.mxu0 0.0
        %2061 = vmatpush1.msra.mxu0 0.0
        %2062 = vmatprep.mubr.f32.mxu0 0.0
        %2063 = vmatmul.mubr.f32.gmra.mrb[0].mxu0 %v1993
        %v2064 = vpop.f32.mrb[0].mxu0
        %v2065 = vadd.f32 0.0, %v2064
        %v2066 = vpop.f32.mrb[0].mxu0
        %2067 = vmatprep.mubr.f32.mxu0 0.0
        %2068 = vmatmul.mubr.f32.gmra.mrb[0].mxu0 %v1996
        %v2069 = vpop.f32.mrb[0].mxu0
        %v2070 = vadd.f32 0.0, %v2069
        %v2071 = vpop.f32.mrb[0].mxu0
        %2072 = vdwg.mxu0
        %2073 = vrot.lane.b32.xlu0 %v744, 64
        %v2074 = vpop.permute.xlu0 %2073
        %2075 = vrot.lane.b32.xlu0 %v749, 64
        %v2076 = vpop.permute.xlu0 %2075
        %v2080 = vsel %vm947, %v1984, 0
        %v2083 = vsel %vm947, %v1985, 0
        %2085 = vmatprep.subr.mxu0 0.0
        %2086 = vmatpush1.msra.mxu0 %v2074
        %2087 = vmatprep.subr.mxu0 0.0
        %2088 = vmatpush1.msra.mxu0 %v2076
        %2089 = vmatprep.subr.mxu0 0.0
        %2090 = vmatpush1.msra.mxu0 0.0
        %2091 = vmatprep.subr.mxu0 0.0
        %2092 = vmatpush1.msra.mxu0 0.0
        %2093 = vmatprep.subr.mxu0 0.0
        %2094 = vmatpush1.msra.mxu0 0.0
        %2095 = vmatprep.subr.mxu0 0.0
        %2096 = vmatpush1.msra.mxu0 0.0
        %2097 = vmatprep.subr.mxu0 0.0
        %2098 = vmatpush1.msra.mxu0 0.0
        %2099 = vmatprep.subr.mxu0 0.0
        %2100 = vmatpush1.msra.mxu0 0.0
        %2101 = vmatprep.subr.mxu0 0.0
        %2102 = vmatpush1.msra.mxu0 0.0
        %2103 = vmatprep.subr.mxu0 0.0
        %2104 = vmatpush1.msra.mxu0 0.0
        %2105 = vmatprep.subr.mxu0 0.0
        %2106 = vmatpush1.msra.mxu0 0.0
        %2107 = vmatprep.subr.mxu0 0.0
        %2108 = vmatpush1.msra.mxu0 0.0
        %2109 = vmatprep.subr.mxu0 0.0
        %2110 = vmatpush1.msra.mxu0 0.0
        %2111 = vmatprep.subr.mxu0 0.0
        %2112 = vmatpush1.msra.mxu0 0.0
        %2113 = vmatprep.subr.mxu0 0.0
        %2114 = vmatpush1.msra.mxu0 0.0
        %2115 = vmatprep.subr.mxu0 0.0
        %2116 = vmatpush1.msra.mxu0 0.0
        %2117 = vmatprep.subr.mxu0 0.0
        %2118 = vmatpush1.msra.mxu0 0.0
        %2119 = vmatprep.subr.mxu0 0.0
        %2120 = vmatpush1.msra.mxu0 0.0
        %2121 = vmatprep.subr.mxu0 0.0
        %2122 = vmatpush1.msra.mxu0 0.0
        %2123 = vmatprep.subr.mxu0 0.0
        %2124 = vmatpush1.msra.mxu0 0.0
        %2125 = vmatprep.subr.mxu0 0.0
        %2126 = vmatpush1.msra.mxu0 0.0
        %2127 = vmatprep.subr.mxu0 0.0
        %2128 = vmatpush1.msra.mxu0 0.0
        %2129 = vmatprep.subr.mxu0 0.0
        %2130 = vmatpush1.msra.mxu0 0.0
        %2131 = vmatprep.subr.mxu0 0.0
        %2132 = vmatpush1.msra.mxu0 0.0
        %2133 = vmatprep.subr.mxu0 0.0
        %2134 = vmatpush1.msra.mxu0 0.0
        %2135 = vmatprep.subr.mxu0 0.0
        %2136 = vmatpush1.msra.mxu0 0.0
        %2137 = vmatprep.subr.mxu0 0.0
        %2138 = vmatpush1.msra.mxu0 0.0
        %2139 = vmatprep.subr.mxu0 0.0
        %2140 = vmatpush1.msra.mxu0 0.0
        %2141 = vmatprep.subr.mxu0 0.0
        %2142 = vmatpush1.msra.mxu0 0.0
        %2143 = vmatprep.subr.mxu0 0.0
        %2144 = vmatpush1.msra.mxu0 0.0
        %2145 = vmatprep.subr.mxu0 0.0
        %2146 = vmatpush1.msra.mxu0 0.0
        %2147 = vmatprep.subr.mxu0 0.0
        %2148 = vmatpush1.msra.mxu0 0.0
        %2149 = vmatprep.mubr.f32.mxu0 0.0
        %2150 = vmatmul.mubr.f32.gmra.mrb[0].mxu0 %v2080
        %v2151 = vpop.f32.mrb[0].mxu0
        %v2152 = vadd.f32 0.0, %v2151
        %v2153 = vpop.f32.mrb[0].mxu0
        %2154 = vmatprep.mubr.f32.mxu0 0.0
        %2155 = vmatmul.mubr.f32.gmra.mrb[0].mxu0 %v2083
        %v2156 = vpop.f32.mrb[0].mxu0
        %v2157 = vadd.f32 0.0, %v2156
        %v2158 = vpop.f32.mrb[0].mxu0
        %2159 = vdwg.mxu0
        %v2161 = vsel %vm768, %v2065, 0
        %v2164 = vsel %vm768, %v2070, 0
        %v2167 = vsel %vm768, %v2152, 0
        %v2170 = vsel %vm768, %v2157, 0
        %2172 = vmatprep.subr.mxu0 0.0
        %2173 = vmatpush1.msra.mxu0 %v760
        %2174 = vmatprep.subr.mxu0 0.0
        %2175 = vmatpush1.msra.mxu0 %v761
        %2176 = vmatprep.subr.mxu0 0.0
        %2177 = vmatpush1.msra.mxu0 %v762
        %2178 = vmatprep.subr.mxu0 0.0
        %2179 = vmatpush1.msra.mxu0 %v763
        %2180 = vmatprep.subr.mxu0 0.0
        %2181 = vmatpush1.msra.mxu0 0.0
        %2182 = vmatprep.subr.mxu0 0.0
        %2183 = vmatpush1.msra.mxu0 0.0
        %2184 = vmatprep.subr.mxu0 0.0
        %2185 = vmatpush1.msra.mxu0 0.0
        %2186 = vmatprep.subr.mxu0 0.0
        %2187 = vmatpush1.msra.mxu0 0.0
        %2188 = vmatprep.subr.mxu0 0.0
        %2189 = vmatpush1.msra.mxu0 0.0
        %2190 = vmatprep.subr.mxu0 0.0
        %2191 = vmatpush1.msra.mxu0 0.0
        %2192 = vmatprep.subr.mxu0 0.0
        %2193 = vmatpush1.msra.mxu0 0.0
        %2194 = vmatprep.subr.mxu0 0.0
        %2195 = vmatpush1.msra.mxu0 0.0
        %2196 = vmatprep.subr.mxu0 0.0
        %2197 = vmatpush1.msra.mxu0 0.0
        %2198 = vmatprep.subr.mxu0 0.0
        %2199 = vmatpush1.msra.mxu0 0.0
        %2200 = vmatprep.subr.mxu0 0.0
        %2201 = vmatpush1.msra.mxu0 0.0
        %2202 = vmatprep.subr.mxu0 0.0
        %2203 = vmatpush1.msra.mxu0 0.0
        %2204 = vmatprep.subr.mxu0 0.0
        %2205 = vmatpush1.msra.mxu0 0.0
        %2206 = vmatprep.subr.mxu0 0.0
        %2207 = vmatpush1.msra.mxu0 0.0
        %2208 = vmatprep.subr.mxu0 0.0
        %2209 = vmatpush1.msra.mxu0 0.0
        %2210 = vmatprep.subr.mxu0 0.0
        %2211 = vmatpush1.msra.mxu0 0.0
        %2212 = vmatprep.subr.mxu0 0.0
        %2213 = vmatpush1.msra.mxu0 0.0
        %2214 = vmatprep.subr.mxu0 0.0
        %2215 = vmatpush1.msra.mxu0 0.0
        %2216 = vmatprep.subr.mxu0 0.0
        %2217 = vmatpush1.msra.mxu0 0.0
        %2218 = vmatprep.subr.mxu0 0.0
        %2219 = vmatpush1.msra.mxu0 0.0
        %2220 = vmatprep.subr.mxu0 0.0
        %2221 = vmatpush1.msra.mxu0 0.0
        %2222 = vmatprep.subr.mxu0 0.0
        %2223 = vmatpush1.msra.mxu0 0.0
        %2224 = vmatprep.subr.mxu0 0.0
        %2225 = vmatpush1.msra.mxu0 0.0
        %2226 = vmatprep.subr.mxu0 0.0
        %2227 = vmatpush1.msra.mxu0 0.0
        %2228 = vmatprep.subr.mxu0 0.0
        %2229 = vmatpush1.msra.mxu0 0.0
        %2230 = vmatprep.subr.mxu0 0.0
        %2231 = vmatpush1.msra.mxu0 0.0
        %2232 = vmatprep.subr.mxu0 0.0
        %2233 = vmatpush1.msra.mxu0 0.0
        %2234 = vmatprep.subr.mxu0 0.0
        %2235 = vmatpush1.msra.mxu0 0.0
        %2236 = vmatprep.mubr.f32.mxu0 0.0
        %2237 = vmatmul.mubr.f32.gmra.mrb[0].mxu0 %v2161
        %v2238 = vpop.f32.mrb[0].mxu0
        %v2239 = vadd.f32 0.0, %v2238
        %v2240 = vpop.f32.mrb[0].mxu0
        %2241 = vmatprep.mubr.f32.mxu0 0.0
        %2242 = vmatmul.mubr.f32.gmra.mrb[0].mxu0 %v2164
        %v2243 = vpop.f32.mrb[0].mxu0
        %v2244 = vadd.f32 0.0, %v2243
        %v2245 = vpop.f32.mrb[0].mxu0
        %2246 = vmatprep.mubr.f32.mxu0 0.0
        %2247 = vmatmul.mubr.f32.gmra.mrb[0].mxu0 %v2167
        %v2248 = vpop.f32.mrb[0].mxu0
        %v2249 = vadd.f32 0.0, %v2248
        %v2250 = vpop.f32.mrb[0].mxu0
        %2251 = vmatprep.mubr.f32.mxu0 0.0
        %2252 = vmatmul.mubr.f32.gmra.mrb[0].mxu0 %v2170
        %v2253 = vpop.f32.mrb[0].mxu0
        %v2254 = vadd.f32 0.0, %v2253
        %v2255 = vpop.f32.mrb[0].mxu0
        %2256 = vdwg.mxu0
        %v2257 = vadd.f32 %v1738, %v2239
        %v2258 = vadd.f32 %v1743, %v2244
        %v2259 = vadd.f32 %v1748, %v2249
        %v2260 = vadd.f32 %v1753, %v2254
        %2261 = vrot.lane.b32.xlu0 %v645, 32
        %v2262 = vpop.permute.xlu0 %2261
        %2263 = vrot.lane.b32.xlu0 %v651, 32
        %v2264 = vpop.permute.xlu0 %2263
        %2265 = vrot.lane.b32.xlu0 %v647, 32
        %v2266 = vpop.permute.xlu0 %2265
        %2267 = vrot.lane.b32.xlu0 %v653, 32
        %v2268 = vpop.permute.xlu0 %2267
        %v2269 = vsel %vm768, %v2262, 0
        %v2271 = vsel %vm768, %v2264, 0
        %v2273 = vsel %vm768, %v2266, 0
        %v2275 = vsel %vm768, %v2268, 0
        %2277 = vmatprep.subr.mxu0 0.0
        %2278 = vmatpush1.xpose.msra.mxu0 %v2273
        %2279 = vmatprep.subr.mxu0 0.0
        %2280 = vmatpush1.xpose.msra.mxu0 %v2275
        %2281 = vmatprep.subr.mxu0 0.0
        %2282 = vmatpush1.xpose.msra.mxu0 0.0
        %2283 = vmatprep.subr.mxu0 0.0
        %2284 = vmatpush1.xpose.msra.mxu0 0.0
        %2285 = vmatprep.subr.mxu0 0.0
        %2286 = vmatpush1.xpose.msra.mxu0 0.0
        %2287 = vmatprep.subr.mxu0 0.0
        %2288 = vmatpush1.xpose.msra.mxu0 0.0
        %2289 = vmatprep.subr.mxu0 0.0
        %2290 = vmatpush1.xpose.msra.mxu0 0.0
        %2291 = vmatprep.subr.mxu0 0.0
        %2292 = vmatpush1.xpose.msra.mxu0 0.0
        %2293 = vmatprep.subr.mxu0 0.0
        %2294 = vmatpush1.xpose.msra.mxu0 0.0
        %2295 = vmatprep.subr.mxu0 0.0
        %2296 = vmatpush1.xpose.msra.mxu0 0.0
        %2297 = vmatprep.subr.mxu0 0.0
        %2298 = vmatpush1.xpose.msra.mxu0 0.0
        %2299 = vmatprep.subr.mxu0 0.0
        %2300 = vmatpush1.xpose.msra.mxu0 0.0
        %2301 = vmatprep.subr.mxu0 0.0
        %2302 = vmatpush1.xpose.msra.mxu0 0.0
        %2303 = vmatprep.subr.mxu0 0.0
        %2304 = vmatpush1.xpose.msra.mxu0 0.0
        %2305 = vmatprep.subr.mxu0 0.0
        %2306 = vmatpush1.xpose.msra.mxu0 0.0
        %2307 = vmatprep.subr.mxu0 0.0
        %2308 = vmatpush1.xpose.msra.mxu0 0.0
        %2309 = vmatprep.subr.mxu0 0.0
        %2310 = vmatpush1.xpose.msra.mxu0 0.0
        %2311 = vmatprep.subr.mxu0 0.0
        %2312 = vmatpush1.xpose.msra.mxu0 0.0
        %2313 = vmatprep.subr.mxu0 0.0
        %2314 = vmatpush1.xpose.msra.mxu0 0.0
        %2315 = vmatprep.subr.mxu0 0.0
        %2316 = vmatpush1.xpose.msra.mxu0 0.0
        %2317 = vmatprep.subr.mxu0 0.0
        %2318 = vmatpush1.xpose.msra.mxu0 0.0
        %2319 = vmatprep.subr.mxu0 0.0
        %2320 = vmatpush1.xpose.msra.mxu0 0.0
        %2321 = vmatprep.subr.mxu0 0.0
        %2322 = vmatpush1.xpose.msra.mxu0 0.0
        %2323 = vmatprep.subr.mxu0 0.0
        %2324 = vmatpush1.xpose.msra.mxu0 0.0
        %2325 = vmatprep.subr.mxu0 0.0
        %2326 = vmatpush1.xpose.msra.mxu0 0.0
        %2327 = vmatprep.subr.mxu0 0.0
        %2328 = vmatpush1.xpose.msra.mxu0 0.0
        %2329 = vmatprep.subr.mxu0 0.0
        %2330 = vmatpush1.xpose.msra.mxu0 0.0
        %2331 = vmatprep.subr.mxu0 0.0
        %2332 = vmatpush1.xpose.msra.mxu0 0.0
        %2333 = vmatprep.subr.mxu0 0.0
        %2334 = vmatpush1.xpose.msra.mxu0 0.0
        %2335 = vmatprep.subr.mxu0 0.0
        %2336 = vmatpush1.xpose.msra.mxu0 0.0
        %2337 = vmatprep.subr.mxu0 0.0
        %2338 = vmatpush1.xpose.msra.mxu0 0.0
        %2339 = vmatprep.subr.mxu0 0.0
        %2340 = vmatpush1.xpose.msra.mxu0 0.0
        %2341 = vmatprep.mubr.f32.mxu0 0.0
        %2342 = vmatmul.mubr.f32.gmra.mrb[0].mxu0 %v2269
        %v2343 = vpop.f32.mrb[0].mxu0
        %v2344 = vadd.f32 0.0, %v2343
        %v2345 = vpop.f32.mrb[0].mxu0
        %2346 = vmatprep.mubr.f32.mxu0 0.0
        %2347 = vmatmul.mubr.f32.gmra.mrb[0].mxu0 %v2271
        %v2348 = vpop.f32.mrb[0].mxu0
        %v2349 = vadd.f32 0.0, %v2348
        %v2350 = vpop.f32.mrb[0].mxu0
        %2351 = vdwg.mxu0
        %2352 = vrot.lane.b32.xlu0 %v657, 32
        %v2353 = vpop.permute.xlu0 %2352
        %2354 = vrot.lane.b32.xlu0 %v663, 32
        %v2355 = vpop.permute.xlu0 %2354
        %2356 = vrot.lane.b32.xlu0 %v659, 32
        %v2357 = vpop.permute.xlu0 %2356
        %2358 = vrot.lane.b32.xlu0 %v665, 32
        %v2359 = vpop.permute.xlu0 %2358
        %v2360 = vsel %vm768, %v2353, 0
        %v2362 = vsel %vm768, %v2355, 0
        %v2364 = vsel %vm768, %v2357, 0
        %v2366 = vsel %vm768, %v2359, 0
        %2368 = vmatprep.subr.mxu0 0.0
        %2369 = vmatpush1.xpose.msra.mxu0 %v2364
        %2370 = vmatprep.subr.mxu0 0.0
        %2371 = vmatpush1.xpose.msra.mxu0 %v2366
        %2372 = vmatprep.subr.mxu0 0.0
        %2373 = vmatpush1.xpose.msra.mxu0 0.0
        %2374 = vmatprep.subr.mxu0 0.0
        %2375 = vmatpush1.xpose.msra.mxu0 0.0
        %2376 = vmatprep.subr.mxu0 0.0
        %2377 = vmatpush1.xpose.msra.mxu0 0.0
        %2378 = vmatprep.subr.mxu0 0.0
        %2379 = vmatpush1.xpose.msra.mxu0 0.0
        %2380 = vmatprep.subr.mxu0 0.0
        %2381 = vmatpush1.xpose.msra.mxu0 0.0
        %2382 = vmatprep.subr.mxu0 0.0
        %2383 = vmatpush1.xpose.msra.mxu0 0.0
        %2384 = vmatprep.subr.mxu0 0.0
        %2385 = vmatpush1.xpose.msra.mxu0 0.0
        %2386 = vmatprep.subr.mxu0 0.0
        %2387 = vmatpush1.xpose.msra.mxu0 0.0
        %2388 = vmatprep.subr.mxu0 0.0
        %2389 = vmatpush1.xpose.msra.mxu0 0.0
        %2390 = vmatprep.subr.mxu0 0.0
        %2391 = vmatpush1.xpose.msra.mxu0 0.0
        %2392 = vmatprep.subr.mxu0 0.0
        %2393 = vmatpush1.xpose.msra.mxu0 0.0
        %2394 = vmatprep.subr.mxu0 0.0
        %2395 = vmatpush1.xpose.msra.mxu0 0.0
        %2396 = vmatprep.subr.mxu0 0.0
        %2397 = vmatpush1.xpose.msra.mxu0 0.0
        %2398 = vmatprep.subr.mxu0 0.0
        %2399 = vmatpush1.xpose.msra.mxu0 0.0
        %2400 = vmatprep.subr.mxu0 0.0
        %2401 = vmatpush1.xpose.msra.mxu0 0.0
        %2402 = vmatprep.subr.mxu0 0.0
        %2403 = vmatpush1.xpose.msra.mxu0 0.0
        %2404 = vmatprep.subr.mxu0 0.0
        %2405 = vmatpush1.xpose.msra.mxu0 0.0
        %2406 = vmatprep.subr.mxu0 0.0
        %2407 = vmatpush1.xpose.msra.mxu0 0.0
        %2408 = vmatprep.subr.mxu0 0.0
        %2409 = vmatpush1.xpose.msra.mxu0 0.0
        %2410 = vmatprep.subr.mxu0 0.0
        %2411 = vmatpush1.xpose.msra.mxu0 0.0
        %2412 = vmatprep.subr.mxu0 0.0
        %2413 = vmatpush1.xpose.msra.mxu0 0.0
        %2414 = vmatprep.subr.mxu0 0.0
        %2415 = vmatpush1.xpose.msra.mxu0 0.0
        %2416 = vmatprep.subr.mxu0 0.0
        %2417 = vmatpush1.xpose.msra.mxu0 0.0
        %2418 = vmatprep.subr.mxu0 0.0
        %2419 = vmatpush1.xpose.msra.mxu0 0.0
        %2420 = vmatprep.subr.mxu0 0.0
        %2421 = vmatpush1.xpose.msra.mxu0 0.0
        %2422 = vmatprep.subr.mxu0 0.0
        %2423 = vmatpush1.xpose.msra.mxu0 0.0
        %2424 = vmatprep.subr.mxu0 0.0
        %2425 = vmatpush1.xpose.msra.mxu0 0.0
        %2426 = vmatprep.subr.mxu0 0.0
        %2427 = vmatpush1.xpose.msra.mxu0 0.0
        %2428 = vmatprep.subr.mxu0 0.0
        %2429 = vmatpush1.xpose.msra.mxu0 0.0
        %2430 = vmatprep.subr.mxu0 0.0
        %2431 = vmatpush1.xpose.msra.mxu0 0.0
        %2432 = vmatprep.mubr.f32.mxu0 0.0
        %2433 = vmatmul.mubr.f32.gmra.mrb[0].mxu0 %v2360
        %v2434 = vpop.f32.mrb[0].mxu0
        %v2435 = vadd.f32 0.0, %v2434
        %v2436 = vpop.f32.mrb[0].mxu0
        %2437 = vmatprep.mubr.f32.mxu0 0.0
        %2438 = vmatmul.mubr.f32.gmra.mrb[0].mxu0 %v2362
        %v2439 = vpop.f32.mrb[0].mxu0
        %v2440 = vadd.f32 0.0, %v2439
        %v2441 = vpop.f32.mrb[0].mxu0
        %2442 = vdwg.mxu0
        %v2443 = vmul.f32 %v2344, 0.17677669
        %v2444 = vmul.f32 %v2349, 0.17677669
        %v2445 = vmul.f32 %v2435, 0.17677669
        %v2446 = vmul.f32 %v2440, 0.17677669
        %v2447 = vsel %vm947, %v2443, -inf
        %2448 = vmax.xlane.f32.xlu0 %v2447
        %v2449 = vpop.xlane.xlu0 %2448
        %v2450 = vsel %vm947, %v2444, -inf
        %2451 = vmax.xlane.f32.xlu0 %v2450
        %v2452 = vpop.xlane.xlu0 %2451
        %v2453 = vsel %vm947, %v2445, -inf
        %2454 = vmax.xlane.f32.xlu0 %v2453
        %v2455 = vpop.xlane.xlu0 %2454
        %v2456 = vsel %vm947, %v2446, -inf
        %2457 = vmax.xlane.f32.xlu0 %v2456
        %v2458 = vpop.xlane.xlu0 %2457
        %v2459 = vsub.f32 %v2443, %v2449
        %v2460 = vsub.f32 %v2444, %v2452
        %v2461 = vsub.f32 %v2445, %v2455
        %v2462 = vsub.f32 %v2446, %v2458
        %v2463 = vmul.f32 %v2459, 1.442695
        %v2464 = vpow.pop %v2463
        %v2465 = vmul.f32 %v2460, 1.442695
        %v2466 = vpow.pop %v2465
        %v2467 = vmul.f32 %v2461, 1.442695
        %v2468 = vpow.pop %v2467
        %v2469 = vmul.f32 %v2462, 1.442695
        %v2470 = vpow.pop %v2469
        %v2471 = vsel %vm947, %v2464, 0.0
        %2472 = vadd.xlane.f32.xlu0 %v2471
        %v2473 = vpop.xlane.xlu0 %2472
        %v2474 = vsel %vm947, %v2466, 0.0
        %2475 = vadd.xlane.f32.xlu0 %v2474
        %v2476 = vpop.xlane.xlu0 %2475
        %v2477 = vsel %vm947, %v2468, 0.0
        %2478 = vadd.xlane.f32.xlu0 %v2477
        %v2479 = vpop.xlane.xlu0 %2478
        %v2480 = vsel %vm947, %v2470, 0.0
        %2481 = vadd.xlane.f32.xlu0 %v2480
        %v2482 = vpop.xlane.xlu0 %2481
        %v2483 = vrcp.pop %v2473
        %v2484 = vrcp.pop %v2476
        %v2485 = vrcp.pop %v2479
        %v2486 = vrcp.pop %v2482
        %v2487 = vmul.f32 %v2464, %v2483
        %v2488 = vmul.f32 %v2466, %v2484
        %v2489 = vmul.f32 %v2468, %v2485
        %v2490 = vmul.f32 %v2470, %v2486
        %2491 = vrot.lane.b32.xlu0 %v734, 32
        %v2492 = vpop.permute.xlu0 %2491
        %2493 = vrot.lane.b32.xlu0 %v739, 32
        %v2494 = vpop.permute.xlu0 %2493
        %v2498 = vsel %vm947, %v2487, 0
        %v2501 = vsel %vm947, %v2488, 0
        %2503 = vmatprep.subr.mxu0 0.0
        %2504 = vmatpush1.msra.mxu0 %v2492
        %2505 = vmatprep.subr.mxu0 0.0
        %2506 = vmatpush1.msra.mxu0 %v2494
        %2507 = vmatprep.subr.mxu0 0.0
        %2508 = vmatpush1.msra.mxu0 0.0
        %2509 = vmatprep.subr.mxu0 0.0
        %2510 = vmatpush1.msra.mxu0 0.0
        %2511 = vmatprep.subr.mxu0 0.0
        %2512 = vmatpush1.msra.mxu0 0.0
        %2513 = vmatprep.subr.mxu0 0.0
        %2514 = vmatpush1.msra.mxu0 0.0
        %2515 = vmatprep.subr.mxu0 0.0
        %2516 = vmatpush1.msra.mxu0 0.0
        %2517 = vmatprep.subr.mxu0 0.0
        %2518 = vmatpush1.msra.mxu0 0.0
        %2519 = vmatprep.subr.mxu0 0.0
        %2520 = vmatpush1.msra.mxu0 0.0
        %2521 = vmatprep.subr.mxu0 0.0
        %2522 = vmatpush1.msra.mxu0 0.0
        %2523 = vmatprep.subr.mxu0 0.0
        %2524 = vmatpush1.msra.mxu0 0.0
        %2525 = vmatprep.subr.mxu0 0.0
        %2526 = vmatpush1.msra.mxu0 0.0
        %2527 = vmatprep.subr.mxu0 0.0
        %2528 = vmatpush1.msra.mxu0 0.0
        %2529 = vmatprep.subr.mxu0 0.0
        %2530 = vmatpush1.msra.mxu0 0.0
        %2531 = vmatprep.subr.mxu0 0.0
        %2532 = vmatpush1.msra.mxu0 0.0
        %2533 = vmatprep.subr.mxu0 0.0
        %2534 = vmatpush1.msra.mxu0 0.0
        %2535 = vmatprep.subr.mxu0 0.0
        %2536 = vmatpush1.msra.mxu0 0.0
        %2537 = vmatprep.subr.mxu0 0.0
        %2538 = vmatpush1.msra.mxu0 0.0
        %2539 = vmatprep.subr.mxu0 0.0
        %2540 = vmatpush1.msra.mxu0 0.0
        %2541 = vmatprep.subr.mxu0 0.0
        %2542 = vmatpush1.msra.mxu0 0.0
        %2543 = vmatprep.subr.mxu0 0.0
        %2544 = vmatpush1.msra.mxu0 0.0
        %2545 = vmatprep.subr.mxu0 0.0
        %2546 = vmatpush1.msra.mxu0 0.0
        %2547 = vmatprep.subr.mxu0 0.0
        %2548 = vmatpush1.msra.mxu0 0.0
        %2549 = vmatprep.subr.mxu0 0.0
        %2550 = vmatpush1.msra.mxu0 0.0
        %2551 = vmatprep.subr.mxu0 0.0
        %2552 = vmatpush1.msra.mxu0 0.0
        %2553 = vmatprep.subr.mxu0 0.0
        %2554 = vmatpush1.msra.mxu0 0.0
        %2555 = vmatprep.subr.mxu0 0.0
        %2556 = vmatpush1.msra.mxu0 0.0
        %2557 = vmatprep.subr.mxu0 0.0
        %2558 = vmatpush1.msra.mxu0 0.0
        %2559 = vmatprep.subr.mxu0 0.0
        %2560 = vmatpush1.msra.mxu0 0.0
        %2561 = vmatprep.subr.mxu0 0.0
        %2562 = vmatpush1.msra.mxu0 0.0
        %2563 = vmatprep.subr.mxu0 0.0
        %2564 = vmatpush1.msra.mxu0 0.0
        %2565 = vmatprep.subr.mxu0 0.0
        %2566 = vmatpush1.msra.mxu0 0.0
        %2567 = vmatprep.mubr.f32.mxu0 0.0
        %2568 = vmatmul.mubr.f32.gmra.mrb[0].mxu0 %v2498
        %v2569 = vpop.f32.mrb[0].mxu0
        %v2570 = vadd.f32 0.0, %v2569
        %v2571 = vpop.f32.mrb[0].mxu0
        %2572 = vmatprep.mubr.f32.mxu0 0.0
        %2573 = vmatmul.mubr.f32.gmra.mrb[0].mxu0 %v2501
        %v2574 = vpop.f32.mrb[0].mxu0
        %v2575 = vadd.f32 0.0, %v2574
        %v2576 = vpop.f32.mrb[0].mxu0
        %2577 = vdwg.mxu0
        %2578 = vrot.lane.b32.xlu0 %v744, 32
        %v2579 = vpop.permute.xlu0 %2578
        %2580 = vrot.lane.b32.xlu0 %v749, 32
        %v2581 = vpop.permute.xlu0 %2580
        %v2585 = vsel %vm947, %v2489, 0
        %v2588 = vsel %vm947, %v2490, 0
        %2590 = vmatprep.subr.mxu0 0.0
        %2591 = vmatpush1.msra.mxu0 %v2579
        %2592 = vmatprep.subr.mxu0 0.0
        %2593 = vmatpush1.msra.mxu0 %v2581
        %2594 = vmatprep.subr.mxu0 0.0
        %2595 = vmatpush1.msra.mxu0 0.0
        %2596 = vmatprep.subr.mxu0 0.0
        %2597 = vmatpush1.msra.mxu0 0.0
        %2598 = vmatprep.subr.mxu0 0.0
        %2599 = vmatpush1.msra.mxu0 0.0
        %2600 = vmatprep.subr.mxu0 0.0
        %2601 = vmatpush1.msra.mxu0 0.0
        %2602 = vmatprep.subr.mxu0 0.0
        %2603 = vmatpush1.msra.mxu0 0.0
        %2604 = vmatprep.subr.mxu0 0.0
        %2605 = vmatpush1.msra.mxu0 0.0
        %2606 = vmatprep.subr.mxu0 0.0
        %2607 = vmatpush1.msra.mxu0 0.0
        %2608 = vmatprep.subr.mxu0 0.0
        %2609 = vmatpush1.msra.mxu0 0.0
        %2610 = vmatprep.subr.mxu0 0.0
        %2611 = vmatpush1.msra.mxu0 0.0
        %2612 = vmatprep.subr.mxu0 0.0
        %2613 = vmatpush1.msra.mxu0 0.0
        %2614 = vmatprep.subr.mxu0 0.0
        %2615 = vmatpush1.msra.mxu0 0.0
        %2616 = vmatprep.subr.mxu0 0.0
        %2617 = vmatpush1.msra.mxu0 0.0
        %2618 = vmatprep.subr.mxu0 0.0
        %2619 = vmatpush1.msra.mxu0 0.0
        %2620 = vmatprep.subr.mxu0 0.0
        %2621 = vmatpush1.msra.mxu0 0.0
        %2622 = vmatprep.subr.mxu0 0.0
        %2623 = vmatpush1.msra.mxu0 0.0
        %2624 = vmatprep.subr.mxu0 0.0
        %2625 = vmatpush1.msra.mxu0 0.0
        %2626 = vmatprep.subr.mxu0 0.0
        %2627 = vmatpush1.msra.mxu0 0.0
        %2628 = vmatprep.subr.mxu0 0.0
        %2629 = vmatpush1.msra.mxu0 0.0
        %2630 = vmatprep.subr.mxu0 0.0
        %2631 = vmatpush1.msra.mxu0 0.0
        %2632 = vmatprep.subr.mxu0 0.0
        %2633 = vmatpush1.msra.mxu0 0.0
        %2634 = vmatprep.subr.mxu0 0.0
        %2635 = vmatpush1.msra.mxu0 0.0
        %2636 = vmatprep.subr.mxu0 0.0
        %2637 = vmatpush1.msra.mxu0 0.0
        %2638 = vmatprep.subr.mxu0 0.0
        %2639 = vmatpush1.msra.mxu0 0.0
        %2640 = vmatprep.subr.mxu0 0.0
        %2641 = vmatpush1.msra.mxu0 0.0
        %2642 = vmatprep.subr.mxu0 0.0
        %2643 = vmatpush1.msra.mxu0 0.0
        %2644 = vmatprep.subr.mxu0 0.0
        %2645 = vmatpush1.msra.mxu0 0.0
        %2646 = vmatprep.subr.mxu0 0.0
        %2647 = vmatpush1.msra.mxu0 0.0
        %2648 = vmatprep.subr.mxu0 0.0
        %2649 = vmatpush1.msra.mxu0 0.0
        %2650 = vmatprep.subr.mxu0 0.0
        %2651 = vmatpush1.msra.mxu0 0.0
        %2652 = vmatprep.subr.mxu0 0.0
        %2653 = vmatpush1.msra.mxu0 0.0
        %2654 = vmatprep.mubr.f32.mxu0 0.0
        %2655 = vmatmul.mubr.f32.gmra.mrb[0].mxu0 %v2585
        %v2656 = vpop.f32.mrb[0].mxu0
        %v2657 = vadd.f32 0.0, %v2656
        %v2658 = vpop.f32.mrb[0].mxu0
        %2659 = vmatprep.mubr.f32.mxu0 0.0
        %2660 = vmatmul.mubr.f32.gmra.mrb[0].mxu0 %v2588
        %v2661 = vpop.f32.mrb[0].mxu0
        %v2662 = vadd.f32 0.0, %v2661
        %v2663 = vpop.f32.mrb[0].mxu0
        %2664 = vdwg.mxu0
        %v2666 = vsel %vm768, %v2570, 0
        %v2669 = vsel %vm768, %v2575, 0
        %v2672 = vsel %vm768, %v2657, 0
        %v2675 = vsel %vm768, %v2662, 0
        %2677 = vmatprep.subr.mxu0 0.0
        %2678 = vmatpush1.msra.mxu0 %v764
        %2679 = vmatprep.subr.mxu0 0.0
        %2680 = vmatpush1.msra.mxu0 %v765
        %2681 = vmatprep.subr.mxu0 0.0
        %2682 = vmatpush1.msra.mxu0 %v766
        %2683 = vmatprep.subr.mxu0 0.0
        %2684 = vmatpush1.msra.mxu0 %v767
        %2685 = vmatprep.subr.mxu0 0.0
        %2686 = vmatpush1.msra.mxu0 0.0
        %2687 = vmatprep.subr.mxu0 0.0
        %2688 = vmatpush1.msra.mxu0 0.0
        %2689 = vmatprep.subr.mxu0 0.0
        %2690 = vmatpush1.msra.mxu0 0.0
        %2691 = vmatprep.subr.mxu0 0.0
        %2692 = vmatpush1.msra.mxu0 0.0
        %2693 = vmatprep.subr.mxu0 0.0
        %2694 = vmatpush1.msra.mxu0 0.0
        %2695 = vmatprep.subr.mxu0 0.0
        %2696 = vmatpush1.msra.mxu0 0.0
        %2697 = vmatprep.subr.mxu0 0.0
        %2698 = vmatpush1.msra.mxu0 0.0
        %2699 = vmatprep.subr.mxu0 0.0
        %2700 = vmatpush1.msra.mxu0 0.0
        %2701 = vmatprep.subr.mxu0 0.0
        %2702 = vmatpush1.msra.mxu0 0.0
        %2703 = vmatprep.subr.mxu0 0.0
        %2704 = vmatpush1.msra.mxu0 0.0
        %2705 = vmatprep.subr.mxu0 0.0
        %2706 = vmatpush1.msra.mxu0 0.0
        %2707 = vmatprep.subr.mxu0 0.0
        %2708 = vmatpush1.msra.mxu0 0.0
        %2709 = vmatprep.subr.mxu0 0.0
        %2710 = vmatpush1.msra.mxu0 0.0
        %2711 = vmatprep.subr.mxu0 0.0
        %2712 = vmatpush1.msra.mxu0 0.0
        %2713 = vmatprep.subr.mxu0 0.0
        %2714 = vmatpush1.msra.mxu0 0.0
        %2715 = vmatprep.subr.mxu0 0.0
        %2716 = vmatpush1.msra.mxu0 0.0
        %2717 = vmatprep.subr.mxu0 0.0
        %2718 = vmatpush1.msra.mxu0 0.0
        %2719 = vmatprep.subr.mxu0 0.0
        %2720 = vmatpush1.msra.mxu0 0.0
        %2721 = vmatprep.subr.mxu0 0.0
        %2722 = vmatpush1.msra.mxu0 0.0
        %2723 = vmatprep.subr.mxu0 0.0
        %2724 = vmatpush1.msra.mxu0 0.0
        %2725 = vmatprep.subr.mxu0 0.0
        %2726 = vmatpush1.msra.mxu0 0.0
        %2727 = vmatprep.subr.mxu0 0.0
        %2728 = vmatpush1.msra.mxu0 0.0
        %2729 = vmatprep.subr.mxu0 0.0
        %2730 = vmatpush1.msra.mxu0 0.0
        %2731 = vmatprep.subr.mxu0 0.0
        %2732 = vmatpush1.msra.mxu0 0.0
        %2733 = vmatprep.subr.mxu0 0.0
        %2734 = vmatpush1.msra.mxu0 0.0
        %2735 = vmatprep.subr.mxu0 0.0
        %2736 = vmatpush1.msra.mxu0 0.0
        %2737 = vmatprep.subr.mxu0 0.0
        %2738 = vmatpush1.msra.mxu0 0.0
        %2739 = vmatprep.subr.mxu0 0.0
        %2740 = vmatpush1.msra.mxu0 0.0
        %2741 = vmatprep.mubr.f32.mxu0 0.0
        %2742 = vmatmul.mubr.f32.gmra.mrb[0].mxu0 %v2666
        %v2743 = vpop.f32.mrb[0].mxu0
        %v2744 = vadd.f32 0.0, %v2743
        %v2745 = vpop.f32.mrb[0].mxu0
        %2746 = vmatprep.mubr.f32.mxu0 0.0
        %2747 = vmatmul.mubr.f32.gmra.mrb[0].mxu0 %v2669
        %v2748 = vpop.f32.mrb[0].mxu0
        %v2749 = vadd.f32 0.0, %v2748
        %v2750 = vpop.f32.mrb[0].mxu0
        %2751 = vmatprep.mubr.f32.mxu0 0.0
        %2752 = vmatmul.mubr.f32.gmra.mrb[0].mxu0 %v2672
        %v2753 = vpop.f32.mrb[0].mxu0
        %v2754 = vadd.f32 0.0, %v2753
        %v2755 = vpop.f32.mrb[0].mxu0
        %2756 = vmatprep.mubr.f32.mxu0 0.0
        %2757 = vmatmul.mubr.f32.gmra.mrb[0].mxu0 %v2675
        %v2758 = vpop.f32.mrb[0].mxu0
        %v2759 = vadd.f32 0.0, %v2758
        %v2760 = vpop.f32.mrb[0].mxu0
        %2761 = vdwg.mxu0
        %v2762 = vadd.f32 %v2257, %v2744
        %v2763 = vadd.f32 %v2258, %v2749
        %v2764 = vadd.f32 %v2259, %v2754
        %v2765 = vadd.f32 %v2260, %v2759
        %v2766 = vadd.f32 %v462, %v2762
        %v2767 = vadd.f32 %v463, %v2763
        %v2768 = vadd.f32 %v464, %v2764
        %v2769 = vadd.f32 %v465, %v2765
        %v2770 = vld [vmem:[#allocation10] sm:$0x1]
        %v2772 = vlaneseq
        %v2773 = vshrl.u32 %v2772, 7
        %v2774 = vsub.s32 0, %v2773
        %v2775 = vrot.slane %v2770, %v2774
        %v2777 = vadd.f32 %v2766, %v2775
        %v2778 = vadd.f32 %v2767, %v2775
        %v2779 = vadd.f32 %v2768, %v2775
        %v2780 = vadd.f32 %v2769, %v2775
        %2781 = vadd.xlane.f32.xlu0 %v2777
        %v2782 = vpop.xlane.xlu0 %2781
        %2783 = vadd.xlane.f32.xlu0 %v2778
        %v2784 = vpop.xlane.xlu0 %2783
        %2785 = vadd.xlane.f32.xlu0 %v2779
        %v2786 = vpop.xlane.xlu0 %2785
        %2787 = vadd.xlane.f32.xlu0 %v2780
        %v2788 = vpop.xlane.xlu0 %2787
        %v2789 = vmul.f32 %v2782, 0.0078125
        %v2790 = vmul.f32 %v2784, 0.0078125
        %v2791 = vmul.f32 %v2786, 0.0078125
        %v2792 = vmul.f32 %v2788, 0.0078125
        %v2793 = vsub.f32 %v2777, %v2789
        %v2794 = vsub.f32 %v2778, %v2790
        %v2795 = vsub.f32 %v2779, %v2791
        %v2796 = vsub.f32 %v2780, %v2792
        %v2797 = vmul.f32 %v2793, %v2793
        %v2798 = vmul.f32 %v2794, %v2794
        %v2799 = vmul.f32 %v2795, %v2795
        %v2800 = vmul.f32 %v2796, %v2796
        %2801 = vadd.xlane.f32.xlu0 %v2797
        %v2802 = vpop.xlane.xlu0 %2801
        %2803 = vadd.xlane.f32.xlu0 %v2798
        %v2804 = vpop.xlane.xlu0 %2803
        %2805 = vadd.xlane.f32.xlu0 %v2799
        %v2806 = vpop.xlane.xlu0 %2805
        %2807 = vadd.xlane.f32.xlu0 %v2800
        %v2808 = vpop.xlane.xlu0 %2807
        %v2809 = vmul.f32 %v2802, 0.0078125
        %v2810 = vmul.f32 %v2804, 0.0078125
        %v2811 = vmul.f32 %v2806, 0.0078125
        %v2812 = vmul.f32 %v2808, 0.0078125
        %v2813 = vadd.f32 %v2809, 1e-06
        %v2814 = vadd.f32 %v2810, 1e-06
        %v2815 = vadd.f32 %v2811, 1e-06
        %v2816 = vadd.f32 %v2812, 1e-06
        %v2817 = vrsqrt.pop %v2813
        %v2818 = vrsqrt.pop %v2814
        %v2819 = vrsqrt.pop %v2815
        %v2820 = vrsqrt.pop %v2816
        %v2821 = vmul.f32 %v2793, %v2817
        %v2822 = vmul.f32 %v2794, %v2818
        %v2823 = vmul.f32 %v2795, %v2819
        %v2824 = vmul.f32 %v2796, %v2820
        %v2825 = vlaneseq
        %v2826 = vshrl.u32 %v2825, 7
        %v2827 = vsub.s32 0, %v2826
        %v2828 = vrot.slane %v468, %v2827
        %v2829 = vmul.f32 %v2821, %v2828
        %v2830 = vmul.f32 %v2822, %v2828
        %v2831 = vmul.f32 %v2823, %v2828
        %v2832 = vmul.f32 %v2824, %v2828
        %v2833 = vlaneseq
        %v2834 = vshrl.u32 %v2833, 7
        %v2835 = vsub.s32 0, %v2834
        %v2836 = vrot.slane %v469, %v2835
        %v2837 = vadd.f32 %v2829, %v2836
        %v2838 = vadd.f32 %v2830, %v2836
        %v2839 = vadd.f32 %v2831, %v2836
        %v2840 = vadd.f32 %v2832, %v2836
        %v2841 = vld [vmem:[#allocation11] sm:$0xff]
        %v2842 = vld [vmem:[#allocation11 + $0x8] sm:$0xff]
        %v2843 = vld [vmem:[#allocation11 + $0x10] sm:$0xff]
        %v2844 = vld [vmem:[#allocation11 + $0x18] sm:$0xff]
        %v2845 = vld [vmem:[#allocation11 + $0x20] sm:$0xff]
        %v2846 = vld [vmem:[#allocation11 + $0x28] sm:$0xff]
        %v2847 = vld [vmem:[#allocation11 + $0x30] sm:$0xff]
        %v2848 = vld [vmem:[#allocation11 + $0x38] sm:$0xff]
        %v2849 = vld [vmem:[#allocation11 + $0x40] sm:$0xff]
        %v2850 = vld [vmem:[#allocation11 + $0x48] sm:$0xff]
        %v2851 = vld [vmem:[#allocation11 + $0x50] sm:$0xff]
        %v2852 = vld [vmem:[#allocation11 + $0x58] sm:$0xff]
        %v2853 = vld [vmem:[#allocation11 + $0x60] sm:$0xff]
        %v2854 = vld [vmem:[#allocation11 + $0x68] sm:$0xff]
        %v2855 = vld [vmem:[#allocation11 + $0x70] sm:$0xff]
        %v2856 = vld [vmem:[#allocation11 + $0x78] sm:$0xff]
        %v2857 = vld [vmem:[#allocation11 + $0x80] sm:$0xff]
        %v2858 = vld [vmem:[#allocation11 + $0x88] sm:$0xff]
        %v2859 = vld [vmem:[#allocation11 + $0x90] sm:$0xff]
        %v2860 = vld [vmem:[#allocation11 + $0x98] sm:$0xff]
        %v2861 = vld [vmem:[#allocation11 + $0xa0] sm:$0xff]
        %v2862 = vld [vmem:[#allocation11 + $0xa8] sm:$0xff]
        %v2863 = vld [vmem:[#allocation11 + $0xb0] sm:$0xff]
        %v2864 = vld [vmem:[#allocation11 + $0xb8] sm:$0xff]
        %v2865 = vld [vmem:[#allocation11 + $0xc0] sm:$0xff]
        %v2866 = vld [vmem:[#allocation11 + $0xc8] sm:$0xff]
        %v2867 = vld [vmem:[#allocation11 + $0xd0] sm:$0xff]
        %v2868 = vld [vmem:[#allocation11 + $0xd8] sm:$0xff]
        %v2869 = vld [vmem:[#allocation11 + $0xe0] sm:$0xff]
        %v2870 = vld [vmem:[#allocation11 + $0xe8] sm:$0xff]
        %v2871 = vld [vmem:[#allocation11 + $0xf0] sm:$0xff]
        %v2872 = vld [vmem:[#allocation11 + $0xf8] sm:$0xff]
        %v2873 = vld [vmem:[#allocation13] sm:$0x3]
        %v2875 = vlaneseq
        %v2876 = vshrl.u32 %v2875, 7
        %v2877 = vsub.s32 0, %v2876
        %v2878 = vrot.slane %v2873, %v2877
        %v2879 = vlaneseq
        %v2880 = vshrl.u32 %v2879, 7
        %v2881 = vsub.s32 1, %v2880
        %v2882 = vrot.slane %v2873, %v2881
        %2885 = vmatprep.subr.mxu0 %v2842
        %2886 = vmatpush1.msra.mxu0 %v2841
        %2887 = vmatprep.subr.mxu0 %v2844
        %2888 = vmatpush1.msra.mxu0 %v2843
        %2889 = vmatprep.subr.mxu0 %v2846
        %2890 = vmatpush1.msra.mxu0 %v2845
        %2891 = vmatprep.subr.mxu0 %v2848
        %2892 = vmatpush1.msra.mxu0 %v2847
        %2893 = vmatprep.subr.mxu0 %v2850
        %2894 = vmatpush1.msra.mxu0 %v2849
        %2895 = vmatprep.subr.mxu0 %v2852
        %2896 = vmatpush1.msra.mxu0 %v2851
        %2897 = vmatprep.subr.mxu0 %v2854
        %2898 = vmatpush1.msra.mxu0 %v2853
        %2899 = vmatprep.subr.mxu0 %v2856
        %2900 = vmatpush1.msra.mxu0 %v2855
        %2901 = vmatprep.subr.mxu0 %v2858
        %2902 = vmatpush1.msra.mxu0 %v2857
        %2903 = vmatprep.subr.mxu0 %v2860
        %2904 = vmatpush1.msra.mxu0 %v2859
        %2905 = vmatprep.subr.mxu0 %v2862
        %2906 = vmatpush1.msra.mxu0 %v2861
        %2907 = vmatprep.subr.mxu0 %v2864
        %2908 = vmatpush1.msra.mxu0 %v2863
        %2909 = vmatprep.subr.mxu0 %v2866
        %2910 = vmatpush1.msra.mxu0 %v2865
        %2911 = vmatprep.subr.mxu0 %v2868
        %2912 = vmatpush1.msra.mxu0 %v2867
        %2913 = vmatprep.subr.mxu0 %v2870
        %2914 = vmatpush1.msra.mxu0 %v2869
        %2915 = vmatprep.subr.mxu0 %v2872
        %2916 = vmatpush1.msra.mxu0 %v2871
        %2917 = vmatprep.subr.mxu0 0.0
        %2918 = vmatpush1.msra.mxu0 0.0
        %2919 = vmatprep.subr.mxu0 0.0
        %2920 = vmatpush1.msra.mxu0 0.0
        %2921 = vmatprep.subr.mxu0 0.0
        %2922 = vmatpush1.msra.mxu0 0.0
        %2923 = vmatprep.subr.mxu0 0.0
        %2924 = vmatpush1.msra.mxu0 0.0
        %2925 = vmatprep.subr.mxu0 0.0
        %2926 = vmatpush1.msra.mxu0 0.0
        %2927 = vmatprep.subr.mxu0 0.0
        %2928 = vmatpush1.msra.mxu0 0.0
        %2929 = vmatprep.subr.mxu0 0.0
        %2930 = vmatpush1.msra.mxu0 0.0
        %2931 = vmatprep.subr.mxu0 0.0
        %2932 = vmatpush1.msra.mxu0 0.0
        %2933 = vmatprep.subr.mxu0 0.0
        %2934 = vmatpush1.msra.mxu0 0.0
        %2935 = vmatprep.subr.mxu0 0.0
        %2936 = vmatpush1.msra.mxu0 0.0
        %2937 = vmatprep.subr.mxu0 0.0
        %2938 = vmatpush1.msra.mxu0 0.0
        %2939 = vmatprep.subr.mxu0 0.0
        %2940 = vmatpush1.msra.mxu0 0.0
        %2941 = vmatprep.subr.mxu0 0.0
        %2942 = vmatpush1.msra.mxu0 0.0
        %2943 = vmatprep.subr.mxu0 0.0
        %2944 = vmatpush1.msra.mxu0 0.0
        %2945 = vmatprep.subr.mxu0 0.0
        %2946 = vmatpush1.msra.mxu0 0.0
        %2947 = vmatprep.subr.mxu0 0.0
        %2948 = vmatpush1.msra.mxu0 0.0
        %2949 = vmatprep.mubr.f32.mxu0 0.0
        %2950 = vmatmul.mubr.f32.gmra.mrb[0].mxu0 %v2837
        %v2951 = vpop.f32.mrb[0].mxu0
        %v2952 = vadd.f32 %v2878, %v2951
        %v2953 = vpop.f32.mrb[0].mxu0
        %v2954 = vadd.f32 %v2882, %v2953
        %2955 = vmatprep.mubr.f32.mxu0 0.0
        %2956 = vmatmul.mubr.f32.gmra.mrb[0].mxu0 %v2838
        %v2957 = vpop.f32.mrb[0].mxu0
        %v2958 = vadd.f32 %v2878, %v2957
        %v2959 = vpop.f32.mrb[0].mxu0
        %v2960 = vadd.f32 %v2882, %v2959
        %2961 = vmatprep.mubr.f32.mxu0 0.0
        %2962 = vmatmul.mubr.f32.gmra.mrb[0].mxu0 %v2839
        %v2963 = vpop.f32.mrb[0].mxu0
        %v2964 = vadd.f32 %v2878, %v2963
        %v2965 = vpop.f32.mrb[0].mxu0
        %v2966 = vadd.f32 %v2882, %v2965
        %2967 = vmatprep.mubr.f32.mxu0 0.0
        %2968 = vmatmul.mubr.f32.gmra.mrb[0].mxu0 %v2840
        %v2969 = vpop.f32.mrb[0].mxu0
        %v2970 = vadd.f32 %v2878, %v2969
        %v2971 = vpop.f32.mrb[0].mxu0
        %v2972 = vadd.f32 %v2882, %v2971
        %2973 = vdwg.mxu0
        %v2974 = vmax.f32 %v2952, 0.0
        %v2975 = vmax.f32 %v2954, 0.0
        %v2976 = vmax.f32 %v2958, 0.0
        %v2977 = vmax.f32 %v2960, 0.0
        %v2978 = vmax.f32 %v2964, 0.0
        %v2979 = vmax.f32 %v2966, 0.0
        %v2980 = vmax.f32 %v2970, 0.0
        %v2981 = vmax.f32 %v2972, 0.0
        %v2982 = vld [vmem:[#allocation14] sm:$0xff]
        %v2983 = vld [vmem:[#allocation14 + $0x8] sm:$0xff]
        %v2984 = vld [vmem:[#allocation14 + $0x10] sm:$0xff]
        %v2985 = vld [vmem:[#allocation14 + $0x18] sm:$0xff]
        %v2986 = vld [vmem:[#allocation14 + $0x20] sm:$0xff]
        %v2987 = vld [vmem:[#allocation14 + $0x28] sm:$0xff]
        %v2988 = vld [vmem:[#allocation14 + $0x30] sm:$0xff]
        %v2989 = vld [vmem:[#allocation14 + $0x38] sm:$0xff]
        %v2990 = vld [vmem:[#allocation14 + $0x40] sm:$0xff]
        %v2991 = vld [vmem:[#allocation14 + $0x48] sm:$0xff]
        %v2992 = vld [vmem:[#allocation14 + $0x50] sm:$0xff]
        %v2993 = vld [vmem:[#allocation14 + $0x58] sm:$0xff]
        %v2994 = vld [vmem:[#allocation14 + $0x60] sm:$0xff]
        %v2995 = vld [vmem:[#allocation14 + $0x68] sm:$0xff]
        %v2996 = vld [vmem:[#allocation14 + $0x70] sm:$0xff]
        %v2997 = vld [vmem:[#allocation14 + $0x78] sm:$0xff]
        %v2998 = vld [vmem:[#allocation14 + $0x80] sm:$0xff]
        %v2999 = vld [vmem:[#allocation14 + $0x88] sm:$0xff]
        %v3000 = vld [vmem:[#allocation14 + $0x90] sm:$0xff]
        %v3001 = vld [vmem:[#allocation14 + $0x98] sm:$0xff]
        %v3002 = vld [vmem:[#allocation14 + $0xa0] sm:$0xff]
        %v3003 = vld [vmem:[#allocation14 + $0xa8] sm:$0xff]
        %v3004 = vld [vmem:[#allocation14 + $0xb0] sm:$0xff]
        %v3005 = vld [vmem:[#allocation14 + $0xb8] sm:$0xff]
        %v3006 = vld [vmem:[#allocation14 + $0xc0] sm:$0xff]
        %v3007 = vld [vmem:[#allocation14 + $0xc8] sm:$0xff]
        %v3008 = vld [vmem:[#allocation14 + $0xd0] sm:$0xff]
        %v3009 = vld [vmem:[#allocation14 + $0xd8] sm:$0xff]
        %v3010 = vld [vmem:[#allocation14 + $0xe0] sm:$0xff]
        %v3011 = vld [vmem:[#allocation14 + $0xe8] sm:$0xff]
        %v3012 = vld [vmem:[#allocation14 + $0xf0] sm:$0xff]
        %v3013 = vld [vmem:[#allocation14 + $0xf8] sm:$0xff]
        %v3014 = vld [vmem:[#allocation16] sm:$0x1]
        %v3016 = vlaneseq
        %v3017 = vshrl.u32 %v3016, 7
        %v3018 = vsub.s32 0, %v3017
        %v3019 = vrot.slane %v3014, %v3018
        %3021 = vmatprep.subr.mxu0 0.0
        %3022 = vmatpush1.msra.mxu0 %v2982
        %3023 = vmatprep.subr.mxu0 0.0
        %3024 = vmatpush1.msra.mxu0 %v2983
        %3025 = vmatprep.subr.mxu0 0.0
        %3026 = vmatpush1.msra.mxu0 %v2984
        %3027 = vmatprep.subr.mxu0 0.0
        %3028 = vmatpush1.msra.mxu0 %v2985
        %3029 = vmatprep.subr.mxu0 0.0
        %3030 = vmatpush1.msra.mxu0 %v2986
        %3031 = vmatprep.subr.mxu0 0.0
        %3032 = vmatpush1.msra.mxu0 %v2987
        %3033 = vmatprep.subr.mxu0 0.0
        %3034 = vmatpush1.msra.mxu0 %v2988
        %3035 = vmatprep.subr.mxu0 0.0
        %3036 = vmatpush1.msra.mxu0 %v2989
        %3037 = vmatprep.subr.mxu0 0.0
        %3038 = vmatpush1.msra.mxu0 %v2990
        %3039 = vmatprep.subr.mxu0 0.0
        %3040 = vmatpush1.msra.mxu0 %v2991
        %3041 = vmatprep.subr.mxu0 0.0
        %3042 = vmatpush1.msra.mxu0 %v2992
        %3043 = vmatprep.subr.mxu0 0.0
        %3044 = vmatpush1.msra.mxu0 %v2993
        %3045 = vmatprep.subr.mxu0 0.0
        %3046 = vmatpush1.msra.mxu0 %v2994
        %3047 = vmatprep.subr.mxu0 0.0
        %3048 = vmatpush1.msra.mxu0 %v2995
        %3049 = vmatprep.subr.mxu0 0.0
        %3050 = vmatpush1.msra.mxu0 %v2996
        %3051 = vmatprep.subr.mxu0 0.0
        %3052 = vmatpush1.msra.mxu0 %v2997
        %3053 = vmatprep.subr.mxu0 0.0
        %3054 = vmatpush1.msra.mxu0 %v2998
        %3055 = vmatprep.subr.mxu0 0.0
        %3056 = vmatpush1.msra.mxu0 %v2999
        %3057 = vmatprep.subr.mxu0 0.0
        %3058 = vmatpush1.msra.mxu0 %v3000
        %3059 = vmatprep.subr.mxu0 0.0
        %3060 = vmatpush1.msra.mxu0 %v3001
        %3061 = vmatprep.subr.mxu0 0.0
        %3062 = vmatpush1.msra.mxu0 %v3002
        %3063 = vmatprep.subr.mxu0 0.0
        %3064 = vmatpush1.msra.mxu0 %v3003
        %3065 = vmatprep.subr.mxu0 0.0
        %3066 = vmatpush1.msra.mxu0 %v3004
        %3067 = vmatprep.subr.mxu0 0.0
        %3068 = vmatpush1.msra.mxu0 %v3005
        %3069 = vmatprep.subr.mxu0 0.0
        %3070 = vmatpush1.msra.mxu0 %v3006
        %3071 = vmatprep.subr.mxu0 0.0
        %3072 = vmatpush1.msra.mxu0 %v3007
        %3073 = vmatprep.subr.mxu0 0.0
        %3074 = vmatpush1.msra.mxu0 %v3008
        %3075 = vmatprep.subr.mxu0 0.0
        %3076 = vmatpush1.msra.mxu0 %v3009
        %3077 = vmatprep.subr.mxu0 0.0
        %3078 = vmatpush1.msra.mxu0 %v3010
        %3079 = vmatprep.subr.mxu0 0.0
        %3080 = vmatpush1.msra.mxu0 %v3011
        %3081 = vmatprep.subr.mxu0 0.0
        %3082 = vmatpush1.msra.mxu0 %v3012
        %3083 = vmatprep.subr.mxu0 0.0
        %3084 = vmatpush1.msra.mxu0 %v3013
        %3085 = vmatprep.mubr.f32.mxu0 %v2975
        %3086 = vmatmul.mubr.f32.gmra.mrb[0].mxu0 %v2974
        %v3087 = vpop.f32.mrb[0].mxu0
        %v3088 = vadd.f32 %v3019, %v3087
        %v3089 = vpop.f32.mrb[0].mxu0
        %3090 = vmatprep.mubr.f32.mxu0 %v2977
        %3091 = vmatmul.mubr.f32.gmra.mrb[0].mxu0 %v2976
        %v3092 = vpop.f32.mrb[0].mxu0
        %v3093 = vadd.f32 %v3019, %v3092
        %v3094 = vpop.f32.mrb[0].mxu0
        %3095 = vmatprep.mubr.f32.mxu0 %v2979
        %3096 = vmatmul.mubr.f32.gmra.mrb[0].mxu0 %v2978
        %v3097 = vpop.f32.mrb[0].mxu0
        %v3098 = vadd.f32 %v3019, %v3097
        %v3099 = vpop.f32.mrb[0].mxu0
        %3100 = vmatprep.mubr.f32.mxu0 %v2981
        %3101 = vmatmul.mubr.f32.gmra.mrb[0].mxu0 %v2980
        %v3102 = vpop.f32.mrb[0].mxu0
        %v3103 = vadd.f32 %v3019, %v3102
        %v3104 = vpop.f32.mrb[0].mxu0
        %3105 = vdwg.mxu0
        %v3106 = vadd.f32 %v2777, %v3088
        %v3107 = vadd.f32 %v2778, %v3093
        %v3108 = vadd.f32 %v2779, %v3098
        %v3109 = vadd.f32 %v2780, %v3103
        %3110 = vst [vmem:[%s459] sm:$0xff] %v3106
        %3111 = vst [vmem:[%s459 + $0x8] sm:$0xff] %v3107
        %3112 = vst [vmem:[%s459 + $0x10] sm:$0xff] %v3108
        %3113 = vst [vmem:[%s459 + $0x18] sm:$0xff] %v3109
        %s3114 = sand.u32 %s232, 1
        %s3115 = scalar_lea.sflag [#allocation4], %s3114
        %s3116 = sand.u32 %s232, 1
        %s3117 = smul.addr %s3116, 32
        %s3118 = scalar_lea.vmem [#allocation17], %s3117
        // Predicated region
        $region93: #{tpu_custom_call.1} parent=55 // pred_check
          %p3119 = pneg %p242
        $region94: #{tpu_custom_call.1} parent=55 // pred_check_branch
          %3121 = sbr.rel (%p3119) target = $region96
        $region95: #{tpu_custom_call.1} parent=55 // pred_region
          %s3122 = smul.u32 2, %s30
          %s3124 = ssub.s32 512, 512
          %3125 = vsyncadd %s3115, %s3124
          %s3126 = smul.addr %s3122, 2
          %s3127 = smul.addr %s3126, 128
          %s3128 = scalar_lea.hbm %s9, %s3127
          %s3129 = sshll.u32 %s3118, 4
          %s3130 = int_to_ptr.vmem [resolvable:$true] %s3129
          %3135 = dma.vmem_to_hbm [thread:$0]  %s3130, 512, %s3128, %s3115, 128, 128, 8
        $region96: #{tpu_custom_call.1} parent=55 // pred_fallthru
          _
      $region56: #{tpu_custom_call.1} parent=5 // pred_fallthru
        _
      %p3136 = scmp.le.s32.totalorder 2, %s25
      // Predicated region
      $region97: #{tpu_custom_call.1} parent=5 // pred_check
        %p3137 = pneg %p3136
      $region98: #{tpu_custom_call.1} parent=5 // pred_check_branch
        %3139 = sbr.rel (%p3137) target = $region100
      $region99: #{tpu_custom_call.1} parent=5 // pred_region
        %s3140 = ssub.s32 %s25, 2
        // Predicated region
        $region101: #{tpu_custom_call.1} parent=99 // pred_check
          %p3141 = pneg %p248
        $region102: #{tpu_custom_call.1} parent=99 // pred_check_branch
          %3143 = sbr.rel (%p3141) target = $region104
        $region103: #{tpu_custom_call.1} parent=99 // pred_region
          %s3144 = sand.u32 %s233, 1
          %s3145 = scalar_lea.sflag [#allocation4], %s3144
          %s3146 = sand.u32 %s233, 1
          %s3147 = smul.addr %s3146, 32
          %s3148 = scalar_lea.vmem [#allocation17], %s3147
          %3149 = dma.done %s3145, 512
        $region104: #{tpu_custom_call.1} parent=99 // pred_fallthru
          _
      $region100: #{tpu_custom_call.1} parent=5 // pred_fallthru
        _
    $region6: #{tpu_custom_call.1} parent=1 // loop_footer
      %s29 = sadd.s32 1, %s25
    $region7: #{tpu_custom_call.1} parent=1 // loop_footer_branch
      %24 = sbr.rel target = $region3
    $region8: #{tpu_custom_call.1} parent=1 // loop_exit
      _
    %3150 = vsyncpa [#allocation3], 1
    %s3151 = scalar_lea.sflag [#allocation3], 1
    %3152 = vsyncpa %s3151, 1
    %3153 = vsyncpa [#allocation6], 1
    %3154 = vsyncpa [#allocation9], 1
    %3155 = vsyncpa [#allocation12], 1
    %3156 = vsyncpa [#allocation15], 1
    %3157 = vsyncpa [#allocation4], 1
    %s3158 = scalar_lea.sflag [#allocation4], 1
    %3159 = vsyncpa %s3158, 1

</llo_original>
